<compile_context>
chip_gen: v6e
topology: v6e:2x2x1
jax: 0.10.0
libtpu: 0.0.40
codegen_flags: <defaults>
</compile_context>

<pallas_src>
import functools

import jax
import jax.numpy as jnp
from jax import lax
from jax.experimental import pallas as pl
from jax.experimental.pallas import tpu as pltpu


_SUB = 8  # images per in-kernel sub-block (== f32 sublane tile)


def _round_up(a, m):
    return ((a + m - 1) // m) * m


def autoencoder_kernel(x_ref, p_ref, b2_ref, out_ref, *, H, W, C, eps, inst_norm):
    # x_ref   : (bb, H*W)      flattened single-channel images (row-major, lane-dense)
    # p_ref   : (R, 9+C+3)     packed params: w1 | w2^T | b1 | gamma | beta
    # b2_ref  : (1, 1) in SMEM decoder bias scalar
    # out_ref : (bb, H*W)      lane-dense output
    HW = H * W
    bb = x_ref.shape[0]
    nsub = bb // _SUB

    # ---- unpack the single packed parameter tile (once per grid step) ----
    P = p_ref[...]
    w1 = P[0:C, 0:9]                        # (C, 9) encoder taps
    w2t = P[0:9, 9:9 + C]                   # (9, C) decoder taps (pre-transposed)
    b1 = P[0:C, 9 + C + 0:9 + C + 1]        # (C, 1)
    gamma = P[0:C, 9 + C + 1:9 + C + 2]     # (C, 1)
    beta = P[0:C, 9 + C + 2:9 + C + 3]      # (C, 1)
    b2 = b2_ref[0, 0]                       # scalar

    # hoisted loop-invariant broadcasts (JAX does not CSE broadcast_in_dim)
    w1cols = [w1[:, t:t + 1][None, :, :] for t in range(9)]   # each (1, C, 1)
    w2t_b = jnp.broadcast_to(w2t[None, :, :], (_SUB, 9, C))   # (SUB, 9, C)
    b1_b = b1[None, :, :]
    gamma_b = gamma[None, :, :]
    beta_b = beta[None, :, :]

    # edge masks for replicate padding (shared by every tap / sub-block)
    pos = lax.broadcasted_iota(jnp.int32, (1, HW), 1)
    colm = pos % W
    is_left = colm == 0
    is_right = colm == (W - 1)
    is_top = pos < W
    is_bottom = pos >= (H - 1) * W

    def shift_rows(a, di):
        # a: (SUB, HW) row-major; result[., i*W+j] = a[., clamp(i+di)*W + j]
        if di == 0:
            return a
        if di > 0:   # neighbour below; replicate bottom row
            return jnp.where(is_bottom, a, pltpu.roll(a, HW - W, axis=1))
        return jnp.where(is_top, a, pltpu.roll(a, W, axis=1))

    def shift_cols(a, dj):
        # result[., i*W+j] = a[., i*W + clamp(j+dj)]
        if dj == 0:
            return a
        if dj > 0:   # neighbour right; replicate right column
            return jnp.where(is_right, a, pltpu.roll(a, HW - 1, axis=1))
        return jnp.where(is_left, a, pltpu.roll(a, 1, axis=1))

    def tap(a, di, dj):
        # replicate-padded 3x3 window value at offset (di, dj)
        return shift_cols(shift_rows(a, di), dj)

    offs = [(di, dj) for di in (-1, 0, 1) for dj in (-1, 0, 1)]   # t = ky*3 + kx
    inv_hw = 1.0 / float(HW)

    def sub_block(s, carry):
        r0 = pl.multiple_of(s * _SUB, _SUB)
        x = x_ref[pl.ds(r0, _SUB), :]                         # (SUB, HW)

        # ---- encoder: 3x3 replicate-pad conv, 1 -> C channels ----
        # b1 is skipped under instance norm (cancelled exactly by mean subtraction).
        enc = jnp.zeros((_SUB, C, HW), jnp.float32)
        if not inst_norm:
            enc = enc + b1_b
        for t, (di, dj) in enumerate(offs):
            xt = tap(x, di, dj)                               # (SUB, HW)
            enc = enc + xt[:, None, :] * w1cols[t]

        # ---- instance norm: two-pass per-(image, channel) stats, biased var ----
        if inst_norm:
            mu = jnp.sum(enc, axis=2, keepdims=True) * inv_hw            # (SUB, C, 1)
            cen = enc - mu
            var = jnp.sum(cen * cen, axis=2, keepdims=True) * inv_hw
            y = cen * (lax.rsqrt(var + eps) * gamma_b) + beta_b
        else:
            y = enc

        # ---- decoder channel contraction on the MXU ----
        # z[b, t, p] = sum_c w2[c, t] * y[b, c, p]
        z = lax.dot_general(w2t_b, y,
                            dimension_numbers=(((2,), (1,)), ((0,), (0,))),
                            preferred_element_type=jnp.float32)          # (SUB, 9, HW)

        # ---- decoder spatial taps + bias + sigmoid, lane-dense store ----
        out = jnp.zeros((_SUB, HW), jnp.float32) + b2
        for t, (di, dj) in enumerate(offs):
            out = out + tap(z[:, t, :], di, dj)
        out_ref[pl.ds(r0, _SUB), :] = jax.nn.sigmoid(out)
        return carry

    lax.fori_loop(0, nsub, sub_block, 0, unroll=True)


def autoencoder_forward(x, params, *, inst_norm=True, eps=1e-8, max_block_b=64):
    """x: NCHW float32 [B, 1, H, W] -> [B, 1, H, W]."""
    B, Cin, H, W = x.shape
    assert Cin == 1, "encoder expects a single input channel"
    w1, b1, gamma, beta, w2, b2 = params
    C = w1.shape[0]
    HW = H * W

    # ---- batch blocking: full sublane tiles, many images per grid step ----
    Bp = _round_up(B, _SUB)
    bb = min(_round_up(max_block_b, _SUB), Bp)
    if Bp >= 2 * _SUB:           # keep >= 2 parallel grid steps when possible (v7x)
        bb = min(bb, _round_up(pl.cdiv(Bp, 2), _SUB))
    Bp = _round_up(Bp, bb)
    assert bb % _SUB == 0 and Bp % bb == 0

    x2d = x.reshape(B, HW)
    if Bp != B:
        x2d = jnp.pad(x2d, ((0, Bp - B), (0, 0)))   # zero rows compute harmlessly

    # ---- pack the six tiny parameter arrays: one VMEM tile + SMEM scalar ----
    R = max(C, 9)
    ncol = 9 + C + 3
    P = jnp.zeros((R, ncol), jnp.float32)
    P = P.at[:C, 0:9].set(w1)
    P = P.at[:9, 9:9 + C].set(w2.T)
    P = P.at[:C, 9 + C + 0].set(b1[:, 0])
    P = P.at[:C, 9 + C + 1].set(gamma[:, 0])
    P = P.at[:C, 9 + C + 2].set(beta[:, 0])
    b2s = jnp.asarray(b2, jnp.float32).reshape(1, 1)

    kernel = functools.partial(autoencoder_kernel, H=H, W=W, C=C, eps=eps,
                               inst_norm=inst_norm)

    out = pl.pallas_call(
        kernel,
        out_shape=jax.ShapeDtypeStruct((Bp, HW), jnp.float32),
        grid=(Bp // bb,),
        in_specs=[
            pl.BlockSpec((bb, HW), lambda b: (b, 0)),              # images
            pl.BlockSpec((R, ncol), lambda b: (0, 0)),             # packed params
            pl.BlockSpec(memory_space=pltpu.MemorySpace.SMEM),     # decoder bias
        ],
        out_specs=pl.BlockSpec((bb, HW), lambda b: (b, 0)),
        compiler_params=pltpu.CompilerParams(
            dimension_semantics=("parallel",)),
    )(x2d, P, b2s)

    return out[:B].reshape(B, 1, H, W)


def reference_forward(x, params, *, inst_norm=True, eps=1e-8):
    """Pure-JAX reference (same math) for a sanity check."""
    w1, b1, gamma, beta, w2, b2 = params
    C = w1.shape[0]
    hp = lax.Precision.HIGHEST
    xp_ = jnp.pad(x, ((0, 0), (0, 0), (1, 1), (1, 1)), mode="edge")
    w1_oihw = w1.reshape(C, 1, 3, 3)
    enc = lax.conv_general_dilated(xp_, w1_oihw, (1, 1), "VALID",
                                   dimension_numbers=("NCHW", "OIHW", "NCHW"),
                                   precision=hp)
    enc = enc + b1[:, 0][None, :, None, None]
    if inst_norm:
        mu = jnp.mean(enc, axis=(2, 3), keepdims=True)
        var = jnp.mean((enc - mu) ** 2, axis=(2, 3), keepdims=True)
        y = (enc - mu) * lax.rsqrt(var + eps)
        y = y * gamma[:, 0][None, :, None, None] + beta[:, 0][None, :, None, None]
    else:
        y = enc
    yp = jnp.pad(y, ((0, 0), (0, 0), (1, 1), (1, 1)), mode="edge")
    w2_oihw = w2.reshape(C, 3, 3)[None]
    out = lax.conv_general_dilated(yp, w2_oihw, (1, 1), "VALID",
                                   dimension_numbers=("NCHW", "OIHW", "NCHW"),
                                   precision=hp)
    return jax.nn.sigmoid(out + b2[0, 0])


def init_params(key, num_channels=16):
    """Deterministic synthetic init (uniform, roughly PyTorch-scaled)."""
    C = num_channels
    k1, k2, k3, k4, k5, k6 = jax.random.split(key, 6)
    lim1 = 1.0 / (1 * 3 * 3) ** 0.5
    w1 = jax.random.uniform(k1, (C, 9), jnp.float32, -lim1, lim1)   # (C_out, ky*3+kx)
    b1 = jax.random.uniform(k2, (C, 1), jnp.float32, -lim1, lim1)
    gamma = 1.0 + 0.2 * jax.random.uniform(k5, (C, 1), jnp.float32, -1.0, 1.0)
    beta = 0.2 * jax.random.uniform(k6, (C, 1), jnp.float32, -1.0, 1.0)
    lim2 = 1.0 / (C * 9) ** 0.5
    w2 = jax.random.uniform(k3, (C, 9), jnp.float32, -lim2, lim2)   # (C_in, ky*3+kx)
    b2 = jax.random.uniform(k4, (1, 1), jnp.float32, -lim2, lim2)
    return w1, b1, gamma, beta, w2, b2


if __name__ == "__main__":
    key = jax.random.PRNGKey(0)
    kx, kp = jax.random.split(key)
    B, H, W, C = 2, 16, 16, 16
    x = jax.random.uniform(kx, (B, 1, H, W), jnp.float32)   # NCHW, 1 input channel
    params = init_params(kp, num_channels=C)

    out = jax.block_until_ready(autoencoder_forward(x, params, inst_norm=True))
    assert out.shape == (B, 1, H, W), out.shape
    ref = jax.block_until_ready(reference_forward(x, params, inst_norm=True))
    err = float(jnp.max(jnp.abs(out - ref)))
    assert err < 2e-3, f"inst_norm=True max err {err}"

    out2 = jax.block_until_ready(autoencoder_forward(x, params, inst_norm=False))
    ref2 = jax.block_until_ready(reference_forward(x, params, inst_norm=False))
    err2 = float(jnp.max(jnp.abs(out2 - ref2)))
    assert err2 < 2e-3, f"inst_norm=False max err {err2}"

    print("KERNEL_OK")
</pallas_src>

<mosaic_0001>
module attributes {stable_mosaic.version = 11 : i64} {
  func.func @autoencoder_kernel(%arg0: i32, %arg1: memref<8x256xf32, #tpu.memory_space<vmem>>, %arg2: memref<16x28xf32, #tpu.memory_space<vmem>>, %arg3: memref<1x1xf32, #tpu.memory_space<smem>>, %arg4: memref<8x256xf32, #tpu.memory_space<vmem>>) attributes {dimension_semantics = [#tpu.dimension_semantics<parallel>], iteration_bounds = array<i64: 1>, scalar_prefetch = 0 : i64, scratch_operands = 0 : i64, tpu.core_type = #tpu.core_type<tc>, window_params = [{transform_indices = @transform_0, window_bounds = array<i64: 8, 256>}, {pipeline_mode = #tpu.pipeline_mode<synchronous>, transform_indices = @transform_1, window_bounds = array<i64: 16, 28>}, {transform_indices = @transform_2, window_bounds = array<i64: 1, 1>}, {transform_indices = @transform_3, window_bounds = array<i64: 8, 256>}]} {
    %c0 = arith.constant 0 : index
    %c0_0 = arith.constant 0 : index
    %0 = vector.load %arg2[%c0, %c0_0] : memref<16x28xf32, #tpu.memory_space<vmem>>, vector<16x28xf32>
    %1 = vector.extract_strided_slice %0 {offsets = [0, 0], sizes = [16, 9], strides = [1, 1]} : vector<16x28xf32> to vector<16x9xf32>
    %2 = vector.extract_strided_slice %0 {offsets = [0, 9], sizes = [9, 16], strides = [1, 1]} : vector<16x28xf32> to vector<9x16xf32>
    %3 = vector.extract_strided_slice %0 {offsets = [0, 26], sizes = [16, 1], strides = [1, 1]} : vector<16x28xf32> to vector<16x1xf32>
    %4 = vector.extract_strided_slice %0 {offsets = [0, 27], sizes = [16, 1], strides = [1, 1]} : vector<16x28xf32> to vector<16x1xf32>
    %c0_1 = arith.constant 0 : index
    %c0_2 = arith.constant 0 : index
    %5 = memref.load %arg3[%c0_1, %c0_2] : memref<1x1xf32, #tpu.memory_space<smem>>
    %6 = vector.extract_strided_slice %1 {offsets = [0, 0], sizes = [16, 1], strides = [1, 1]} : vector<16x9xf32> to vector<16x1xf32>
    %7 = vector.shape_cast %6 : vector<16x1xf32> to vector<1x16x1xf32>
    %8 = vector.extract_strided_slice %1 {offsets = [0, 1], sizes = [16, 1], strides = [1, 1]} : vector<16x9xf32> to vector<16x1xf32>
    %9 = vector.shape_cast %8 : vector<16x1xf32> to vector<1x16x1xf32>
    %10 = vector.extract_strided_slice %1 {offsets = [0, 2], sizes = [16, 1], strides = [1, 1]} : vector<16x9xf32> to vector<16x1xf32>
    %11 = vector.shape_cast %10 : vector<16x1xf32> to vector<1x16x1xf32>
    %12 = vector.extract_strided_slice %1 {offsets = [0, 3], sizes = [16, 1], strides = [1, 1]} : vector<16x9xf32> to vector<16x1xf32>
    %13 = vector.shape_cast %12 : vector<16x1xf32> to vector<1x16x1xf32>
    %14 = vector.extract_strided_slice %1 {offsets = [0, 4], sizes = [16, 1], strides = [1, 1]} : vector<16x9xf32> to vector<16x1xf32>
    %15 = vector.shape_cast %14 : vector<16x1xf32> to vector<1x16x1xf32>
    %16 = vector.extract_strided_slice %1 {offsets = [0, 5], sizes = [16, 1], strides = [1, 1]} : vector<16x9xf32> to vector<16x1xf32>
    %17 = vector.shape_cast %16 : vector<16x1xf32> to vector<1x16x1xf32>
    %18 = vector.extract_strided_slice %1 {offsets = [0, 6], sizes = [16, 1], strides = [1, 1]} : vector<16x9xf32> to vector<16x1xf32>
    %19 = vector.shape_cast %18 : vector<16x1xf32> to vector<1x16x1xf32>
    %20 = vector.extract_strided_slice %1 {offsets = [0, 7], sizes = [16, 1], strides = [1, 1]} : vector<16x9xf32> to vector<16x1xf32>
    %21 = vector.shape_cast %20 : vector<16x1xf32> to vector<1x16x1xf32>
    %22 = vector.extract_strided_slice %1 {offsets = [0, 8], sizes = [16, 1], strides = [1, 1]} : vector<16x9xf32> to vector<16x1xf32>
    %23 = vector.shape_cast %22 : vector<16x1xf32> to vector<1x16x1xf32>
    %24 = vector.shape_cast %2 : vector<9x16xf32> to vector<1x9x16xf32>
    %25 = vector.shape_cast %24 : vector<1x9x16xf32> to vector<1x9x16xf32>
    %26 = vector.broadcast %25 : vector<1x9x16xf32> to vector<8x9x16xf32>
    %27 = vector.shape_cast %3 : vector<16x1xf32> to vector<1x16x1xf32>
    %28 = vector.shape_cast %4 : vector<16x1xf32> to vector<1x16x1xf32>
    %29 = tpu.iota {dimensions = array<i32: 1>} : vector<1x256xi32>
    %c16_i32 = arith.constant 16 : i32
    %c0_i32 = arith.constant 0 : i32
    %30 = arith.cmpi eq, %c16_i32, %c0_i32 : i32
    %c1_i32 = arith.constant 1 : i32
    %31 = arith.select %30, %c1_i32, %c16_i32 : i32
    %32 = vector.broadcast %31 : i32 to vector<1x256xi32>
    %33 = arith.remsi %29, %32 : vector<1x256xi32>
    %c0_i32_3 = arith.constant 0 : i32
    %34 = vector.broadcast %c0_i32_3 : i32 to vector<1x256xi32>
    %35 = arith.cmpi ne, %33, %34 : vector<1x256xi32>
    %c0_i32_4 = arith.constant 0 : i32
    %36 = vector.broadcast %c0_i32_4 : i32 to vector<1x256xi32>
    %37 = arith.cmpi slt, %33, %36 : vector<1x256xi32>
    %c0_i32_5 = arith.constant 0 : i32
    %38 = arith.cmpi slt, %31, %c0_i32_5 : i32
    %39 = vector.broadcast %38 : i1 to vector<1x256xi1>
    %40 = vector.broadcast %39 : vector<1x256xi1> to vector<1x256xi1>
    %41 = arith.xori %37, %40 : vector<1x256xi1>
    %42 = arith.andi %41, %35 : vector<1x256xi1>
    %43 = vector.broadcast %31 : i32 to vector<1x256xi32>
    %44 = arith.addi %33, %43 : vector<1x256xi32>
    %45 = arith.select %42, %44, %33 : vector<1x256xi1>, vector<1x256xi32>
    %c0_i32_6 = arith.constant 0 : i32
    %46 = vector.broadcast %c0_i32_6 : i32 to vector<1x256xi32>
    %47 = arith.cmpi eq, %45, %46 : vector<1x256xi32>
    %c15_i32 = arith.constant 15 : i32
    %48 = vector.broadcast %c15_i32 : i32 to vector<1x256xi32>
    %49 = arith.cmpi eq, %45, %48 : vector<1x256xi32>
    %c16_i32_7 = arith.constant 16 : i32
    %50 = vector.broadcast %c16_i32_7 : i32 to vector<1x256xi32>
    %51 = arith.cmpi slt, %29, %50 : vector<1x256xi32>
    %c240_i32 = arith.constant 240 : i32
    %52 = vector.broadcast %c240_i32 : i32 to vector<1x256xi32>
    %53 = arith.cmpi sge, %29, %52 : vector<1x256xi32>
    %c0_i32_8 = arith.constant 0 : i32
    %c8_i32 = arith.constant 8 : i32
    %54 = arith.muli %c0_i32_8, %c8_i32 : i32
    %55 = tpu.assume_multiple %54, 8 : i32
    %56 = arith.index_cast %55 : i32 to index
    %c0_9 = arith.constant 0 : index
    %57 = vector.load %arg1[%56, %c0_9] : memref<8x256xf32, #tpu.memory_space<vmem>>, vector<8x256xf32>
    %cst = arith.constant 0.000000e+00 : f32
    %58 = vector.broadcast %cst : f32 to vector<8x16x256xf32>
    %c16_i32_10 = arith.constant 16 : i32
    %59 = tpu.dynamic_rotate %57 by %c16_i32_10 dim 1 : vector<8x256xf32>, i32 -> vector<8x256xf32>
    %60 = vector.shape_cast %51 : vector<1x256xi1> to vector<1x256xi1>
    %61 = vector.broadcast %60 : vector<1x256xi1> to vector<8x256xi1>
    %62 = arith.select %61, %57, %59 : vector<8x256xi1>, vector<8x256xf32>
    %c1_i32_11 = arith.constant 1 : i32
    %63 = tpu.dynamic_rotate %62 by %c1_i32_11 dim 1 : vector<8x256xf32>, i32 -> vector<8x256xf32>
    %64 = vector.shape_cast %47 : vector<1x256xi1> to vector<1x256xi1>
    %65 = vector.broadcast %64 : vector<1x256xi1> to vector<8x256xi1>
    %66 = arith.select %65, %62, %63 : vector<8x256xi1>, vector<8x256xf32>
    %67 = vector.shape_cast %66 : vector<8x256xf32> to vector<8x1x256xf32>
    %68 = vector.broadcast %67 : vector<8x1x256xf32> to vector<8x16x256xf32>
    %69 = vector.broadcast %7 : vector<1x16x1xf32> to vector<8x16x256xf32>
    %70 = arith.mulf %68, %69 : vector<8x16x256xf32>
    %71 = arith.addf %58, %70 : vector<8x16x256xf32>
    %c16_i32_12 = arith.constant 16 : i32
    %72 = tpu.dynamic_rotate %57 by %c16_i32_12 dim 1 : vector<8x256xf32>, i32 -> vector<8x256xf32>
    %73 = vector.shape_cast %51 : vector<1x256xi1> to vector<1x256xi1>
    %74 = vector.broadcast %73 : vector<1x256xi1> to vector<8x256xi1>
    %75 = arith.select %74, %57, %72 : vector<8x256xi1>, vector<8x256xf32>
    %76 = vector.shape_cast %75 : vector<8x256xf32> to vector<8x1x256xf32>
    %77 = vector.broadcast %76 : vector<8x1x256xf32> to vector<8x16x256xf32>
    %78 = vector.broadcast %9 : vector<1x16x1xf32> to vector<8x16x256xf32>
    %79 = arith.mulf %77, %78 : vector<8x16x256xf32>
    %80 = arith.addf %71, %79 : vector<8x16x256xf32>
    %c16_i32_13 = arith.constant 16 : i32
    %81 = tpu.dynamic_rotate %57 by %c16_i32_13 dim 1 : vector<8x256xf32>, i32 -> vector<8x256xf32>
    %82 = vector.shape_cast %51 : vector<1x256xi1> to vector<1x256xi1>
    %83 = vector.broadcast %82 : vector<1x256xi1> to vector<8x256xi1>
    %84 = arith.select %83, %57, %81 : vector<8x256xi1>, vector<8x256xf32>
    %c255_i32 = arith.constant 255 : i32
    %85 = tpu.dynamic_rotate %84 by %c255_i32 dim 1 : vector<8x256xf32>, i32 -> vector<8x256xf32>
    %86 = vector.shape_cast %49 : vector<1x256xi1> to vector<1x256xi1>
    %87 = vector.broadcast %86 : vector<1x256xi1> to vector<8x256xi1>
    %88 = arith.select %87, %84, %85 : vector<8x256xi1>, vector<8x256xf32>
    %89 = vector.shape_cast %88 : vector<8x256xf32> to vector<8x1x256xf32>
    %90 = vector.broadcast %89 : vector<8x1x256xf32> to vector<8x16x256xf32>
    %91 = vector.broadcast %11 : vector<1x16x1xf32> to vector<8x16x256xf32>
    %92 = arith.mulf %90, %91 : vector<8x16x256xf32>
    %93 = arith.addf %80, %92 : vector<8x16x256xf32>
    %c1_i32_14 = arith.constant 1 : i32
    %94 = tpu.dynamic_rotate %57 by %c1_i32_14 dim 1 : vector<8x256xf32>, i32 -> vector<8x256xf32>
    %95 = vector.shape_cast %47 : vector<1x256xi1> to vector<1x256xi1>
    %96 = vector.broadcast %95 : vector<1x256xi1> to vector<8x256xi1>
    %97 = arith.select %96, %57, %94 : vector<8x256xi1>, vector<8x256xf32>
    %98 = vector.shape_cast %97 : vector<8x256xf32> to vector<8x1x256xf32>
    %99 = vector.broadcast %98 : vector<8x1x256xf32> to vector<8x16x256xf32>
    %100 = vector.broadcast %13 : vector<1x16x1xf32> to vector<8x16x256xf32>
    %101 = arith.mulf %99, %100 : vector<8x16x256xf32>
    %102 = arith.addf %93, %101 : vector<8x16x256xf32>
    %103 = vector.shape_cast %57 : vector<8x256xf32> to vector<8x1x256xf32>
    %104 = vector.broadcast %103 : vector<8x1x256xf32> to vector<8x16x256xf32>
    %105 = vector.broadcast %15 : vector<1x16x1xf32> to vector<8x16x256xf32>
    %106 = arith.mulf %104, %105 : vector<8x16x256xf32>
    %107 = arith.addf %102, %106 : vector<8x16x256xf32>
    %c255_i32_15 = arith.constant 255 : i32
    %108 = tpu.dynamic_rotate %57 by %c255_i32_15 dim 1 : vector<8x256xf32>, i32 -> vector<8x256xf32>
    %109 = vector.shape_cast %49 : vector<1x256xi1> to vector<1x256xi1>
    %110 = vector.broadcast %109 : vector<1x256xi1> to vector<8x256xi1>
    %111 = arith.select %110, %57, %108 : vector<8x256xi1>, vector<8x256xf32>
    %112 = vector.shape_cast %111 : vector<8x256xf32> to vector<8x1x256xf32>
    %113 = vector.broadcast %112 : vector<8x1x256xf32> to vector<8x16x256xf32>
    %114 = vector.broadcast %17 : vector<1x16x1xf32> to vector<8x16x256xf32>
    %115 = arith.mulf %113, %114 : vector<8x16x256xf32>
    %116 = arith.addf %107, %115 : vector<8x16x256xf32>
    %c240_i32_16 = arith.constant 240 : i32
    %117 = tpu.dynamic_rotate %57 by %c240_i32_16 dim 1 : vector<8x256xf32>, i32 -> vector<8x256xf32>
    %118 = vector.shape_cast %53 : vector<1x256xi1> to vector<1x256xi1>
    %119 = vector.broadcast %118 : vector<1x256xi1> to vector<8x256xi1>
    %120 = arith.select %119, %57, %117 : vector<8x256xi1>, vector<8x256xf32>
    %c1_i32_17 = arith.constant 1 : i32
    %121 = tpu.dynamic_rotate %120 by %c1_i32_17 dim 1 : vector<8x256xf32>, i32 -> vector<8x256xf32>
    %122 = vector.shape_cast %47 : vector<1x256xi1> to vector<1x256xi1>
    %123 = vector.broadcast %122 : vector<1x256xi1> to vector<8x256xi1>
    %124 = arith.select %123, %120, %121 : vector<8x256xi1>, vector<8x256xf32>
    %125 = vector.shape_cast %124 : vector<8x256xf32> to vector<8x1x256xf32>
    %126 = vector.broadcast %125 : vector<8x1x256xf32> to vector<8x16x256xf32>
    %127 = vector.broadcast %19 : vector<1x16x1xf32> to vector<8x16x256xf32>
    %128 = arith.mulf %126, %127 : vector<8x16x256xf32>
    %129 = arith.addf %116, %128 : vector<8x16x256xf32>
    %c240_i32_18 = arith.constant 240 : i32
    %130 = tpu.dynamic_rotate %57 by %c240_i32_18 dim 1 : vector<8x256xf32>, i32 -> vector<8x256xf32>
    %131 = vector.shape_cast %53 : vector<1x256xi1> to vector<1x256xi1>
    %132 = vector.broadcast %131 : vector<1x256xi1> to vector<8x256xi1>
    %133 = arith.select %132, %57, %130 : vector<8x256xi1>, vector<8x256xf32>
    %134 = vector.shape_cast %133 : vector<8x256xf32> to vector<8x1x256xf32>
    %135 = vector.broadcast %134 : vector<8x1x256xf32> to vector<8x16x256xf32>
    %136 = vector.broadcast %21 : vector<1x16x1xf32> to vector<8x16x256xf32>
    %137 = arith.mulf %135, %136 : vector<8x16x256xf32>
    %138 = arith.addf %129, %137 : vector<8x16x256xf32>
    %c240_i32_19 = arith.constant 240 : i32
    %139 = tpu.dynamic_rotate %57 by %c240_i32_19 dim 1 : vector<8x256xf32>, i32 -> vector<8x256xf32>
    %140 = vector.shape_cast %53 : vector<1x256xi1> to vector<1x256xi1>
    %141 = vector.broadcast %140 : vector<1x256xi1> to vector<8x256xi1>
    %142 = arith.select %141, %57, %139 : vector<8x256xi1>, vector<8x256xf32>
    %c255_i32_20 = arith.constant 255 : i32
    %143 = tpu.dynamic_rotate %142 by %c255_i32_20 dim 1 : vector<8x256xf32>, i32 -> vector<8x256xf32>
    %144 = vector.shape_cast %49 : vector<1x256xi1> to vector<1x256xi1>
    %145 = vector.broadcast %144 : vector<1x256xi1> to vector<8x256xi1>
    %146 = arith.select %145, %142, %143 : vector<8x256xi1>, vector<8x256xf32>
    %147 = vector.shape_cast %146 : vector<8x256xf32> to vector<8x1x256xf32>
    %148 = vector.broadcast %147 : vector<8x1x256xf32> to vector<8x16x256xf32>
    %149 = vector.broadcast %23 : vector<1x16x1xf32> to vector<8x16x256xf32>
    %150 = arith.mulf %148, %149 : vector<8x16x256xf32>
    %151 = arith.addf %138, %150 : vector<8x16x256xf32>
    %cst_21 = arith.constant dense<0.000000e+00> : vector<8x16xf32>
    %152 = vector.multi_reduction <add>, %151, %cst_21 [2] : vector<8x16x256xf32> to vector<8x16xf32>
    %153 = vector.shape_cast %152 : vector<8x16xf32> to vector<8x16x1xf32>
    %cst_22 = arith.constant 3.906250e-03 : f32
    %154 = vector.broadcast %cst_22 : f32 to vector<8x16x1xf32>
    %155 = arith.mulf %153, %154 : vector<8x16x1xf32>
    %156 = vector.broadcast %155 : vector<8x16x1xf32> to vector<8x16x256xf32>
    %157 = arith.subf %151, %156 : vector<8x16x256xf32>
    %158 = arith.mulf %157, %157 : vector<8x16x256xf32>
    %cst_23 = arith.constant dense<0.000000e+00> : vector<8x16xf32>
    %159 = vector.multi_reduction <add>, %158, %cst_23 [2] : vector<8x16x256xf32> to vector<8x16xf32>
    %160 = vector.shape_cast %159 : vector<8x16xf32> to vector<8x16x1xf32>
    %cst_24 = arith.constant 3.906250e-03 : f32
    %161 = vector.broadcast %cst_24 : f32 to vector<8x16x1xf32>
    %162 = arith.mulf %160, %161 : vector<8x16x1xf32>
    %cst_25 = arith.constant 9.99999993E-9 : f32
    %163 = vector.broadcast %cst_25 : f32 to vector<8x16x1xf32>
    %164 = arith.addf %162, %163 : vector<8x16x1xf32>
    %165 = math.rsqrt %164 : vector<8x16x1xf32>
    %166 = vector.broadcast %27 : vector<1x16x1xf32> to vector<8x16x1xf32>
    %167 = arith.mulf %165, %166 : vector<8x16x1xf32>
    %168 = vector.broadcast %167 : vector<8x16x1xf32> to vector<8x16x256xf32>
    %169 = arith.mulf %157, %168 : vector<8x16x256xf32>
    %170 = vector.broadcast %28 : vector<1x16x1xf32> to vector<8x16x256xf32>
    %171 = arith.addf %169, %170 : vector<8x16x256xf32>
    %cst_26 = arith.constant dense<0.000000e+00> : vector<8x9x256xf32>
    %172 = tpu.matmul %26, %171, %cst_26 {dimension_numbers = #tpu.dot_dimension_numbers<[2], [1], [1], [2], [0, 0, 0, 1, 1, 2], [0], [0]>} : vector<8x9x16xf32>, vector<8x16x256xf32>, vector<8x9x256xf32> -> vector<8x9x256xf32>
    %cst_27 = arith.constant 0.000000e+00 : f32
    %173 = vector.broadcast %cst_27 : f32 to vector<8x256xf32>
    %174 = vector.broadcast %5 : f32 to vector<8x256xf32>
    %175 = arith.addf %173, %174 : vector<8x256xf32>
    %176 = vector.extract_strided_slice %172 {offsets = [0, 0, 0], sizes = [8, 1, 256], strides = [1, 1, 1]} : vector<8x9x256xf32> to vector<8x1x256xf32>
    %177 = vector.shape_cast %176 : vector<8x1x256xf32> to vector<8x256xf32>
    %c16_i32_28 = arith.constant 16 : i32
    %178 = tpu.dynamic_rotate %177 by %c16_i32_28 dim 1 : vector<8x256xf32>, i32 -> vector<8x256xf32>
    %179 = vector.shape_cast %51 : vector<1x256xi1> to vector<1x256xi1>
    %180 = vector.broadcast %179 : vector<1x256xi1> to vector<8x256xi1>
    %181 = arith.select %180, %177, %178 : vector<8x256xi1>, vector<8x256xf32>
    %c1_i32_29 = arith.constant 1 : i32
    %182 = tpu.dynamic_rotate %181 by %c1_i32_29 dim 1 : vector<8x256xf32>, i32 -> vector<8x256xf32>
    %183 = vector.shape_cast %47 : vector<1x256xi1> to vector<1x256xi1>
    %184 = vector.broadcast %183 : vector<1x256xi1> to vector<8x256xi1>
    %185 = arith.select %184, %181, %182 : vector<8x256xi1>, vector<8x256xf32>
    %186 = arith.addf %175, %185 : vector<8x256xf32>
    %187 = vector.extract_strided_slice %172 {offsets = [0, 1, 0], sizes = [8, 1, 256], strides = [1, 1, 1]} : vector<8x9x256xf32> to vector<8x1x256xf32>
    %188 = vector.shape_cast %187 : vector<8x1x256xf32> to vector<8x256xf32>
    %c16_i32_30 = arith.constant 16 : i32
    %189 = tpu.dynamic_rotate %188 by %c16_i32_30 dim 1 : vector<8x256xf32>, i32 -> vector<8x256xf32>
    %190 = vector.shape_cast %51 : vector<1x256xi1> to vector<1x256xi1>
    %191 = vector.broadcast %190 : vector<1x256xi1> to vector<8x256xi1>
    %192 = arith.select %191, %188, %189 : vector<8x256xi1>, vector<8x256xf32>
    %193 = arith.addf %186, %192 : vector<8x256xf32>
    %194 = vector.extract_strided_slice %172 {offsets = [0, 2, 0], sizes = [8, 1, 256], strides = [1, 1, 1]} : vector<8x9x256xf32> to vector<8x1x256xf32>
    %195 = vector.shape_cast %194 : vector<8x1x256xf32> to vector<8x256xf32>
    %c16_i32_31 = arith.constant 16 : i32
    %196 = tpu.dynamic_rotate %195 by %c16_i32_31 dim 1 : vector<8x256xf32>, i32 -> vector<8x256xf32>
    %197 = vector.shape_cast %51 : vector<1x256xi1> to vector<1x256xi1>
    %198 = vector.broadcast %197 : vector<1x256xi1> to vector<8x256xi1>
    %199 = arith.select %198, %195, %196 : vector<8x256xi1>, vector<8x256xf32>
    %c255_i32_32 = arith.constant 255 : i32
    %200 = tpu.dynamic_rotate %199 by %c255_i32_32 dim 1 : vector<8x256xf32>, i32 -> vector<8x256xf32>
    %201 = vector.shape_cast %49 : vector<1x256xi1> to vector<1x256xi1>
    %202 = vector.broadcast %201 : vector<1x256xi1> to vector<8x256xi1>
    %203 = arith.select %202, %199, %200 : vector<8x256xi1>, vector<8x256xf32>
    %204 = arith.addf %193, %203 : vector<8x256xf32>
    %205 = vector.extract_strided_slice %172 {offsets = [0, 3, 0], sizes = [8, 1, 256], strides = [1, 1, 1]} : vector<8x9x256xf32> to vector<8x1x256xf32>
    %206 = vector.shape_cast %205 : vector<8x1x256xf32> to vector<8x256xf32>
    %c1_i32_33 = arith.constant 1 : i32
    %207 = tpu.dynamic_rotate %206 by %c1_i32_33 dim 1 : vector<8x256xf32>, i32 -> vector<8x256xf32>
    %208 = vector.shape_cast %47 : vector<1x256xi1> to vector<1x256xi1>
    %209 = vector.broadcast %208 : vector<1x256xi1> to vector<8x256xi1>
    %210 = arith.select %209, %206, %207 : vector<8x256xi1>, vector<8x256xf32>
    %211 = arith.addf %204, %210 : vector<8x256xf32>
    %212 = vector.extract_strided_slice %172 {offsets = [0, 4, 0], sizes = [8, 1, 256], strides = [1, 1, 1]} : vector<8x9x256xf32> to vector<8x1x256xf32>
    %213 = vector.shape_cast %212 : vector<8x1x256xf32> to vector<8x256xf32>
    %214 = arith.addf %211, %213 : vector<8x256xf32>
    %215 = vector.extract_strided_slice %172 {offsets = [0, 5, 0], sizes = [8, 1, 256], strides = [1, 1, 1]} : vector<8x9x256xf32> to vector<8x1x256xf32>
    %216 = vector.shape_cast %215 : vector<8x1x256xf32> to vector<8x256xf32>
    %c255_i32_34 = arith.constant 255 : i32
    %217 = tpu.dynamic_rotate %216 by %c255_i32_34 dim 1 : vector<8x256xf32>, i32 -> vector<8x256xf32>
    %218 = vector.shape_cast %49 : vector<1x256xi1> to vector<1x256xi1>
    %219 = vector.broadcast %218 : vector<1x256xi1> to vector<8x256xi1>
    %220 = arith.select %219, %216, %217 : vector<8x256xi1>, vector<8x256xf32>
    %221 = arith.addf %214, %220 : vector<8x256xf32>
    %222 = vector.extract_strided_slice %172 {offsets = [0, 6, 0], sizes = [8, 1, 256], strides = [1, 1, 1]} : vector<8x9x256xf32> to vector<8x1x256xf32>
    %223 = vector.shape_cast %222 : vector<8x1x256xf32> to vector<8x256xf32>
    %c240_i32_35 = arith.constant 240 : i32
    %224 = tpu.dynamic_rotate %223 by %c240_i32_35 dim 1 : vector<8x256xf32>, i32 -> vector<8x256xf32>
    %225 = vector.shape_cast %53 : vector<1x256xi1> to vector<1x256xi1>
    %226 = vector.broadcast %225 : vector<1x256xi1> to vector<8x256xi1>
    %227 = arith.select %226, %223, %224 : vector<8x256xi1>, vector<8x256xf32>
    %c1_i32_36 = arith.constant 1 : i32
    %228 = tpu.dynamic_rotate %227 by %c1_i32_36 dim 1 : vector<8x256xf32>, i32 -> vector<8x256xf32>
    %229 = vector.shape_cast %47 : vector<1x256xi1> to vector<1x256xi1>
    %230 = vector.broadcast %229 : vector<1x256xi1> to vector<8x256xi1>
    %231 = arith.select %230, %227, %228 : vector<8x256xi1>, vector<8x256xf32>
    %232 = arith.addf %221, %231 : vector<8x256xf32>
    %233 = vector.extract_strided_slice %172 {offsets = [0, 7, 0], sizes = [8, 1, 256], strides = [1, 1, 1]} : vector<8x9x256xf32> to vector<8x1x256xf32>
    %234 = vector.shape_cast %233 : vector<8x1x256xf32> to vector<8x256xf32>
    %c240_i32_37 = arith.constant 240 : i32
    %235 = tpu.dynamic_rotate %234 by %c240_i32_37 dim 1 : vector<8x256xf32>, i32 -> vector<8x256xf32>
    %236 = vector.shape_cast %53 : vector<1x256xi1> to vector<1x256xi1>
    %237 = vector.broadcast %236 : vector<1x256xi1> to vector<8x256xi1>
    %238 = arith.select %237, %234, %235 : vector<8x256xi1>, vector<8x256xf32>
    %239 = arith.addf %232, %238 : vector<8x256xf32>
    %240 = vector.extract_strided_slice %172 {offsets = [0, 8, 0], sizes = [8, 1, 256], strides = [1, 1, 1]} : vector<8x9x256xf32> to vector<8x1x256xf32>
    %241 = vector.shape_cast %240 : vector<8x1x256xf32> to vector<8x256xf32>
    %c240_i32_38 = arith.constant 240 : i32
    %242 = tpu.dynamic_rotate %241 by %c240_i32_38 dim 1 : vector<8x256xf32>, i32 -> vector<8x256xf32>
    %243 = vector.shape_cast %53 : vector<1x256xi1> to vector<1x256xi1>
    %244 = vector.broadcast %243 : vector<1x256xi1> to vector<8x256xi1>
    %245 = arith.select %244, %241, %242 : vector<8x256xi1>, vector<8x256xf32>
    %c255_i32_39 = arith.constant 255 : i32
    %246 = tpu.dynamic_rotate %245 by %c255_i32_39 dim 1 : vector<8x256xf32>, i32 -> vector<8x256xf32>
    %247 = vector.shape_cast %49 : vector<1x256xi1> to vector<1x256xi1>
    %248 = vector.broadcast %247 : vector<1x256xi1> to vector<8x256xi1>
    %249 = arith.select %248, %245, %246 : vector<8x256xi1>, vector<8x256xf32>
    %250 = arith.addf %239, %249 : vector<8x256xf32>
    %251 = arith.negf %250 : vector<8x256xf32>
    %252 = math.exp %251 : vector<8x256xf32>
    %cst_40 = arith.constant 1.000000e+00 : f32
    %253 = vector.broadcast %cst_40 : f32 to vector<8x256xf32>
    %254 = arith.addf %253, %252 : vector<8x256xf32>
    %255 = arith.divf %253, %254 : vector<8x256xf32>
    %256 = arith.index_cast %55 : i32 to index
    %c0_41 = arith.constant 0 : index
    %257 = vector.load %arg4[%256, %c0_41] : memref<8x256xf32, #tpu.memory_space<vmem>>, vector<8x256xf32>
    tpu.vector_store %arg4[%256, %c0_41], %255 {strides = array<i32>} : memref<8x256xf32, #tpu.memory_space<vmem>>, vector<8x256xf32>,
    %c1_i32_42 = arith.constant 1 : i32
    return
  }
  func.func @transform_0(%arg0: i32) -> (i32, i32) {
    %c0_i32 = arith.constant 0 : i32
    %c0_i32_0 = arith.constant 0 : i32
    return %arg0, %c0_i32 : i32, i32
  }
  func.func @transform_1(%arg0: i32) -> (i32, i32) {
    %c0_i32 = arith.constant 0 : i32
    %c0_i32_0 = arith.constant 0 : i32
    %c0_i32_1 = arith.constant 0 : i32
    return %c0_i32, %c0_i32_0 : i32, i32
  }
  func.func @transform_2(%arg0: i32) -> (i32, i32) {
    %c0_i32 = arith.constant 0 : i32
    %c0_i32_0 = arith.constant 0 : i32
    %c0_i32_1 = arith.constant 0 : i32
    return %c0_i32, %c0_i32_0 : i32, i32
  }
  func.func @transform_3(%arg0: i32) -> (i32, i32) {
    %c0_i32 = arith.constant 0 : i32
    %c0_i32_0 = arith.constant 0 : i32
    return %arg0, %c0_i32 : i32, i32
  }
}

</mosaic_0001>

<llo_original>
// kernel: tpu_custom_call.1
$region0: #{tpu_custom_call.1}
  #allocation0 [shape = 'u32[]', space=smem, size = 0x4, offset = 0x4, fixed_abs, tag = 'smem constant byte address 0x4 - core index']
  #allocation1 [shape = 'u32[144,128]{1,0:T(1,128)}', space=vmem, size = 0x12000, scoped, tag = 'internal scratch']
  #allocation2 [shape = 'f32[1,1]{1,0:T(1,128)S(6)}', space=smem, size = 0x200, scoped, tag = 'scoped memory for tpu_custom_call.1']
  %s0 = inlined_call_operand.hbm [shape: f32[8,256], index: 0, kind: input, shape index: {}]
  %s1 = inlined_call_operand.hbm [shape: f32[16,28], index: 1, kind: input, shape index: {}]
  %s2 = inlined_call_operand.<no memory space> [shape: f32[1,1], index: 2, kind: input, shape index: {}]
  %s3 = inlined_call_operand.hbm [shape: f32[8,256], index: 3, kind: output, shape index: {}]
  %s4 = sld [smem:[#allocation0]]
  $region30: #{tpu_custom_call.1} parent=0
    _
  %s6 = ssub.s32 1, %s4
  %s7 = scalar_select 0, %s6, %s4
  %8 = sst [smem:[#allocation2]] %s2
  $region1: #{tpu_custom_call.1} parent=0
    #allocation3 [shape = 'u8[8192]{0}', space=vmem, size = 0x2000, scoped, tag = 'input window, operand 0, single buffered']
    #allocation4 [shape = 's32[1]{0}', space=sflag, size = 0x4, scoped, tag = 'scoped memory for tpu_custom_call.1']
    #allocation5 [shape = 's32[1]{0}', space=sflag, size = 0x4, scoped, tag = 'scoped memory for tpu_custom_call.1']
    #allocation6 [shape = 'u8[8192]{0}', space=vmem, size = 0x2000, scoped, tag = 'input window, operand 1, single buffered']
    #allocation7 [shape = 's32[1]{0}', space=sflag, size = 0x4, scoped, tag = 'scoped memory for tpu_custom_call.1']
    #allocation8 [shape = 'u8[8192]{0}', space=vmem, size = 0x2000, scoped, tag = 'output window, operand 0, single buffered']
    %9 = vsyncpa [#allocation4], 0
    %10 = vsyncpa [#allocation7], 0
    %11 = vsyncpa [#allocation5], 0
    // Predicated region
    $region2: #{tpu_custom_call.1} parent=1 // pred_check
      _
    $region3: #{tpu_custom_call.1} parent=1 // pred_check_branch
      %13 = sbr.rel (0) target = $region5
    $region4: #{tpu_custom_call.1} parent=1 // pred_region
      %s15 = ssub.s32 256, 256
      %16 = vsyncadd [#allocation4], %s15
      %s18 = sshll.u32 [#allocation3], 4
      %s19 = int_to_ptr.vmem [resolvable:$true] %s18
      %21 = dma.hbm_to_vmem [thread:$0]  %s0, 256, %s19, [#allocation4]
    $region5: #{tpu_custom_call.1} parent=1 // pred_fallthru
      _
    // Predicated region
    $region6: #{tpu_custom_call.1} parent=1 // pred_check
      _
    $region7: #{tpu_custom_call.1} parent=1 // pred_check_branch
      %23 = sbr.rel (0) target = $region9
    $region8: #{tpu_custom_call.1} parent=1 // pred_region
      %s25 = ssub.s32 256, 256
      %26 = vsyncadd [#allocation7], %s25
      %s27 = sshll.u32 [#allocation6], 4
      %s28 = int_to_ptr.vmem [resolvable:$true] %s27
      %33 = dma.hbm_to_vmem [thread:$0]  %s1, 256, %s28, [#allocation7], 128, 128, 8
    $region9: #{tpu_custom_call.1} parent=1 // pred_fallthru
      _
    // Predicated region
    $region10: #{tpu_custom_call.1} parent=1 // pred_check
      _
    $region11: #{tpu_custom_call.1} parent=1 // pred_check_branch
      %35 = sbr.rel (0) target = $region13
    $region12: #{tpu_custom_call.1} parent=1 // pred_region
      _
    $region13: #{tpu_custom_call.1} parent=1 // pred_fallthru
      _
    // Predicated region
    $region14: #{tpu_custom_call.1} parent=1 // pred_check
      _
    $region15: #{tpu_custom_call.1} parent=1 // pred_check_branch
      %37 = sbr.rel (0) target = $region17
    $region16: #{tpu_custom_call.1} parent=1 // pred_region
      %38 = dma.done [#allocation4], 256
    $region17: #{tpu_custom_call.1} parent=1 // pred_fallthru
      _
    // Predicated region
    $region18: #{tpu_custom_call.1} parent=1 // pred_check
      _
    $region19: #{tpu_custom_call.1} parent=1 // pred_check_branch
      %40 = sbr.rel (0) target = $region21
    $region20: #{tpu_custom_call.1} parent=1 // pred_region
      %41 = dma.done [#allocation7], 256
    $region21: #{tpu_custom_call.1} parent=1 // pred_fallthru
      _
    %v42 = vld [vmem:[#allocation6] sm:$0xff]
    %v43 = vld [vmem:[#allocation6 + $0x8] sm:$0xff]
    %s44 = sld [smem:[#allocation2]]
    %v45 = vlaneseq
    %v46 = vand.u32 %v45, 127
    %v47 = vadd.s32 %v46, 128
    %vm48 = vcmp.lt.s32.totalorder %v46, 0
    %v49 = vsub.s32 0, %v46
    %v50 = vsel %vm48, %v49, %v46
    %v51 = vshrl.u32 %v50, 4
    %v52 = vand.u32 %v50, 15
    %v53 = vsub.s32 0, %v52
    %v54 = vsel %vm48, %v53, %v52
    %vm55 = vcmp.lt.s32.totalorder %v47, 0
    %v56 = vsub.s32 0, %v47
    %v57 = vsel %vm55, %v56, %v47
    %v58 = vshrl.u32 %v57, 4
    %v59 = vand.u32 %v57, 15
    %v60 = vsub.s32 0, %v59
    %v61 = vsel %vm55, %v60, %v59
    %vm62 = vcmp.ne.s32.totalorder %v54, 0
    %vm63 = vcmp.ne.s32.totalorder %v61, 0
    %vm64 = vcmp.lt.s32.totalorder %v54, 0
    %vm65 = vcmp.lt.s32.totalorder %v61, 0
    %vm66 = vmand %vm64, %vm62
    %vm67 = vmand %vm65, %vm63
    %v68 = vadd.s32 %v54, 16
    %v69 = vadd.s32 %v61, 16
    %v70 = vsel %vm66, %v68, %v54
    %v71 = vsel %vm67, %v69, %v61
    %vm72 = vcmp.eq.s32.totalorder %v70, 0
    %vm73 = vcmp.eq.s32.totalorder %v71, 0
    %vm74 = vcmp.eq.s32.totalorder %v70, 15
    %vm75 = vcmp.eq.s32.totalorder %v71, 15
    %vm76 = vcmp.lt.s32.totalorder %v46, 16
    %vm77 = vcmp.lt.s32.totalorder %v47, 16
    %vm78 = vcmp.ge.s32.totalorder %v46, 240
    %vm79 = vcmp.ge.s32.totalorder %v47, 240
    %s80 = smul.u32 0, 2
    %s81 = smul.addr %s80, 8
    %s82 = scalar_lea.vmem [#allocation3], %s81
    %v83 = vld [vmem:[%s82] sm:$0xff]
    %v84 = vld [vmem:[%s82 + $0x8] sm:$0xff]
    %85 = vrot.lane.b32.xlu0 %v83, 16
    %v86 = vpop.permute.xlu0 %85
    %87 = vrot.lane.b32.xlu0 %v84, 16
    %v88 = vpop.permute.xlu0 %87
    %v89 = vsel %vm76, %v86, %v88
    %v90 = vsel %vm76, %v88, %v86
    %v91 = vsel %vm76, 1, 0
    %v92 = vsel %vm77, 1, 0
    %vm93 = vcmp.eq.s32.totalorder %v91, 1
    %vm94 = vcmp.eq.s32.totalorder %v92, 1
    %v95 = vsel %vm93, %v83, %v90
    %v96 = vsel %vm94, %v84, %v89
    %97 = vrot.lane.b32.xlu0 %v95, 1
    %v98 = vpop.permute.xlu0 %97
    %99 = vrot.lane.b32.xlu0 %v96, 1
    %v100 = vpop.permute.xlu0 %99
    %vm101 = vcmp.lt.s32.totalorder %v46, 1
    %v102 = vsel %vm101, %v98, %v100
    %v103 = vsel %vm101, %v100, %v98
    %v104 = vsel %vm72, 1, 0
    %v105 = vsel %vm73, 1, 0
    %vm106 = vcmp.eq.s32.totalorder %v104, 1
    %vm107 = vcmp.eq.s32.totalorder %v105, 1
    %v108 = vsel %vm106, %v95, %v103
    %v109 = vsel %vm107, %v96, %v102
    %v112 = vcombine.low %v108, %v109
    %v113 = vcombine.high %v108, %v109
    %v115 = vunpack.c.l.s4 1966171168
    %v116 = vunpack.c.0.s8 %v115
    %v117 = vlaneseq
    %v118 = vshrl.u32 %v117, 7
    %v119 = vsub.s32 %v116, %v118
    %v120 = vrot.slane %v112, %v119
    %v122 = vunpack.c.l.s4 1966171168
    %v123 = vunpack.c.0.s8 %v122
    %v124 = vlaneseq
    %v125 = vshrl.u32 %v124, 7
    %v126 = vsub.s32 %v123, %v125
    %v127 = vrot.slane %v113, %v126
    %v128 = vcombine.high %v120, %v120
    %v129 = vcombine.high %v127, %v127
    %v131 = vunpack.c.l.s4 1966171168
    %v132 = vunpack.c.0.s8 %v131
    %v133 = vlaneseq
    %v134 = vshrl.u32 %v133, 7
    %v135 = vsub.s32 %v132, %v134
    %v136 = vrot.slane %v120, %v135
    %v138 = vunpack.c.l.s4 1966171168
    %v139 = vunpack.c.0.s8 %v138
    %v140 = vlaneseq
    %v141 = vshrl.u32 %v140, 7
    %v142 = vsub.s32 %v139, %v141
    %v143 = vrot.slane %v127, %v142
    %v145 = vunpack.c.l.s4 1966171168
    %v146 = vunpack.c.0.s8 %v145
    %v147 = vlaneseq
    %v148 = vshrl.u32 %v147, 7
    %v149 = vsub.s32 %v146, %v148
    %v150 = vrot.slane %v128, %v149
    %v152 = vunpack.c.l.s4 1966171168
    %v153 = vunpack.c.0.s8 %v152
    %v154 = vlaneseq
    %v155 = vshrl.u32 %v154, 7
    %v156 = vsub.s32 %v153, %v155
    %v157 = vrot.slane %v129, %v156
    %v158 = vcombine.high %v136, %v136
    %v159 = vcombine.high %v143, %v143
    %v160 = vcombine.high %v150, %v150
    %v161 = vcombine.high %v157, %v157
    %v162 = vlaneseq
    %v163 = vshrl.u32 %v162, 7
    %v164 = vsub.s32 0, %v163
    %v165 = vrot.slane %v136, %v164
    %v166 = vlaneseq
    %v167 = vshrl.u32 %v166, 7
    %v168 = vsub.s32 1, %v167
    %v169 = vrot.slane %v136, %v168
    %v170 = vlaneseq
    %v171 = vshrl.u32 %v170, 7
    %v172 = vsub.s32 0, %v171
    %v173 = vrot.slane %v150, %v172
    %v174 = vlaneseq
    %v175 = vshrl.u32 %v174, 7
    %v176 = vsub.s32 1, %v175
    %v177 = vrot.slane %v150, %v176
    %v178 = vlaneseq
    %v179 = vshrl.u32 %v178, 7
    %v180 = vsub.s32 0, %v179
    %v181 = vrot.slane %v158, %v180
    %v182 = vlaneseq
    %v183 = vshrl.u32 %v182, 7
    %v184 = vsub.s32 1, %v183
    %v185 = vrot.slane %v158, %v184
    %v186 = vlaneseq
    %v187 = vshrl.u32 %v186, 7
    %v188 = vsub.s32 0, %v187
    %v189 = vrot.slane %v160, %v188
    %v190 = vlaneseq
    %v191 = vshrl.u32 %v190, 7
    %v192 = vsub.s32 1, %v191
    %v193 = vrot.slane %v160, %v192
    %v194 = vlaneseq
    %v195 = vshrl.u32 %v194, 7
    %v196 = vsub.s32 0, %v195
    %v197 = vrot.slane %v143, %v196
    %v198 = vlaneseq
    %v199 = vshrl.u32 %v198, 7
    %v200 = vsub.s32 1, %v199
    %v201 = vrot.slane %v143, %v200
    %v202 = vlaneseq
    %v203 = vshrl.u32 %v202, 7
    %v204 = vsub.s32 0, %v203
    %v205 = vrot.slane %v157, %v204
    %v206 = vlaneseq
    %v207 = vshrl.u32 %v206, 7
    %v208 = vsub.s32 1, %v207
    %v209 = vrot.slane %v157, %v208
    %v210 = vlaneseq
    %v211 = vshrl.u32 %v210, 7
    %v212 = vsub.s32 0, %v211
    %v213 = vrot.slane %v159, %v212
    %v214 = vlaneseq
    %v215 = vshrl.u32 %v214, 7
    %v216 = vsub.s32 1, %v215
    %v217 = vrot.slane %v159, %v216
    %v218 = vlaneseq
    %v219 = vshrl.u32 %v218, 7
    %v220 = vsub.s32 0, %v219
    %v221 = vrot.slane %v161, %v220
    %v222 = vlaneseq
    %v223 = vshrl.u32 %v222, 7
    %v224 = vsub.s32 1, %v223
    %v225 = vrot.slane %v161, %v224
    %243 = vset.pattern.permute.xlu0 0
    %244 = vperm.xlu0 %243, %v42
    %v245 = vpop.permute.xlu0 %244
    %248 = vset.pattern.permute.xlu0 0
    %249 = vperm.xlu0 %248, %v43
    %v250 = vpop.permute.xlu0 %249
    %v252 = vmul.f32 %v165, %v245
    %v253 = vmul.f32 %v169, %v245
    %v254 = vmul.f32 %v165, %v250
    %v255 = vmul.f32 %v169, %v250
    %v256 = vmul.f32 %v173, %v245
    %v257 = vmul.f32 %v177, %v245
    %v258 = vmul.f32 %v173, %v250
    %v259 = vmul.f32 %v177, %v250
    %v260 = vmul.f32 %v181, %v245
    %v261 = vmul.f32 %v185, %v245
    %v262 = vmul.f32 %v181, %v250
    %v263 = vmul.f32 %v185, %v250
    %v264 = vmul.f32 %v189, %v245
    %v265 = vmul.f32 %v193, %v245
    %v266 = vmul.f32 %v189, %v250
    %v267 = vmul.f32 %v193, %v250
    %v268 = vmul.f32 %v197, %v245
    %v269 = vmul.f32 %v201, %v245
    %v270 = vmul.f32 %v197, %v250
    %v271 = vmul.f32 %v201, %v250
    %v272 = vmul.f32 %v205, %v245
    %v273 = vmul.f32 %v209, %v245
    %v274 = vmul.f32 %v205, %v250
    %v275 = vmul.f32 %v209, %v250
    %v276 = vmul.f32 %v213, %v245
    %v277 = vmul.f32 %v217, %v245
    %v278 = vmul.f32 %v213, %v250
    %v279 = vmul.f32 %v217, %v250
    %v280 = vmul.f32 %v221, %v245
    %v281 = vmul.f32 %v225, %v245
    %v282 = vmul.f32 %v221, %v250
    %v283 = vmul.f32 %v225, %v250
    %v284 = vadd.f32 %v252, 0.0
    %v285 = vadd.f32 %v253, 0.0
    %v286 = vadd.f32 %v254, 0.0
    %v287 = vadd.f32 %v255, 0.0
    %v288 = vadd.f32 %v256, 0.0
    %v289 = vadd.f32 %v257, 0.0
    %v290 = vadd.f32 %v258, 0.0
    %v291 = vadd.f32 %v259, 0.0
    %v292 = vadd.f32 %v260, 0.0
    %v293 = vadd.f32 %v261, 0.0
    %v294 = vadd.f32 %v262, 0.0
    %v295 = vadd.f32 %v263, 0.0
    %v296 = vadd.f32 %v264, 0.0
    %v297 = vadd.f32 %v265, 0.0
    %v298 = vadd.f32 %v266, 0.0
    %v299 = vadd.f32 %v267, 0.0
    %v300 = vadd.f32 %v268, 0.0
    %v301 = vadd.f32 %v269, 0.0
    %v302 = vadd.f32 %v270, 0.0
    %v303 = vadd.f32 %v271, 0.0
    %v304 = vadd.f32 %v272, 0.0
    %v305 = vadd.f32 %v273, 0.0
    %v306 = vadd.f32 %v274, 0.0
    %v307 = vadd.f32 %v275, 0.0
    %v308 = vadd.f32 %v276, 0.0
    %v309 = vadd.f32 %v277, 0.0
    %v310 = vadd.f32 %v278, 0.0
    %v311 = vadd.f32 %v279, 0.0
    %v312 = vadd.f32 %v280, 0.0
    %v313 = vadd.f32 %v281, 0.0
    %v314 = vadd.f32 %v282, 0.0
    %v315 = vadd.f32 %v283, 0.0
    %v318 = vcombine.low %v95, %v96
    %v319 = vcombine.high %v95, %v96
    %v321 = vunpack.c.l.s4 1966171168
    %v322 = vunpack.c.0.s8 %v321
    %v323 = vlaneseq
    %v324 = vshrl.u32 %v323, 7
    %v325 = vsub.s32 %v322, %v324
    %v326 = vrot.slane %v318, %v325
    %v328 = vunpack.c.l.s4 1966171168
    %v329 = vunpack.c.0.s8 %v328
    %v330 = vlaneseq
    %v331 = vshrl.u32 %v330, 7
    %v332 = vsub.s32 %v329, %v331
    %v333 = vrot.slane %v319, %v332
    %v334 = vcombine.high %v326, %v326
    %v335 = vcombine.high %v333, %v333
    %v337 = vunpack.c.l.s4 1966171168
    %v338 = vunpack.c.0.s8 %v337
    %v339 = vlaneseq
    %v340 = vshrl.u32 %v339, 7
    %v341 = vsub.s32 %v338, %v340
    %v342 = vrot.slane %v326, %v341
    %v344 = vunpack.c.l.s4 1966171168
    %v345 = vunpack.c.0.s8 %v344
    %v346 = vlaneseq
    %v347 = vshrl.u32 %v346, 7
    %v348 = vsub.s32 %v345, %v347
    %v349 = vrot.slane %v333, %v348
    %v351 = vunpack.c.l.s4 1966171168
    %v352 = vunpack.c.0.s8 %v351
    %v353 = vlaneseq
    %v354 = vshrl.u32 %v353, 7
    %v355 = vsub.s32 %v352, %v354
    %v356 = vrot.slane %v334, %v355
    %v358 = vunpack.c.l.s4 1966171168
    %v359 = vunpack.c.0.s8 %v358
    %v360 = vlaneseq
    %v361 = vshrl.u32 %v360, 7
    %v362 = vsub.s32 %v359, %v361
    %v363 = vrot.slane %v335, %v362
    %v364 = vcombine.high %v342, %v342
    %v365 = vcombine.high %v349, %v349
    %v366 = vcombine.high %v356, %v356
    %v367 = vcombine.high %v363, %v363
    %v368 = vlaneseq
    %v369 = vshrl.u32 %v368, 7
    %v370 = vsub.s32 0, %v369
    %v371 = vrot.slane %v342, %v370
    %v372 = vlaneseq
    %v373 = vshrl.u32 %v372, 7
    %v374 = vsub.s32 1, %v373
    %v375 = vrot.slane %v342, %v374
    %v376 = vlaneseq
    %v377 = vshrl.u32 %v376, 7
    %v378 = vsub.s32 0, %v377
    %v379 = vrot.slane %v356, %v378
    %v380 = vlaneseq
    %v381 = vshrl.u32 %v380, 7
    %v382 = vsub.s32 1, %v381
    %v383 = vrot.slane %v356, %v382
    %v384 = vlaneseq
    %v385 = vshrl.u32 %v384, 7
    %v386 = vsub.s32 0, %v385
    %v387 = vrot.slane %v364, %v386
    %v388 = vlaneseq
    %v389 = vshrl.u32 %v388, 7
    %v390 = vsub.s32 1, %v389
    %v391 = vrot.slane %v364, %v390
    %v392 = vlaneseq
    %v393 = vshrl.u32 %v392, 7
    %v394 = vsub.s32 0, %v393
    %v395 = vrot.slane %v366, %v394
    %v396 = vlaneseq
    %v397 = vshrl.u32 %v396, 7
    %v398 = vsub.s32 1, %v397
    %v399 = vrot.slane %v366, %v398
    %v400 = vlaneseq
    %v401 = vshrl.u32 %v400, 7
    %v402 = vsub.s32 0, %v401
    %v403 = vrot.slane %v349, %v402
    %v404 = vlaneseq
    %v405 = vshrl.u32 %v404, 7
    %v406 = vsub.s32 1, %v405
    %v407 = vrot.slane %v349, %v406
    %v408 = vlaneseq
    %v409 = vshrl.u32 %v408, 7
    %v410 = vsub.s32 0, %v409
    %v411 = vrot.slane %v363, %v410
    %v412 = vlaneseq
    %v413 = vshrl.u32 %v412, 7
    %v414 = vsub.s32 1, %v413
    %v415 = vrot.slane %v363, %v414
    %v416 = vlaneseq
    %v417 = vshrl.u32 %v416, 7
    %v418 = vsub.s32 0, %v417
    %v419 = vrot.slane %v365, %v418
    %v420 = vlaneseq
    %v421 = vshrl.u32 %v420, 7
    %v422 = vsub.s32 1, %v421
    %v423 = vrot.slane %v365, %v422
    %v424 = vlaneseq
    %v425 = vshrl.u32 %v424, 7
    %v426 = vsub.s32 0, %v425
    %v427 = vrot.slane %v367, %v426
    %v428 = vlaneseq
    %v429 = vshrl.u32 %v428, 7
    %v430 = vsub.s32 1, %v429
    %v431 = vrot.slane %v367, %v430
    %448 = vset.pattern.permute.xlu0 1
    %449 = vperm.xlu0 %448, %v42
    %v450 = vpop.permute.xlu0 %449
    %452 = vset.pattern.permute.xlu0 1
    %453 = vperm.xlu0 %452, %v43
    %v454 = vpop.permute.xlu0 %453
    %v456 = vmul.f32 %v371, %v450
    %v457 = vmul.f32 %v375, %v450
    %v458 = vmul.f32 %v371, %v454
    %v459 = vmul.f32 %v375, %v454
    %v460 = vmul.f32 %v379, %v450
    %v461 = vmul.f32 %v383, %v450
    %v462 = vmul.f32 %v379, %v454
    %v463 = vmul.f32 %v383, %v454
    %v464 = vmul.f32 %v387, %v450
    %v465 = vmul.f32 %v391, %v450
    %v466 = vmul.f32 %v387, %v454
    %v467 = vmul.f32 %v391, %v454
    %v468 = vmul.f32 %v395, %v450
    %v469 = vmul.f32 %v399, %v450
    %v470 = vmul.f32 %v395, %v454
    %v471 = vmul.f32 %v399, %v454
    %v472 = vmul.f32 %v403, %v450
    %v473 = vmul.f32 %v407, %v450
    %v474 = vmul.f32 %v403, %v454
    %v475 = vmul.f32 %v407, %v454
    %v476 = vmul.f32 %v411, %v450
    %v477 = vmul.f32 %v415, %v450
    %v478 = vmul.f32 %v411, %v454
    %v479 = vmul.f32 %v415, %v454
    %v480 = vmul.f32 %v419, %v450
    %v481 = vmul.f32 %v423, %v450
    %v482 = vmul.f32 %v419, %v454
    %v483 = vmul.f32 %v423, %v454
    %v484 = vmul.f32 %v427, %v450
    %v485 = vmul.f32 %v431, %v450
    %v486 = vmul.f32 %v427, %v454
    %v487 = vmul.f32 %v431, %v454
    %v488 = vadd.f32 %v284, %v456
    %v489 = vadd.f32 %v285, %v457
    %v490 = vadd.f32 %v286, %v458
    %v491 = vadd.f32 %v287, %v459
    %v492 = vadd.f32 %v288, %v460
    %v493 = vadd.f32 %v289, %v461
    %v494 = vadd.f32 %v290, %v462
    %v495 = vadd.f32 %v291, %v463
    %v496 = vadd.f32 %v292, %v464
    %v497 = vadd.f32 %v293, %v465
    %v498 = vadd.f32 %v294, %v466
    %v499 = vadd.f32 %v295, %v467
    %v500 = vadd.f32 %v296, %v468
    %v501 = vadd.f32 %v297, %v469
    %v502 = vadd.f32 %v298, %v470
    %v503 = vadd.f32 %v299, %v471
    %v504 = vadd.f32 %v300, %v472
    %v505 = vadd.f32 %v301, %v473
    %v506 = vadd.f32 %v302, %v474
    %v507 = vadd.f32 %v303, %v475
    %v508 = vadd.f32 %v304, %v476
    %v509 = vadd.f32 %v305, %v477
    %v510 = vadd.f32 %v306, %v478
    %v511 = vadd.f32 %v307, %v479
    %v512 = vadd.f32 %v308, %v480
    %v513 = vadd.f32 %v309, %v481
    %v514 = vadd.f32 %v310, %v482
    %v515 = vadd.f32 %v311, %v483
    %v516 = vadd.f32 %v312, %v484
    %v517 = vadd.f32 %v313, %v485
    %v518 = vadd.f32 %v314, %v486
    %v519 = vadd.f32 %v315, %v487
    %520 = vrot.lane.b32.xlu0 %v95, 127
    %v521 = vpop.permute.xlu0 %520
    %522 = vrot.lane.b32.xlu0 %v96, 127
    %v523 = vpop.permute.xlu0 %522
    %vm524 = vcmp.lt.s32.totalorder %v46, 127
    %v525 = vsel %vm524, %v521, %v523
    %v526 = vsel %vm524, %v523, %v521
    %v527 = vsel %vm74, 1, 0
    %v528 = vsel %vm75, 1, 0
    %vm529 = vcmp.eq.s32.totalorder %v527, 1
    %vm530 = vcmp.eq.s32.totalorder %v528, 1
    %v531 = vsel %vm529, %v95, %v525
    %v532 = vsel %vm530, %v96, %v526
    %v535 = vcombine.low %v531, %v532
    %v536 = vcombine.high %v531, %v532
    %v538 = vunpack.c.l.s4 1966171168
    %v539 = vunpack.c.0.s8 %v538
    %v540 = vlaneseq
    %v541 = vshrl.u32 %v540, 7
    %v542 = vsub.s32 %v539, %v541
    %v543 = vrot.slane %v535, %v542
    %v545 = vunpack.c.l.s4 1966171168
    %v546 = vunpack.c.0.s8 %v545
    %v547 = vlaneseq
    %v548 = vshrl.u32 %v547, 7
    %v549 = vsub.s32 %v546, %v548
    %v550 = vrot.slane %v536, %v549
    %v551 = vcombine.high %v543, %v543
    %v552 = vcombine.high %v550, %v550
    %v554 = vunpack.c.l.s4 1966171168
    %v555 = vunpack.c.0.s8 %v554
    %v556 = vlaneseq
    %v557 = vshrl.u32 %v556, 7
    %v558 = vsub.s32 %v555, %v557
    %v559 = vrot.slane %v543, %v558
    %v561 = vunpack.c.l.s4 1966171168
    %v562 = vunpack.c.0.s8 %v561
    %v563 = vlaneseq
    %v564 = vshrl.u32 %v563, 7
    %v565 = vsub.s32 %v562, %v564
    %v566 = vrot.slane %v550, %v565
    %v568 = vunpack.c.l.s4 1966171168
    %v569 = vunpack.c.0.s8 %v568
    %v570 = vlaneseq
    %v571 = vshrl.u32 %v570, 7
    %v572 = vsub.s32 %v569, %v571
    %v573 = vrot.slane %v551, %v572
    %v575 = vunpack.c.l.s4 1966171168
    %v576 = vunpack.c.0.s8 %v575
    %v577 = vlaneseq
    %v578 = vshrl.u32 %v577, 7
    %v579 = vsub.s32 %v576, %v578
    %v580 = vrot.slane %v552, %v579
    %v581 = vcombine.high %v559, %v559
    %v582 = vcombine.high %v566, %v566
    %v583 = vcombine.high %v573, %v573
    %v584 = vcombine.high %v580, %v580
    %v585 = vlaneseq
    %v586 = vshrl.u32 %v585, 7
    %v587 = vsub.s32 0, %v586
    %v588 = vrot.slane %v559, %v587
    %v589 = vlaneseq
    %v590 = vshrl.u32 %v589, 7
    %v591 = vsub.s32 1, %v590
    %v592 = vrot.slane %v559, %v591
    %v593 = vlaneseq
    %v594 = vshrl.u32 %v593, 7
    %v595 = vsub.s32 0, %v594
    %v596 = vrot.slane %v573, %v595
    %v597 = vlaneseq
    %v598 = vshrl.u32 %v597, 7
    %v599 = vsub.s32 1, %v598
    %v600 = vrot.slane %v573, %v599
    %v601 = vlaneseq
    %v602 = vshrl.u32 %v601, 7
    %v603 = vsub.s32 0, %v602
    %v604 = vrot.slane %v581, %v603
    %v605 = vlaneseq
    %v606 = vshrl.u32 %v605, 7
    %v607 = vsub.s32 1, %v606
    %v608 = vrot.slane %v581, %v607
    %v609 = vlaneseq
    %v610 = vshrl.u32 %v609, 7
    %v611 = vsub.s32 0, %v610
    %v612 = vrot.slane %v583, %v611
    %v613 = vlaneseq
    %v614 = vshrl.u32 %v613, 7
    %v615 = vsub.s32 1, %v614
    %v616 = vrot.slane %v583, %v615
    %v617 = vlaneseq
    %v618 = vshrl.u32 %v617, 7
    %v619 = vsub.s32 0, %v618
    %v620 = vrot.slane %v566, %v619
    %v621 = vlaneseq
    %v622 = vshrl.u32 %v621, 7
    %v623 = vsub.s32 1, %v622
    %v624 = vrot.slane %v566, %v623
    %v625 = vlaneseq
    %v626 = vshrl.u32 %v625, 7
    %v627 = vsub.s32 0, %v626
    %v628 = vrot.slane %v580, %v627
    %v629 = vlaneseq
    %v630 = vshrl.u32 %v629, 7
    %v631 = vsub.s32 1, %v630
    %v632 = vrot.slane %v580, %v631
    %v633 = vlaneseq
    %v634 = vshrl.u32 %v633, 7
    %v635 = vsub.s32 0, %v634
    %v636 = vrot.slane %v582, %v635
    %v637 = vlaneseq
    %v638 = vshrl.u32 %v637, 7
    %v639 = vsub.s32 1, %v638
    %v640 = vrot.slane %v582, %v639
    %v641 = vlaneseq
    %v642 = vshrl.u32 %v641, 7
    %v643 = vsub.s32 0, %v642
    %v644 = vrot.slane %v584, %v643
    %v645 = vlaneseq
    %v646 = vshrl.u32 %v645, 7
    %v647 = vsub.s32 1, %v646
    %v648 = vrot.slane %v584, %v647
    %665 = vset.pattern.permute.xlu0 2
    %666 = vperm.xlu0 %665, %v42
    %v667 = vpop.permute.xlu0 %666
    %669 = vset.pattern.permute.xlu0 2
    %670 = vperm.xlu0 %669, %v43
    %v671 = vpop.permute.xlu0 %670
    %v673 = vmul.f32 %v588, %v667
    %v674 = vmul.f32 %v592, %v667
    %v675 = vmul.f32 %v588, %v671
    %v676 = vmul.f32 %v592, %v671
    %v677 = vmul.f32 %v596, %v667
    %v678 = vmul.f32 %v600, %v667
    %v679 = vmul.f32 %v596, %v671
    %v680 = vmul.f32 %v600, %v671
    %v681 = vmul.f32 %v604, %v667
    %v682 = vmul.f32 %v608, %v667
    %v683 = vmul.f32 %v604, %v671
    %v684 = vmul.f32 %v608, %v671
    %v685 = vmul.f32 %v612, %v667
    %v686 = vmul.f32 %v616, %v667
    %v687 = vmul.f32 %v612, %v671
    %v688 = vmul.f32 %v616, %v671
    %v689 = vmul.f32 %v620, %v667
    %v690 = vmul.f32 %v624, %v667
    %v691 = vmul.f32 %v620, %v671
    %v692 = vmul.f32 %v624, %v671
    %v693 = vmul.f32 %v628, %v667
    %v694 = vmul.f32 %v632, %v667
    %v695 = vmul.f32 %v628, %v671
    %v696 = vmul.f32 %v632, %v671
    %v697 = vmul.f32 %v636, %v667
    %v698 = vmul.f32 %v640, %v667
    %v699 = vmul.f32 %v636, %v671
    %v700 = vmul.f32 %v640, %v671
    %v701 = vmul.f32 %v644, %v667
    %v702 = vmul.f32 %v648, %v667
    %v703 = vmul.f32 %v644, %v671
    %v704 = vmul.f32 %v648, %v671
    %v705 = vadd.f32 %v488, %v673
    %v706 = vadd.f32 %v489, %v674
    %v707 = vadd.f32 %v490, %v675
    %v708 = vadd.f32 %v491, %v676
    %v709 = vadd.f32 %v492, %v677
    %v710 = vadd.f32 %v493, %v678
    %v711 = vadd.f32 %v494, %v679
    %v712 = vadd.f32 %v495, %v680
    %v713 = vadd.f32 %v496, %v681
    %v714 = vadd.f32 %v497, %v682
    %v715 = vadd.f32 %v498, %v683
    %v716 = vadd.f32 %v499, %v684
    %v717 = vadd.f32 %v500, %v685
    %v718 = vadd.f32 %v501, %v686
    %v719 = vadd.f32 %v502, %v687
    %v720 = vadd.f32 %v503, %v688
    %v721 = vadd.f32 %v504, %v689
    %v722 = vadd.f32 %v505, %v690
    %v723 = vadd.f32 %v506, %v691
    %v724 = vadd.f32 %v507, %v692
    %v725 = vadd.f32 %v508, %v693
    %v726 = vadd.f32 %v509, %v694
    %v727 = vadd.f32 %v510, %v695
    %v728 = vadd.f32 %v511, %v696
    %v729 = vadd.f32 %v512, %v697
    %v730 = vadd.f32 %v513, %v698
    %v731 = vadd.f32 %v514, %v699
    %v732 = vadd.f32 %v515, %v700
    %v733 = vadd.f32 %v516, %v701
    %v734 = vadd.f32 %v517, %v702
    %v735 = vadd.f32 %v518, %v703
    %v736 = vadd.f32 %v519, %v704
    %737 = vrot.lane.b32.xlu0 %v83, 1
    %v738 = vpop.permute.xlu0 %737
    %739 = vrot.lane.b32.xlu0 %v84, 1
    %v740 = vpop.permute.xlu0 %739
    %v741 = vsel %vm101, %v738, %v740
    %v742 = vsel %vm101, %v740, %v738
    %v743 = vsel %vm106, %v83, %v742
    %v744 = vsel %vm107, %v84, %v741
    %v747 = vcombine.low %v743, %v744
    %v748 = vcombine.high %v743, %v744
    %v750 = vunpack.c.l.s4 1966171168
    %v751 = vunpack.c.0.s8 %v750
    %v752 = vlaneseq
    %v753 = vshrl.u32 %v752, 7
    %v754 = vsub.s32 %v751, %v753
    %v755 = vrot.slane %v747, %v754
    %v757 = vunpack.c.l.s4 1966171168
    %v758 = vunpack.c.0.s8 %v757
    %v759 = vlaneseq
    %v760 = vshrl.u32 %v759, 7
    %v761 = vsub.s32 %v758, %v760
    %v762 = vrot.slane %v748, %v761
    %v763 = vcombine.high %v755, %v755
    %v764 = vcombine.high %v762, %v762
    %v766 = vunpack.c.l.s4 1966171168
    %v767 = vunpack.c.0.s8 %v766
    %v768 = vlaneseq
    %v769 = vshrl.u32 %v768, 7
    %v770 = vsub.s32 %v767, %v769
    %v771 = vrot.slane %v755, %v770
    %v773 = vunpack.c.l.s4 1966171168
    %v774 = vunpack.c.0.s8 %v773
    %v775 = vlaneseq
    %v776 = vshrl.u32 %v775, 7
    %v777 = vsub.s32 %v774, %v776
    %v778 = vrot.slane %v762, %v777
    %v780 = vunpack.c.l.s4 1966171168
    %v781 = vunpack.c.0.s8 %v780
    %v782 = vlaneseq
    %v783 = vshrl.u32 %v782, 7
    %v784 = vsub.s32 %v781, %v783
    %v785 = vrot.slane %v763, %v784
    %v787 = vunpack.c.l.s4 1966171168
    %v788 = vunpack.c.0.s8 %v787
    %v789 = vlaneseq
    %v790 = vshrl.u32 %v789, 7
    %v791 = vsub.s32 %v788, %v790
    %v792 = vrot.slane %v764, %v791
    %v793 = vcombine.high %v771, %v771
    %v794 = vcombine.high %v778, %v778
    %v795 = vcombine.high %v785, %v785
    %v796 = vcombine.high %v792, %v792
    %v797 = vlaneseq
    %v798 = vshrl.u32 %v797, 7
    %v799 = vsub.s32 0, %v798
    %v800 = vrot.slane %v771, %v799
    %v801 = vlaneseq
    %v802 = vshrl.u32 %v801, 7
    %v803 = vsub.s32 1, %v802
    %v804 = vrot.slane %v771, %v803
    %v805 = vlaneseq
    %v806 = vshrl.u32 %v805, 7
    %v807 = vsub.s32 0, %v806
    %v808 = vrot.slane %v785, %v807
    %v809 = vlaneseq
    %v810 = vshrl.u32 %v809, 7
    %v811 = vsub.s32 1, %v810
    %v812 = vrot.slane %v785, %v811
    %v813 = vlaneseq
    %v814 = vshrl.u32 %v813, 7
    %v815 = vsub.s32 0, %v814
    %v816 = vrot.slane %v793, %v815
    %v817 = vlaneseq
    %v818 = vshrl.u32 %v817, 7
    %v819 = vsub.s32 1, %v818
    %v820 = vrot.slane %v793, %v819
    %v821 = vlaneseq
    %v822 = vshrl.u32 %v821, 7
    %v823 = vsub.s32 0, %v822
    %v824 = vrot.slane %v795, %v823
    %v825 = vlaneseq
    %v826 = vshrl.u32 %v825, 7
    %v827 = vsub.s32 1, %v826
    %v828 = vrot.slane %v795, %v827
    %v829 = vlaneseq
    %v830 = vshrl.u32 %v829, 7
    %v831 = vsub.s32 0, %v830
    %v832 = vrot.slane %v778, %v831
    %v833 = vlaneseq
    %v834 = vshrl.u32 %v833, 7
    %v835 = vsub.s32 1, %v834
    %v836 = vrot.slane %v778, %v835
    %v837 = vlaneseq
    %v838 = vshrl.u32 %v837, 7
    %v839 = vsub.s32 0, %v838
    %v840 = vrot.slane %v792, %v839
    %v841 = vlaneseq
    %v842 = vshrl.u32 %v841, 7
    %v843 = vsub.s32 1, %v842
    %v844 = vrot.slane %v792, %v843
    %v845 = vlaneseq
    %v846 = vshrl.u32 %v845, 7
    %v847 = vsub.s32 0, %v846
    %v848 = vrot.slane %v794, %v847
    %v849 = vlaneseq
    %v850 = vshrl.u32 %v849, 7
    %v851 = vsub.s32 1, %v850
    %v852 = vrot.slane %v794, %v851
    %v853 = vlaneseq
    %v854 = vshrl.u32 %v853, 7
    %v855 = vsub.s32 0, %v854
    %v856 = vrot.slane %v796, %v855
    %v857 = vlaneseq
    %v858 = vshrl.u32 %v857, 7
    %v859 = vsub.s32 1, %v858
    %v860 = vrot.slane %v796, %v859
    %877 = vset.pattern.permute.xlu0 3
    %878 = vperm.xlu0 %877, %v42
    %v879 = vpop.permute.xlu0 %878
    %881 = vset.pattern.permute.xlu0 3
    %882 = vperm.xlu0 %881, %v43
    %v883 = vpop.permute.xlu0 %882
    %v885 = vmul.f32 %v800, %v879
    %v886 = vmul.f32 %v804, %v879
    %v887 = vmul.f32 %v800, %v883
    %v888 = vmul.f32 %v804, %v883
    %v889 = vmul.f32 %v808, %v879
    %v890 = vmul.f32 %v812, %v879
    %v891 = vmul.f32 %v808, %v883
    %v892 = vmul.f32 %v812, %v883
    %v893 = vmul.f32 %v816, %v879
    %v894 = vmul.f32 %v820, %v879
    %v895 = vmul.f32 %v816, %v883
    %v896 = vmul.f32 %v820, %v883
    %v897 = vmul.f32 %v824, %v879
    %v898 = vmul.f32 %v828, %v879
    %v899 = vmul.f32 %v824, %v883
    %v900 = vmul.f32 %v828, %v883
    %v901 = vmul.f32 %v832, %v879
    %v902 = vmul.f32 %v836, %v879
    %v903 = vmul.f32 %v832, %v883
    %v904 = vmul.f32 %v836, %v883
    %v905 = vmul.f32 %v840, %v879
    %v906 = vmul.f32 %v844, %v879
    %v907 = vmul.f32 %v840, %v883
    %v908 = vmul.f32 %v844, %v883
    %v909 = vmul.f32 %v848, %v879
    %v910 = vmul.f32 %v852, %v879
    %v911 = vmul.f32 %v848, %v883
    %v912 = vmul.f32 %v852, %v883
    %v913 = vmul.f32 %v856, %v879
    %v914 = vmul.f32 %v860, %v879
    %v915 = vmul.f32 %v856, %v883
    %v916 = vmul.f32 %v860, %v883
    %v917 = vadd.f32 %v705, %v885
    %v918 = vadd.f32 %v706, %v886
    %v919 = vadd.f32 %v707, %v887
    %v920 = vadd.f32 %v708, %v888
    %v921 = vadd.f32 %v709, %v889
    %v922 = vadd.f32 %v710, %v890
    %v923 = vadd.f32 %v711, %v891
    %v924 = vadd.f32 %v712, %v892
    %v925 = vadd.f32 %v713, %v893
    %v926 = vadd.f32 %v714, %v894
    %v927 = vadd.f32 %v715, %v895
    %v928 = vadd.f32 %v716, %v896
    %v929 = vadd.f32 %v717, %v897
    %v930 = vadd.f32 %v718, %v898
    %v931 = vadd.f32 %v719, %v899
    %v932 = vadd.f32 %v720, %v900
    %v933 = vadd.f32 %v721, %v901
    %v934 = vadd.f32 %v722, %v902
    %v935 = vadd.f32 %v723, %v903
    %v936 = vadd.f32 %v724, %v904
    %v937 = vadd.f32 %v725, %v905
    %v938 = vadd.f32 %v726, %v906
    %v939 = vadd.f32 %v727, %v907
    %v940 = vadd.f32 %v728, %v908
    %v941 = vadd.f32 %v729, %v909
    %v942 = vadd.f32 %v730, %v910
    %v943 = vadd.f32 %v731, %v911
    %v944 = vadd.f32 %v732, %v912
    %v945 = vadd.f32 %v733, %v913
    %v946 = vadd.f32 %v734, %v914
    %v947 = vadd.f32 %v735, %v915
    %v948 = vadd.f32 %v736, %v916
    %v951 = vcombine.low %v83, %v84
    %v952 = vcombine.high %v83, %v84
    %v954 = vunpack.c.l.s4 1966171168
    %v955 = vunpack.c.0.s8 %v954
    %v956 = vlaneseq
    %v957 = vshrl.u32 %v956, 7
    %v958 = vsub.s32 %v955, %v957
    %v959 = vrot.slane %v951, %v958
    %v961 = vunpack.c.l.s4 1966171168
    %v962 = vunpack.c.0.s8 %v961
    %v963 = vlaneseq
    %v964 = vshrl.u32 %v963, 7
    %v965 = vsub.s32 %v962, %v964
    %v966 = vrot.slane %v952, %v965
    %v967 = vcombine.high %v959, %v959
    %v968 = vcombine.high %v966, %v966
    %v970 = vunpack.c.l.s4 1966171168
    %v971 = vunpack.c.0.s8 %v970
    %v972 = vlaneseq
    %v973 = vshrl.u32 %v972, 7
    %v974 = vsub.s32 %v971, %v973
    %v975 = vrot.slane %v959, %v974
    %v977 = vunpack.c.l.s4 1966171168
    %v978 = vunpack.c.0.s8 %v977
    %v979 = vlaneseq
    %v980 = vshrl.u32 %v979, 7
    %v981 = vsub.s32 %v978, %v980
    %v982 = vrot.slane %v966, %v981
    %v984 = vunpack.c.l.s4 1966171168
    %v985 = vunpack.c.0.s8 %v984
    %v986 = vlaneseq
    %v987 = vshrl.u32 %v986, 7
    %v988 = vsub.s32 %v985, %v987
    %v989 = vrot.slane %v967, %v988
    %v991 = vunpack.c.l.s4 1966171168
    %v992 = vunpack.c.0.s8 %v991
    %v993 = vlaneseq
    %v994 = vshrl.u32 %v993, 7
    %v995 = vsub.s32 %v992, %v994
    %v996 = vrot.slane %v968, %v995
    %v997 = vcombine.high %v975, %v975
    %v998 = vcombine.high %v982, %v982
    %v999 = vcombine.high %v989, %v989
    %v1000 = vcombine.high %v996, %v996
    %v1001 = vlaneseq
    %v1002 = vshrl.u32 %v1001, 7
    %v1003 = vsub.s32 0, %v1002
    %v1004 = vrot.slane %v975, %v1003
    %v1005 = vlaneseq
    %v1006 = vshrl.u32 %v1005, 7
    %v1007 = vsub.s32 1, %v1006
    %v1008 = vrot.slane %v975, %v1007
    %v1009 = vlaneseq
    %v1010 = vshrl.u32 %v1009, 7
    %v1011 = vsub.s32 0, %v1010
    %v1012 = vrot.slane %v989, %v1011
    %v1013 = vlaneseq
    %v1014 = vshrl.u32 %v1013, 7
    %v1015 = vsub.s32 1, %v1014
    %v1016 = vrot.slane %v989, %v1015
    %v1017 = vlaneseq
    %v1018 = vshrl.u32 %v1017, 7
    %v1019 = vsub.s32 0, %v1018
    %v1020 = vrot.slane %v997, %v1019
    %v1021 = vlaneseq
    %v1022 = vshrl.u32 %v1021, 7
    %v1023 = vsub.s32 1, %v1022
    %v1024 = vrot.slane %v997, %v1023
    %v1025 = vlaneseq
    %v1026 = vshrl.u32 %v1025, 7
    %v1027 = vsub.s32 0, %v1026
    %v1028 = vrot.slane %v999, %v1027
    %v1029 = vlaneseq
    %v1030 = vshrl.u32 %v1029, 7
    %v1031 = vsub.s32 1, %v1030
    %v1032 = vrot.slane %v999, %v1031
    %v1033 = vlaneseq
    %v1034 = vshrl.u32 %v1033, 7
    %v1035 = vsub.s32 0, %v1034
    %v1036 = vrot.slane %v982, %v1035
    %v1037 = vlaneseq
    %v1038 = vshrl.u32 %v1037, 7
    %v1039 = vsub.s32 1, %v1038
    %v1040 = vrot.slane %v982, %v1039
    %v1041 = vlaneseq
    %v1042 = vshrl.u32 %v1041, 7
    %v1043 = vsub.s32 0, %v1042
    %v1044 = vrot.slane %v996, %v1043
    %v1045 = vlaneseq
    %v1046 = vshrl.u32 %v1045, 7
    %v1047 = vsub.s32 1, %v1046
    %v1048 = vrot.slane %v996, %v1047
    %v1049 = vlaneseq
    %v1050 = vshrl.u32 %v1049, 7
    %v1051 = vsub.s32 0, %v1050
    %v1052 = vrot.slane %v998, %v1051
    %v1053 = vlaneseq
    %v1054 = vshrl.u32 %v1053, 7
    %v1055 = vsub.s32 1, %v1054
    %v1056 = vrot.slane %v998, %v1055
    %v1057 = vlaneseq
    %v1058 = vshrl.u32 %v1057, 7
    %v1059 = vsub.s32 0, %v1058
    %v1060 = vrot.slane %v1000, %v1059
    %v1061 = vlaneseq
    %v1062 = vshrl.u32 %v1061, 7
    %v1063 = vsub.s32 1, %v1062
    %v1064 = vrot.slane %v1000, %v1063
    %1081 = vset.pattern.permute.xlu0 4
    %1082 = vperm.xlu0 %1081, %v42
    %v1083 = vpop.permute.xlu0 %1082
    %1085 = vset.pattern.permute.xlu0 4
    %1086 = vperm.xlu0 %1085, %v43
    %v1087 = vpop.permute.xlu0 %1086
    %v1089 = vmul.f32 %v1004, %v1083
    %v1090 = vmul.f32 %v1008, %v1083
    %v1091 = vmul.f32 %v1004, %v1087
    %v1092 = vmul.f32 %v1008, %v1087
    %v1093 = vmul.f32 %v1012, %v1083
    %v1094 = vmul.f32 %v1016, %v1083
    %v1095 = vmul.f32 %v1012, %v1087
    %v1096 = vmul.f32 %v1016, %v1087
    %v1097 = vmul.f32 %v1020, %v1083
    %v1098 = vmul.f32 %v1024, %v1083
    %v1099 = vmul.f32 %v1020, %v1087
    %v1100 = vmul.f32 %v1024, %v1087
    %v1101 = vmul.f32 %v1028, %v1083
    %v1102 = vmul.f32 %v1032, %v1083
    %v1103 = vmul.f32 %v1028, %v1087
    %v1104 = vmul.f32 %v1032, %v1087
    %v1105 = vmul.f32 %v1036, %v1083
    %v1106 = vmul.f32 %v1040, %v1083
    %v1107 = vmul.f32 %v1036, %v1087
    %v1108 = vmul.f32 %v1040, %v1087
    %v1109 = vmul.f32 %v1044, %v1083
    %v1110 = vmul.f32 %v1048, %v1083
    %v1111 = vmul.f32 %v1044, %v1087
    %v1112 = vmul.f32 %v1048, %v1087
    %v1113 = vmul.f32 %v1052, %v1083
    %v1114 = vmul.f32 %v1056, %v1083
    %v1115 = vmul.f32 %v1052, %v1087
    %v1116 = vmul.f32 %v1056, %v1087
    %v1117 = vmul.f32 %v1060, %v1083
    %v1118 = vmul.f32 %v1064, %v1083
    %v1119 = vmul.f32 %v1060, %v1087
    %v1120 = vmul.f32 %v1064, %v1087
    %v1121 = vadd.f32 %v917, %v1089
    %v1122 = vadd.f32 %v918, %v1090
    %v1123 = vadd.f32 %v919, %v1091
    %v1124 = vadd.f32 %v920, %v1092
    %v1125 = vadd.f32 %v921, %v1093
    %v1126 = vadd.f32 %v922, %v1094
    %v1127 = vadd.f32 %v923, %v1095
    %v1128 = vadd.f32 %v924, %v1096
    %v1129 = vadd.f32 %v925, %v1097
    %v1130 = vadd.f32 %v926, %v1098
    %v1131 = vadd.f32 %v927, %v1099
    %v1132 = vadd.f32 %v928, %v1100
    %v1133 = vadd.f32 %v929, %v1101
    %v1134 = vadd.f32 %v930, %v1102
    %v1135 = vadd.f32 %v931, %v1103
    %v1136 = vadd.f32 %v932, %v1104
    %v1137 = vadd.f32 %v933, %v1105
    %v1138 = vadd.f32 %v934, %v1106
    %v1139 = vadd.f32 %v935, %v1107
    %v1140 = vadd.f32 %v936, %v1108
    %v1141 = vadd.f32 %v937, %v1109
    %v1142 = vadd.f32 %v938, %v1110
    %v1143 = vadd.f32 %v939, %v1111
    %v1144 = vadd.f32 %v940, %v1112
    %v1145 = vadd.f32 %v941, %v1113
    %v1146 = vadd.f32 %v942, %v1114
    %v1147 = vadd.f32 %v943, %v1115
    %v1148 = vadd.f32 %v944, %v1116
    %v1149 = vadd.f32 %v945, %v1117
    %v1150 = vadd.f32 %v946, %v1118
    %v1151 = vadd.f32 %v947, %v1119
    %v1152 = vadd.f32 %v948, %v1120
    %1153 = vrot.lane.b32.xlu0 %v83, 127
    %v1154 = vpop.permute.xlu0 %1153
    %1155 = vrot.lane.b32.xlu0 %v84, 127
    %v1156 = vpop.permute.xlu0 %1155
    %v1157 = vsel %vm524, %v1154, %v1156
    %v1158 = vsel %vm524, %v1156, %v1154
    %v1159 = vsel %vm529, %v83, %v1157
    %v1160 = vsel %vm530, %v84, %v1158
    %v1163 = vcombine.low %v1159, %v1160
    %v1164 = vcombine.high %v1159, %v1160
    %v1166 = vunpack.c.l.s4 1966171168
    %v1167 = vunpack.c.0.s8 %v1166
    %v1168 = vlaneseq
    %v1169 = vshrl.u32 %v1168, 7
    %v1170 = vsub.s32 %v1167, %v1169
    %v1171 = vrot.slane %v1163, %v1170
    %v1173 = vunpack.c.l.s4 1966171168
    %v1174 = vunpack.c.0.s8 %v1173
    %v1175 = vlaneseq
    %v1176 = vshrl.u32 %v1175, 7
    %v1177 = vsub.s32 %v1174, %v1176
    %v1178 = vrot.slane %v1164, %v1177
    %v1179 = vcombine.high %v1171, %v1171
    %v1180 = vcombine.high %v1178, %v1178
    %v1182 = vunpack.c.l.s4 1966171168
    %v1183 = vunpack.c.0.s8 %v1182
    %v1184 = vlaneseq
    %v1185 = vshrl.u32 %v1184, 7
    %v1186 = vsub.s32 %v1183, %v1185
    %v1187 = vrot.slane %v1171, %v1186
    %v1189 = vunpack.c.l.s4 1966171168
    %v1190 = vunpack.c.0.s8 %v1189
    %v1191 = vlaneseq
    %v1192 = vshrl.u32 %v1191, 7
    %v1193 = vsub.s32 %v1190, %v1192
    %v1194 = vrot.slane %v1178, %v1193
    %v1196 = vunpack.c.l.s4 1966171168
    %v1197 = vunpack.c.0.s8 %v1196
    %v1198 = vlaneseq
    %v1199 = vshrl.u32 %v1198, 7
    %v1200 = vsub.s32 %v1197, %v1199
    %v1201 = vrot.slane %v1179, %v1200
    %v1203 = vunpack.c.l.s4 1966171168
    %v1204 = vunpack.c.0.s8 %v1203
    %v1205 = vlaneseq
    %v1206 = vshrl.u32 %v1205, 7
    %v1207 = vsub.s32 %v1204, %v1206
    %v1208 = vrot.slane %v1180, %v1207
    %v1209 = vcombine.high %v1187, %v1187
    %v1210 = vcombine.high %v1194, %v1194
    %v1211 = vcombine.high %v1201, %v1201
    %v1212 = vcombine.high %v1208, %v1208
    %v1213 = vlaneseq
    %v1214 = vshrl.u32 %v1213, 7
    %v1215 = vsub.s32 0, %v1214
    %v1216 = vrot.slane %v1187, %v1215
    %v1217 = vlaneseq
    %v1218 = vshrl.u32 %v1217, 7
    %v1219 = vsub.s32 1, %v1218
    %v1220 = vrot.slane %v1187, %v1219
    %v1221 = vlaneseq
    %v1222 = vshrl.u32 %v1221, 7
    %v1223 = vsub.s32 0, %v1222
    %v1224 = vrot.slane %v1201, %v1223
    %v1225 = vlaneseq
    %v1226 = vshrl.u32 %v1225, 7
    %v1227 = vsub.s32 1, %v1226
    %v1228 = vrot.slane %v1201, %v1227
    %v1229 = vlaneseq
    %v1230 = vshrl.u32 %v1229, 7
    %v1231 = vsub.s32 0, %v1230
    %v1232 = vrot.slane %v1209, %v1231
    %v1233 = vlaneseq
    %v1234 = vshrl.u32 %v1233, 7
    %v1235 = vsub.s32 1, %v1234
    %v1236 = vrot.slane %v1209, %v1235
    %v1237 = vlaneseq
    %v1238 = vshrl.u32 %v1237, 7
    %v1239 = vsub.s32 0, %v1238
    %v1240 = vrot.slane %v1211, %v1239
    %v1241 = vlaneseq
    %v1242 = vshrl.u32 %v1241, 7
    %v1243 = vsub.s32 1, %v1242
    %v1244 = vrot.slane %v1211, %v1243
    %v1245 = vlaneseq
    %v1246 = vshrl.u32 %v1245, 7
    %v1247 = vsub.s32 0, %v1246
    %v1248 = vrot.slane %v1194, %v1247
    %v1249 = vlaneseq
    %v1250 = vshrl.u32 %v1249, 7
    %v1251 = vsub.s32 1, %v1250
    %v1252 = vrot.slane %v1194, %v1251
    %v1253 = vlaneseq
    %v1254 = vshrl.u32 %v1253, 7
    %v1255 = vsub.s32 0, %v1254
    %v1256 = vrot.slane %v1208, %v1255
    %v1257 = vlaneseq
    %v1258 = vshrl.u32 %v1257, 7
    %v1259 = vsub.s32 1, %v1258
    %v1260 = vrot.slane %v1208, %v1259
    %v1261 = vlaneseq
    %v1262 = vshrl.u32 %v1261, 7
    %v1263 = vsub.s32 0, %v1262
    %v1264 = vrot.slane %v1210, %v1263
    %v1265 = vlaneseq
    %v1266 = vshrl.u32 %v1265, 7
    %v1267 = vsub.s32 1, %v1266
    %v1268 = vrot.slane %v1210, %v1267
    %v1269 = vlaneseq
    %v1270 = vshrl.u32 %v1269, 7
    %v1271 = vsub.s32 0, %v1270
    %v1272 = vrot.slane %v1212, %v1271
    %v1273 = vlaneseq
    %v1274 = vshrl.u32 %v1273, 7
    %v1275 = vsub.s32 1, %v1274
    %v1276 = vrot.slane %v1212, %v1275
    %1293 = vset.pattern.permute.xlu0 5
    %1294 = vperm.xlu0 %1293, %v42
    %v1295 = vpop.permute.xlu0 %1294
    %1297 = vset.pattern.permute.xlu0 5
    %1298 = vperm.xlu0 %1297, %v43
    %v1299 = vpop.permute.xlu0 %1298
    %v1301 = vmul.f32 %v1216, %v1295
    %v1302 = vmul.f32 %v1220, %v1295
    %v1303 = vmul.f32 %v1216, %v1299
    %v1304 = vmul.f32 %v1220, %v1299
    %v1305 = vmul.f32 %v1224, %v1295
    %v1306 = vmul.f32 %v1228, %v1295
    %v1307 = vmul.f32 %v1224, %v1299
    %v1308 = vmul.f32 %v1228, %v1299
    %v1309 = vmul.f32 %v1232, %v1295
    %v1310 = vmul.f32 %v1236, %v1295
    %v1311 = vmul.f32 %v1232, %v1299
    %v1312 = vmul.f32 %v1236, %v1299
    %v1313 = vmul.f32 %v1240, %v1295
    %v1314 = vmul.f32 %v1244, %v1295
    %v1315 = vmul.f32 %v1240, %v1299
    %v1316 = vmul.f32 %v1244, %v1299
    %v1317 = vmul.f32 %v1248, %v1295
    %v1318 = vmul.f32 %v1252, %v1295
    %v1319 = vmul.f32 %v1248, %v1299
    %v1320 = vmul.f32 %v1252, %v1299
    %v1321 = vmul.f32 %v1256, %v1295
    %v1322 = vmul.f32 %v1260, %v1295
    %v1323 = vmul.f32 %v1256, %v1299
    %v1324 = vmul.f32 %v1260, %v1299
    %v1325 = vmul.f32 %v1264, %v1295
    %v1326 = vmul.f32 %v1268, %v1295
    %v1327 = vmul.f32 %v1264, %v1299
    %v1328 = vmul.f32 %v1268, %v1299
    %v1329 = vmul.f32 %v1272, %v1295
    %v1330 = vmul.f32 %v1276, %v1295
    %v1331 = vmul.f32 %v1272, %v1299
    %v1332 = vmul.f32 %v1276, %v1299
    %v1333 = vadd.f32 %v1121, %v1301
    %v1334 = vadd.f32 %v1122, %v1302
    %v1335 = vadd.f32 %v1123, %v1303
    %v1336 = vadd.f32 %v1124, %v1304
    %v1337 = vadd.f32 %v1125, %v1305
    %v1338 = vadd.f32 %v1126, %v1306
    %v1339 = vadd.f32 %v1127, %v1307
    %v1340 = vadd.f32 %v1128, %v1308
    %v1341 = vadd.f32 %v1129, %v1309
    %v1342 = vadd.f32 %v1130, %v1310
    %v1343 = vadd.f32 %v1131, %v1311
    %v1344 = vadd.f32 %v1132, %v1312
    %v1345 = vadd.f32 %v1133, %v1313
    %v1346 = vadd.f32 %v1134, %v1314
    %v1347 = vadd.f32 %v1135, %v1315
    %v1348 = vadd.f32 %v1136, %v1316
    %v1349 = vadd.f32 %v1137, %v1317
    %v1350 = vadd.f32 %v1138, %v1318
    %v1351 = vadd.f32 %v1139, %v1319
    %v1352 = vadd.f32 %v1140, %v1320
    %v1353 = vadd.f32 %v1141, %v1321
    %v1354 = vadd.f32 %v1142, %v1322
    %v1355 = vadd.f32 %v1143, %v1323
    %v1356 = vadd.f32 %v1144, %v1324
    %v1357 = vadd.f32 %v1145, %v1325
    %v1358 = vadd.f32 %v1146, %v1326
    %v1359 = vadd.f32 %v1147, %v1327
    %v1360 = vadd.f32 %v1148, %v1328
    %v1361 = vadd.f32 %v1149, %v1329
    %v1362 = vadd.f32 %v1150, %v1330
    %v1363 = vadd.f32 %v1151, %v1331
    %v1364 = vadd.f32 %v1152, %v1332
    %1365 = vrot.lane.b32.xlu0 %v83, 112
    %v1366 = vpop.permute.xlu0 %1365
    %1367 = vrot.lane.b32.xlu0 %v84, 112
    %v1368 = vpop.permute.xlu0 %1367
    %vm1369 = vcmp.lt.s32.totalorder %v46, 112
    %v1370 = vsel %vm1369, %v1366, %v1368
    %v1371 = vsel %vm1369, %v1368, %v1366
    %v1372 = vsel %vm78, 1, 0
    %v1373 = vsel %vm79, 1, 0
    %vm1374 = vcmp.eq.s32.totalorder %v1372, 1
    %vm1375 = vcmp.eq.s32.totalorder %v1373, 1
    %v1376 = vsel %vm1374, %v83, %v1370
    %v1377 = vsel %vm1375, %v84, %v1371
    %1378 = vrot.lane.b32.xlu0 %v1376, 1
    %v1379 = vpop.permute.xlu0 %1378
    %1380 = vrot.lane.b32.xlu0 %v1377, 1
    %v1381 = vpop.permute.xlu0 %1380
    %v1382 = vsel %vm101, %v1379, %v1381
    %v1383 = vsel %vm101, %v1381, %v1379
    %v1384 = vsel %vm106, %v1376, %v1383
    %v1385 = vsel %vm107, %v1377, %v1382
    %v1388 = vcombine.low %v1384, %v1385
    %v1389 = vcombine.high %v1384, %v1385
    %v1391 = vunpack.c.l.s4 1966171168
    %v1392 = vunpack.c.0.s8 %v1391
    %v1393 = vlaneseq
    %v1394 = vshrl.u32 %v1393, 7
    %v1395 = vsub.s32 %v1392, %v1394
    %v1396 = vrot.slane %v1388, %v1395
    %v1398 = vunpack.c.l.s4 1966171168
    %v1399 = vunpack.c.0.s8 %v1398
    %v1400 = vlaneseq
    %v1401 = vshrl.u32 %v1400, 7
    %v1402 = vsub.s32 %v1399, %v1401
    %v1403 = vrot.slane %v1389, %v1402
    %v1404 = vcombine.high %v1396, %v1396
    %v1405 = vcombine.high %v1403, %v1403
    %v1407 = vunpack.c.l.s4 1966171168
    %v1408 = vunpack.c.0.s8 %v1407
    %v1409 = vlaneseq
    %v1410 = vshrl.u32 %v1409, 7
    %v1411 = vsub.s32 %v1408, %v1410
    %v1412 = vrot.slane %v1396, %v1411
    %v1414 = vunpack.c.l.s4 1966171168
    %v1415 = vunpack.c.0.s8 %v1414
    %v1416 = vlaneseq
    %v1417 = vshrl.u32 %v1416, 7
    %v1418 = vsub.s32 %v1415, %v1417
    %v1419 = vrot.slane %v1403, %v1418
    %v1421 = vunpack.c.l.s4 1966171168
    %v1422 = vunpack.c.0.s8 %v1421
    %v1423 = vlaneseq
    %v1424 = vshrl.u32 %v1423, 7
    %v1425 = vsub.s32 %v1422, %v1424
    %v1426 = vrot.slane %v1404, %v1425
    %v1428 = vunpack.c.l.s4 1966171168
    %v1429 = vunpack.c.0.s8 %v1428
    %v1430 = vlaneseq
    %v1431 = vshrl.u32 %v1430, 7
    %v1432 = vsub.s32 %v1429, %v1431
    %v1433 = vrot.slane %v1405, %v1432
    %v1434 = vcombine.high %v1412, %v1412
    %v1435 = vcombine.high %v1419, %v1419
    %v1436 = vcombine.high %v1426, %v1426
    %v1437 = vcombine.high %v1433, %v1433
    %v1438 = vlaneseq
    %v1439 = vshrl.u32 %v1438, 7
    %v1440 = vsub.s32 0, %v1439
    %v1441 = vrot.slane %v1412, %v1440
    %v1442 = vlaneseq
    %v1443 = vshrl.u32 %v1442, 7
    %v1444 = vsub.s32 1, %v1443
    %v1445 = vrot.slane %v1412, %v1444
    %v1446 = vlaneseq
    %v1447 = vshrl.u32 %v1446, 7
    %v1448 = vsub.s32 0, %v1447
    %v1449 = vrot.slane %v1426, %v1448
    %v1450 = vlaneseq
    %v1451 = vshrl.u32 %v1450, 7
    %v1452 = vsub.s32 1, %v1451
    %v1453 = vrot.slane %v1426, %v1452
    %v1454 = vlaneseq
    %v1455 = vshrl.u32 %v1454, 7
    %v1456 = vsub.s32 0, %v1455
    %v1457 = vrot.slane %v1434, %v1456
    %v1458 = vlaneseq
    %v1459 = vshrl.u32 %v1458, 7
    %v1460 = vsub.s32 1, %v1459
    %v1461 = vrot.slane %v1434, %v1460
    %v1462 = vlaneseq
    %v1463 = vshrl.u32 %v1462, 7
    %v1464 = vsub.s32 0, %v1463
    %v1465 = vrot.slane %v1436, %v1464
    %v1466 = vlaneseq
    %v1467 = vshrl.u32 %v1466, 7
    %v1468 = vsub.s32 1, %v1467
    %v1469 = vrot.slane %v1436, %v1468
    %v1470 = vlaneseq
    %v1471 = vshrl.u32 %v1470, 7
    %v1472 = vsub.s32 0, %v1471
    %v1473 = vrot.slane %v1419, %v1472
    %v1474 = vlaneseq
    %v1475 = vshrl.u32 %v1474, 7
    %v1476 = vsub.s32 1, %v1475
    %v1477 = vrot.slane %v1419, %v1476
    %v1478 = vlaneseq
    %v1479 = vshrl.u32 %v1478, 7
    %v1480 = vsub.s32 0, %v1479
    %v1481 = vrot.slane %v1433, %v1480
    %v1482 = vlaneseq
    %v1483 = vshrl.u32 %v1482, 7
    %v1484 = vsub.s32 1, %v1483
    %v1485 = vrot.slane %v1433, %v1484
    %v1486 = vlaneseq
    %v1487 = vshrl.u32 %v1486, 7
    %v1488 = vsub.s32 0, %v1487
    %v1489 = vrot.slane %v1435, %v1488
    %v1490 = vlaneseq
    %v1491 = vshrl.u32 %v1490, 7
    %v1492 = vsub.s32 1, %v1491
    %v1493 = vrot.slane %v1435, %v1492
    %v1494 = vlaneseq
    %v1495 = vshrl.u32 %v1494, 7
    %v1496 = vsub.s32 0, %v1495
    %v1497 = vrot.slane %v1437, %v1496
    %v1498 = vlaneseq
    %v1499 = vshrl.u32 %v1498, 7
    %v1500 = vsub.s32 1, %v1499
    %v1501 = vrot.slane %v1437, %v1500
    %1518 = vset.pattern.permute.xlu0 6
    %1519 = vperm.xlu0 %1518, %v42
    %v1520 = vpop.permute.xlu0 %1519
    %1522 = vset.pattern.permute.xlu0 6
    %1523 = vperm.xlu0 %1522, %v43
    %v1524 = vpop.permute.xlu0 %1523
    %v1526 = vmul.f32 %v1441, %v1520
    %v1527 = vmul.f32 %v1445, %v1520
    %v1528 = vmul.f32 %v1441, %v1524
    %v1529 = vmul.f32 %v1445, %v1524
    %v1530 = vmul.f32 %v1449, %v1520
    %v1531 = vmul.f32 %v1453, %v1520
    %v1532 = vmul.f32 %v1449, %v1524
    %v1533 = vmul.f32 %v1453, %v1524
    %v1534 = vmul.f32 %v1457, %v1520
    %v1535 = vmul.f32 %v1461, %v1520
    %v1536 = vmul.f32 %v1457, %v1524
    %v1537 = vmul.f32 %v1461, %v1524
    %v1538 = vmul.f32 %v1465, %v1520
    %v1539 = vmul.f32 %v1469, %v1520
    %v1540 = vmul.f32 %v1465, %v1524
    %v1541 = vmul.f32 %v1469, %v1524
    %v1542 = vmul.f32 %v1473, %v1520
    %v1543 = vmul.f32 %v1477, %v1520
    %v1544 = vmul.f32 %v1473, %v1524
    %v1545 = vmul.f32 %v1477, %v1524
    %v1546 = vmul.f32 %v1481, %v1520
    %v1547 = vmul.f32 %v1485, %v1520
    %v1548 = vmul.f32 %v1481, %v1524
    %v1549 = vmul.f32 %v1485, %v1524
    %v1550 = vmul.f32 %v1489, %v1520
    %v1551 = vmul.f32 %v1493, %v1520
    %v1552 = vmul.f32 %v1489, %v1524
    %v1553 = vmul.f32 %v1493, %v1524
    %v1554 = vmul.f32 %v1497, %v1520
    %v1555 = vmul.f32 %v1501, %v1520
    %v1556 = vmul.f32 %v1497, %v1524
    %v1557 = vmul.f32 %v1501, %v1524
    %v1558 = vadd.f32 %v1333, %v1526
    %v1559 = vadd.f32 %v1334, %v1527
    %v1560 = vadd.f32 %v1335, %v1528
    %v1561 = vadd.f32 %v1336, %v1529
    %v1562 = vadd.f32 %v1337, %v1530
    %v1563 = vadd.f32 %v1338, %v1531
    %v1564 = vadd.f32 %v1339, %v1532
    %v1565 = vadd.f32 %v1340, %v1533
    %v1566 = vadd.f32 %v1341, %v1534
    %v1567 = vadd.f32 %v1342, %v1535
    %v1568 = vadd.f32 %v1343, %v1536
    %v1569 = vadd.f32 %v1344, %v1537
    %v1570 = vadd.f32 %v1345, %v1538
    %v1571 = vadd.f32 %v1346, %v1539
    %v1572 = vadd.f32 %v1347, %v1540
    %v1573 = vadd.f32 %v1348, %v1541
    %v1574 = vadd.f32 %v1349, %v1542
    %v1575 = vadd.f32 %v1350, %v1543
    %v1576 = vadd.f32 %v1351, %v1544
    %v1577 = vadd.f32 %v1352, %v1545
    %v1578 = vadd.f32 %v1353, %v1546
    %v1579 = vadd.f32 %v1354, %v1547
    %v1580 = vadd.f32 %v1355, %v1548
    %v1581 = vadd.f32 %v1356, %v1549
    %v1582 = vadd.f32 %v1357, %v1550
    %v1583 = vadd.f32 %v1358, %v1551
    %v1584 = vadd.f32 %v1359, %v1552
    %v1585 = vadd.f32 %v1360, %v1553
    %v1586 = vadd.f32 %v1361, %v1554
    %v1587 = vadd.f32 %v1362, %v1555
    %v1588 = vadd.f32 %v1363, %v1556
    %v1589 = vadd.f32 %v1364, %v1557
    %v1592 = vcombine.low %v1376, %v1377
    %v1593 = vcombine.high %v1376, %v1377
    %v1595 = vunpack.c.l.s4 1966171168
    %v1596 = vunpack.c.0.s8 %v1595
    %v1597 = vlaneseq
    %v1598 = vshrl.u32 %v1597, 7
    %v1599 = vsub.s32 %v1596, %v1598
    %v1600 = vrot.slane %v1592, %v1599
    %v1602 = vunpack.c.l.s4 1966171168
    %v1603 = vunpack.c.0.s8 %v1602
    %v1604 = vlaneseq
    %v1605 = vshrl.u32 %v1604, 7
    %v1606 = vsub.s32 %v1603, %v1605
    %v1607 = vrot.slane %v1593, %v1606
    %v1608 = vcombine.high %v1600, %v1600
    %v1609 = vcombine.high %v1607, %v1607
    %v1611 = vunpack.c.l.s4 1966171168
    %v1612 = vunpack.c.0.s8 %v1611
    %v1613 = vlaneseq
    %v1614 = vshrl.u32 %v1613, 7
    %v1615 = vsub.s32 %v1612, %v1614
    %v1616 = vrot.slane %v1600, %v1615
    %v1618 = vunpack.c.l.s4 1966171168
    %v1619 = vunpack.c.0.s8 %v1618
    %v1620 = vlaneseq
    %v1621 = vshrl.u32 %v1620, 7
    %v1622 = vsub.s32 %v1619, %v1621
    %v1623 = vrot.slane %v1607, %v1622
    %v1625 = vunpack.c.l.s4 1966171168
    %v1626 = vunpack.c.0.s8 %v1625
    %v1627 = vlaneseq
    %v1628 = vshrl.u32 %v1627, 7
    %v1629 = vsub.s32 %v1626, %v1628
    %v1630 = vrot.slane %v1608, %v1629
    %v1632 = vunpack.c.l.s4 1966171168
    %v1633 = vunpack.c.0.s8 %v1632
    %v1634 = vlaneseq
    %v1635 = vshrl.u32 %v1634, 7
    %v1636 = vsub.s32 %v1633, %v1635
    %v1637 = vrot.slane %v1609, %v1636
    %v1638 = vcombine.high %v1616, %v1616
    %v1639 = vcombine.high %v1623, %v1623
    %v1640 = vcombine.high %v1630, %v1630
    %v1641 = vcombine.high %v1637, %v1637
    %v1642 = vlaneseq
    %v1643 = vshrl.u32 %v1642, 7
    %v1644 = vsub.s32 0, %v1643
    %v1645 = vrot.slane %v1616, %v1644
    %v1646 = vlaneseq
    %v1647 = vshrl.u32 %v1646, 7
    %v1648 = vsub.s32 1, %v1647
    %v1649 = vrot.slane %v1616, %v1648
    %v1650 = vlaneseq
    %v1651 = vshrl.u32 %v1650, 7
    %v1652 = vsub.s32 0, %v1651
    %v1653 = vrot.slane %v1630, %v1652
    %v1654 = vlaneseq
    %v1655 = vshrl.u32 %v1654, 7
    %v1656 = vsub.s32 1, %v1655
    %v1657 = vrot.slane %v1630, %v1656
    %v1658 = vlaneseq
    %v1659 = vshrl.u32 %v1658, 7
    %v1660 = vsub.s32 0, %v1659
    %v1661 = vrot.slane %v1638, %v1660
    %v1662 = vlaneseq
    %v1663 = vshrl.u32 %v1662, 7
    %v1664 = vsub.s32 1, %v1663
    %v1665 = vrot.slane %v1638, %v1664
    %v1666 = vlaneseq
    %v1667 = vshrl.u32 %v1666, 7
    %v1668 = vsub.s32 0, %v1667
    %v1669 = vrot.slane %v1640, %v1668
    %v1670 = vlaneseq
    %v1671 = vshrl.u32 %v1670, 7
    %v1672 = vsub.s32 1, %v1671
    %v1673 = vrot.slane %v1640, %v1672
    %v1674 = vlaneseq
    %v1675 = vshrl.u32 %v1674, 7
    %v1676 = vsub.s32 0, %v1675
    %v1677 = vrot.slane %v1623, %v1676
    %v1678 = vlaneseq
    %v1679 = vshrl.u32 %v1678, 7
    %v1680 = vsub.s32 1, %v1679
    %v1681 = vrot.slane %v1623, %v1680
    %v1682 = vlaneseq
    %v1683 = vshrl.u32 %v1682, 7
    %v1684 = vsub.s32 0, %v1683
    %v1685 = vrot.slane %v1637, %v1684
    %v1686 = vlaneseq
    %v1687 = vshrl.u32 %v1686, 7
    %v1688 = vsub.s32 1, %v1687
    %v1689 = vrot.slane %v1637, %v1688
    %v1690 = vlaneseq
    %v1691 = vshrl.u32 %v1690, 7
    %v1692 = vsub.s32 0, %v1691
    %v1693 = vrot.slane %v1639, %v1692
    %v1694 = vlaneseq
    %v1695 = vshrl.u32 %v1694, 7
    %v1696 = vsub.s32 1, %v1695
    %v1697 = vrot.slane %v1639, %v1696
    %v1698 = vlaneseq
    %v1699 = vshrl.u32 %v1698, 7
    %v1700 = vsub.s32 0, %v1699
    %v1701 = vrot.slane %v1641, %v1700
    %v1702 = vlaneseq
    %v1703 = vshrl.u32 %v1702, 7
    %v1704 = vsub.s32 1, %v1703
    %v1705 = vrot.slane %v1641, %v1704
    %1722 = vset.pattern.permute.xlu0 7
    %1723 = vperm.xlu0 %1722, %v42
    %v1724 = vpop.permute.xlu0 %1723
    %1726 = vset.pattern.permute.xlu0 7
    %1727 = vperm.xlu0 %1726, %v43
    %v1728 = vpop.permute.xlu0 %1727
    %v1730 = vmul.f32 %v1645, %v1724
    %v1731 = vmul.f32 %v1649, %v1724
    %v1732 = vmul.f32 %v1645, %v1728
    %v1733 = vmul.f32 %v1649, %v1728
    %v1734 = vmul.f32 %v1653, %v1724
    %v1735 = vmul.f32 %v1657, %v1724
    %v1736 = vmul.f32 %v1653, %v1728
    %v1737 = vmul.f32 %v1657, %v1728
    %v1738 = vmul.f32 %v1661, %v1724
    %v1739 = vmul.f32 %v1665, %v1724
    %v1740 = vmul.f32 %v1661, %v1728
    %v1741 = vmul.f32 %v1665, %v1728
    %v1742 = vmul.f32 %v1669, %v1724
    %v1743 = vmul.f32 %v1673, %v1724
    %v1744 = vmul.f32 %v1669, %v1728
    %v1745 = vmul.f32 %v1673, %v1728
    %v1746 = vmul.f32 %v1677, %v1724
    %v1747 = vmul.f32 %v1681, %v1724
    %v1748 = vmul.f32 %v1677, %v1728
    %v1749 = vmul.f32 %v1681, %v1728
    %v1750 = vmul.f32 %v1685, %v1724
    %v1751 = vmul.f32 %v1689, %v1724
    %v1752 = vmul.f32 %v1685, %v1728
    %v1753 = vmul.f32 %v1689, %v1728
    %v1754 = vmul.f32 %v1693, %v1724
    %v1755 = vmul.f32 %v1697, %v1724
    %v1756 = vmul.f32 %v1693, %v1728
    %v1757 = vmul.f32 %v1697, %v1728
    %v1758 = vmul.f32 %v1701, %v1724
    %v1759 = vmul.f32 %v1705, %v1724
    %v1760 = vmul.f32 %v1701, %v1728
    %v1761 = vmul.f32 %v1705, %v1728
    %v1762 = vadd.f32 %v1558, %v1730
    %v1763 = vadd.f32 %v1559, %v1731
    %v1764 = vadd.f32 %v1560, %v1732
    %v1765 = vadd.f32 %v1561, %v1733
    %v1766 = vadd.f32 %v1562, %v1734
    %v1767 = vadd.f32 %v1563, %v1735
    %v1768 = vadd.f32 %v1564, %v1736
    %v1769 = vadd.f32 %v1565, %v1737
    %v1770 = vadd.f32 %v1566, %v1738
    %v1771 = vadd.f32 %v1567, %v1739
    %v1772 = vadd.f32 %v1568, %v1740
    %v1773 = vadd.f32 %v1569, %v1741
    %v1774 = vadd.f32 %v1570, %v1742
    %v1775 = vadd.f32 %v1571, %v1743
    %v1776 = vadd.f32 %v1572, %v1744
    %v1777 = vadd.f32 %v1573, %v1745
    %v1778 = vadd.f32 %v1574, %v1746
    %v1779 = vadd.f32 %v1575, %v1747
    %v1780 = vadd.f32 %v1576, %v1748
    %v1781 = vadd.f32 %v1577, %v1749
    %v1782 = vadd.f32 %v1578, %v1750
    %v1783 = vadd.f32 %v1579, %v1751
    %v1784 = vadd.f32 %v1580, %v1752
    %v1785 = vadd.f32 %v1581, %v1753
    %v1786 = vadd.f32 %v1582, %v1754
    %v1787 = vadd.f32 %v1583, %v1755
    %v1788 = vadd.f32 %v1584, %v1756
    %v1789 = vadd.f32 %v1585, %v1757
    %v1790 = vadd.f32 %v1586, %v1758
    %v1791 = vadd.f32 %v1587, %v1759
    %v1792 = vadd.f32 %v1588, %v1760
    %v1793 = vadd.f32 %v1589, %v1761
    %1794 = vrot.lane.b32.xlu0 %v1376, 127
    %v1795 = vpop.permute.xlu0 %1794
    %1796 = vrot.lane.b32.xlu0 %v1377, 127
    %v1797 = vpop.permute.xlu0 %1796
    %v1798 = vsel %vm524, %v1795, %v1797
    %v1799 = vsel %vm524, %v1797, %v1795
    %v1800 = vsel %vm529, %v1376, %v1798
    %v1801 = vsel %vm530, %v1377, %v1799
    %v1804 = vcombine.low %v1800, %v1801
    %v1805 = vcombine.high %v1800, %v1801
    %v1807 = vunpack.c.l.s4 1966171168
    %v1808 = vunpack.c.0.s8 %v1807
    %v1809 = vlaneseq
    %v1810 = vshrl.u32 %v1809, 7
    %v1811 = vsub.s32 %v1808, %v1810
    %v1812 = vrot.slane %v1804, %v1811
    %v1814 = vunpack.c.l.s4 1966171168
    %v1815 = vunpack.c.0.s8 %v1814
    %v1816 = vlaneseq
    %v1817 = vshrl.u32 %v1816, 7
    %v1818 = vsub.s32 %v1815, %v1817
    %v1819 = vrot.slane %v1805, %v1818
    %v1820 = vcombine.high %v1812, %v1812
    %v1821 = vcombine.high %v1819, %v1819
    %v1823 = vunpack.c.l.s4 1966171168
    %v1824 = vunpack.c.0.s8 %v1823
    %v1825 = vlaneseq
    %v1826 = vshrl.u32 %v1825, 7
    %v1827 = vsub.s32 %v1824, %v1826
    %v1828 = vrot.slane %v1812, %v1827
    %v1830 = vunpack.c.l.s4 1966171168
    %v1831 = vunpack.c.0.s8 %v1830
    %v1832 = vlaneseq
    %v1833 = vshrl.u32 %v1832, 7
    %v1834 = vsub.s32 %v1831, %v1833
    %v1835 = vrot.slane %v1819, %v1834
    %v1837 = vunpack.c.l.s4 1966171168
    %v1838 = vunpack.c.0.s8 %v1837
    %v1839 = vlaneseq
    %v1840 = vshrl.u32 %v1839, 7
    %v1841 = vsub.s32 %v1838, %v1840
    %v1842 = vrot.slane %v1820, %v1841
    %v1844 = vunpack.c.l.s4 1966171168
    %v1845 = vunpack.c.0.s8 %v1844
    %v1846 = vlaneseq
    %v1847 = vshrl.u32 %v1846, 7
    %v1848 = vsub.s32 %v1845, %v1847
    %v1849 = vrot.slane %v1821, %v1848
    %v1850 = vcombine.high %v1828, %v1828
    %v1851 = vcombine.high %v1835, %v1835
    %v1852 = vcombine.high %v1842, %v1842
    %v1853 = vcombine.high %v1849, %v1849
    %v1854 = vlaneseq
    %v1855 = vshrl.u32 %v1854, 7
    %v1856 = vsub.s32 0, %v1855
    %v1857 = vrot.slane %v1828, %v1856
    %v1858 = vlaneseq
    %v1859 = vshrl.u32 %v1858, 7
    %v1860 = vsub.s32 1, %v1859
    %v1861 = vrot.slane %v1828, %v1860
    %v1862 = vlaneseq
    %v1863 = vshrl.u32 %v1862, 7
    %v1864 = vsub.s32 0, %v1863
    %v1865 = vrot.slane %v1842, %v1864
    %v1866 = vlaneseq
    %v1867 = vshrl.u32 %v1866, 7
    %v1868 = vsub.s32 1, %v1867
    %v1869 = vrot.slane %v1842, %v1868
    %v1870 = vlaneseq
    %v1871 = vshrl.u32 %v1870, 7
    %v1872 = vsub.s32 0, %v1871
    %v1873 = vrot.slane %v1850, %v1872
    %v1874 = vlaneseq
    %v1875 = vshrl.u32 %v1874, 7
    %v1876 = vsub.s32 1, %v1875
    %v1877 = vrot.slane %v1850, %v1876
    %v1878 = vlaneseq
    %v1879 = vshrl.u32 %v1878, 7
    %v1880 = vsub.s32 0, %v1879
    %v1881 = vrot.slane %v1852, %v1880
    %v1882 = vlaneseq
    %v1883 = vshrl.u32 %v1882, 7
    %v1884 = vsub.s32 1, %v1883
    %v1885 = vrot.slane %v1852, %v1884
    %v1886 = vlaneseq
    %v1887 = vshrl.u32 %v1886, 7
    %v1888 = vsub.s32 0, %v1887
    %v1889 = vrot.slane %v1835, %v1888
    %v1890 = vlaneseq
    %v1891 = vshrl.u32 %v1890, 7
    %v1892 = vsub.s32 1, %v1891
    %v1893 = vrot.slane %v1835, %v1892
    %v1894 = vlaneseq
    %v1895 = vshrl.u32 %v1894, 7
    %v1896 = vsub.s32 0, %v1895
    %v1897 = vrot.slane %v1849, %v1896
    %v1898 = vlaneseq
    %v1899 = vshrl.u32 %v1898, 7
    %v1900 = vsub.s32 1, %v1899
    %v1901 = vrot.slane %v1849, %v1900
    %v1902 = vlaneseq
    %v1903 = vshrl.u32 %v1902, 7
    %v1904 = vsub.s32 0, %v1903
    %v1905 = vrot.slane %v1851, %v1904
    %v1906 = vlaneseq
    %v1907 = vshrl.u32 %v1906, 7
    %v1908 = vsub.s32 1, %v1907
    %v1909 = vrot.slane %v1851, %v1908
    %v1910 = vlaneseq
    %v1911 = vshrl.u32 %v1910, 7
    %v1912 = vsub.s32 0, %v1911
    %v1913 = vrot.slane %v1853, %v1912
    %v1914 = vlaneseq
    %v1915 = vshrl.u32 %v1914, 7
    %v1916 = vsub.s32 1, %v1915
    %v1917 = vrot.slane %v1853, %v1916
    %1934 = vset.pattern.permute.xlu0 8
    %1935 = vperm.xlu0 %1934, %v42
    %v1936 = vpop.permute.xlu0 %1935
    %1938 = vset.pattern.permute.xlu0 8
    %1939 = vperm.xlu0 %1938, %v43
    %v1940 = vpop.permute.xlu0 %1939
    %v1942 = vmul.f32 %v1857, %v1936
    %v1943 = vmul.f32 %v1861, %v1936
    %v1944 = vmul.f32 %v1857, %v1940
    %v1945 = vmul.f32 %v1861, %v1940
    %v1946 = vmul.f32 %v1865, %v1936
    %v1947 = vmul.f32 %v1869, %v1936
    %v1948 = vmul.f32 %v1865, %v1940
    %v1949 = vmul.f32 %v1869, %v1940
    %v1950 = vmul.f32 %v1873, %v1936
    %v1951 = vmul.f32 %v1877, %v1936
    %v1952 = vmul.f32 %v1873, %v1940
    %v1953 = vmul.f32 %v1877, %v1940
    %v1954 = vmul.f32 %v1881, %v1936
    %v1955 = vmul.f32 %v1885, %v1936
    %v1956 = vmul.f32 %v1881, %v1940
    %v1957 = vmul.f32 %v1885, %v1940
    %v1958 = vmul.f32 %v1889, %v1936
    %v1959 = vmul.f32 %v1893, %v1936
    %v1960 = vmul.f32 %v1889, %v1940
    %v1961 = vmul.f32 %v1893, %v1940
    %v1962 = vmul.f32 %v1897, %v1936
    %v1963 = vmul.f32 %v1901, %v1936
    %v1964 = vmul.f32 %v1897, %v1940
    %v1965 = vmul.f32 %v1901, %v1940
    %v1966 = vmul.f32 %v1905, %v1936
    %v1967 = vmul.f32 %v1909, %v1936
    %v1968 = vmul.f32 %v1905, %v1940
    %v1969 = vmul.f32 %v1909, %v1940
    %v1970 = vmul.f32 %v1913, %v1936
    %v1971 = vmul.f32 %v1917, %v1936
    %v1972 = vmul.f32 %v1913, %v1940
    %v1973 = vmul.f32 %v1917, %v1940
    %v1974 = vadd.f32 %v1762, %v1942
    %v1975 = vadd.f32 %v1763, %v1943
    %v1976 = vadd.f32 %v1764, %v1944
    %v1977 = vadd.f32 %v1765, %v1945
    %v1978 = vadd.f32 %v1766, %v1946
    %v1979 = vadd.f32 %v1767, %v1947
    %v1980 = vadd.f32 %v1768, %v1948
    %v1981 = vadd.f32 %v1769, %v1949
    %v1982 = vadd.f32 %v1770, %v1950
    %v1983 = vadd.f32 %v1771, %v1951
    %v1984 = vadd.f32 %v1772, %v1952
    %v1985 = vadd.f32 %v1773, %v1953
    %v1986 = vadd.f32 %v1774, %v1954
    %v1987 = vadd.f32 %v1775, %v1955
    %v1988 = vadd.f32 %v1776, %v1956
    %v1989 = vadd.f32 %v1777, %v1957
    %v1990 = vadd.f32 %v1778, %v1958
    %v1991 = vadd.f32 %v1779, %v1959
    %v1992 = vadd.f32 %v1780, %v1960
    %v1993 = vadd.f32 %v1781, %v1961
    %v1994 = vadd.f32 %v1782, %v1962
    %v1995 = vadd.f32 %v1783, %v1963
    %v1996 = vadd.f32 %v1784, %v1964
    %v1997 = vadd.f32 %v1785, %v1965
    %v1998 = vadd.f32 %v1786, %v1966
    %v1999 = vadd.f32 %v1787, %v1967
    %v2000 = vadd.f32 %v1788, %v1968
    %v2001 = vadd.f32 %v1789, %v1969
    %v2002 = vadd.f32 %v1790, %v1970
    %v2003 = vadd.f32 %v1791, %v1971
    %v2004 = vadd.f32 %v1792, %v1972
    %v2005 = vadd.f32 %v1793, %v1973
    %v2006 = vadd.f32 %v1974, %v1975
    %2007 = vadd.xlane.f32.xlu0 %v2006
    %v2008 = vpop.xlane.xlu0 %2007
    %v2009 = vadd.f32 %v1976, %v1977
    %2010 = vadd.xlane.f32.xlu0 %v2009
    %v2011 = vpop.xlane.xlu0 %2010
    %v2012 = vadd.f32 %v1978, %v1979
    %2013 = vadd.xlane.f32.xlu0 %v2012
    %v2014 = vpop.xlane.xlu0 %2013
    %v2015 = vadd.f32 %v1980, %v1981
    %2016 = vadd.xlane.f32.xlu0 %v2015
    %v2017 = vpop.xlane.xlu0 %2016
    %v2018 = vadd.f32 %v1982, %v1983
    %2019 = vadd.xlane.f32.xlu0 %v2018
    %v2020 = vpop.xlane.xlu0 %2019
    %v2021 = vadd.f32 %v1984, %v1985
    %2022 = vadd.xlane.f32.xlu0 %v2021
    %v2023 = vpop.xlane.xlu0 %2022
    %v2024 = vadd.f32 %v1986, %v1987
    %2025 = vadd.xlane.f32.xlu0 %v2024
    %v2026 = vpop.xlane.xlu0 %2025
    %v2027 = vadd.f32 %v1988, %v1989
    %2028 = vadd.xlane.f32.xlu0 %v2027
    %v2029 = vpop.xlane.xlu0 %2028
    %v2030 = vadd.f32 %v1990, %v1991
    %2031 = vadd.xlane.f32.xlu0 %v2030
    %v2032 = vpop.xlane.xlu0 %2031
    %v2033 = vadd.f32 %v1992, %v1993
    %2034 = vadd.xlane.f32.xlu0 %v2033
    %v2035 = vpop.xlane.xlu0 %2034
    %v2036 = vadd.f32 %v1994, %v1995
    %2037 = vadd.xlane.f32.xlu0 %v2036
    %v2038 = vpop.xlane.xlu0 %2037
    %v2039 = vadd.f32 %v1996, %v1997
    %2040 = vadd.xlane.f32.xlu0 %v2039
    %v2041 = vpop.xlane.xlu0 %2040
    %v2042 = vadd.f32 %v1998, %v1999
    %2043 = vadd.xlane.f32.xlu0 %v2042
    %v2044 = vpop.xlane.xlu0 %2043
    %v2045 = vadd.f32 %v2000, %v2001
    %2046 = vadd.xlane.f32.xlu0 %v2045
    %v2047 = vpop.xlane.xlu0 %2046
    %v2048 = vadd.f32 %v2002, %v2003
    %2049 = vadd.xlane.f32.xlu0 %v2048
    %v2050 = vpop.xlane.xlu0 %2049
    %v2051 = vadd.f32 %v2004, %v2005
    %2052 = vadd.xlane.f32.xlu0 %v2051
    %v2053 = vpop.xlane.xlu0 %2052
    %v2054 = vmul.f32 %v2008, 0.00390625
    %v2055 = vmul.f32 %v2011, 0.00390625
    %v2056 = vmul.f32 %v2014, 0.00390625
    %v2057 = vmul.f32 %v2017, 0.00390625
    %v2058 = vmul.f32 %v2020, 0.00390625
    %v2059 = vmul.f32 %v2023, 0.00390625
    %v2060 = vmul.f32 %v2026, 0.00390625
    %v2061 = vmul.f32 %v2029, 0.00390625
    %v2062 = vmul.f32 %v2032, 0.00390625
    %v2063 = vmul.f32 %v2035, 0.00390625
    %v2064 = vmul.f32 %v2038, 0.00390625
    %v2065 = vmul.f32 %v2041, 0.00390625
    %v2066 = vmul.f32 %v2044, 0.00390625
    %v2067 = vmul.f32 %v2047, 0.00390625
    %v2068 = vmul.f32 %v2050, 0.00390625
    %v2069 = vmul.f32 %v2053, 0.00390625
    %v2070 = vsub.f32 %v1974, %v2054
    %v2071 = vsub.f32 %v1975, %v2054
    %v2072 = vsub.f32 %v1976, %v2055
    %v2073 = vsub.f32 %v1977, %v2055
    %v2074 = vsub.f32 %v1978, %v2056
    %v2075 = vsub.f32 %v1979, %v2056
    %v2076 = vsub.f32 %v1980, %v2057
    %v2077 = vsub.f32 %v1981, %v2057
    %v2078 = vsub.f32 %v1982, %v2058
    %v2079 = vsub.f32 %v1983, %v2058
    %v2080 = vsub.f32 %v1984, %v2059
    %v2081 = vsub.f32 %v1985, %v2059
    %v2082 = vsub.f32 %v1986, %v2060
    %v2083 = vsub.f32 %v1987, %v2060
    %v2084 = vsub.f32 %v1988, %v2061
    %v2085 = vsub.f32 %v1989, %v2061
    %v2086 = vsub.f32 %v1990, %v2062
    %v2087 = vsub.f32 %v1991, %v2062
    %v2088 = vsub.f32 %v1992, %v2063
    %v2089 = vsub.f32 %v1993, %v2063
    %v2090 = vsub.f32 %v1994, %v2064
    %v2091 = vsub.f32 %v1995, %v2064
    %v2092 = vsub.f32 %v1996, %v2065
    %v2093 = vsub.f32 %v1997, %v2065
    %v2094 = vsub.f32 %v1998, %v2066
    %v2095 = vsub.f32 %v1999, %v2066
    %v2096 = vsub.f32 %v2000, %v2067
    %v2097 = vsub.f32 %v2001, %v2067
    %v2098 = vsub.f32 %v2002, %v2068
    %v2099 = vsub.f32 %v2003, %v2068
    %v2100 = vsub.f32 %v2004, %v2069
    %v2101 = vsub.f32 %v2005, %v2069
    %v2102 = vmul.f32 %v2070, %v2070
    %v2103 = vmul.f32 %v2071, %v2071
    %v2104 = vmul.f32 %v2072, %v2072
    %v2105 = vmul.f32 %v2073, %v2073
    %v2106 = vmul.f32 %v2074, %v2074
    %v2107 = vmul.f32 %v2075, %v2075
    %v2108 = vmul.f32 %v2076, %v2076
    %v2109 = vmul.f32 %v2077, %v2077
    %v2110 = vmul.f32 %v2078, %v2078
    %v2111 = vmul.f32 %v2079, %v2079
    %v2112 = vmul.f32 %v2080, %v2080
    %v2113 = vmul.f32 %v2081, %v2081
    %v2114 = vmul.f32 %v2082, %v2082
    %v2115 = vmul.f32 %v2083, %v2083
    %v2116 = vmul.f32 %v2084, %v2084
    %v2117 = vmul.f32 %v2085, %v2085
    %v2118 = vmul.f32 %v2086, %v2086
    %v2119 = vmul.f32 %v2087, %v2087
    %v2120 = vmul.f32 %v2088, %v2088
    %v2121 = vmul.f32 %v2089, %v2089
    %v2122 = vmul.f32 %v2090, %v2090
    %v2123 = vmul.f32 %v2091, %v2091
    %v2124 = vmul.f32 %v2092, %v2092
    %v2125 = vmul.f32 %v2093, %v2093
    %v2126 = vmul.f32 %v2094, %v2094
    %v2127 = vmul.f32 %v2095, %v2095
    %v2128 = vmul.f32 %v2096, %v2096
    %v2129 = vmul.f32 %v2097, %v2097
    %v2130 = vmul.f32 %v2098, %v2098
    %v2131 = vmul.f32 %v2099, %v2099
    %v2132 = vmul.f32 %v2100, %v2100
    %v2133 = vmul.f32 %v2101, %v2101
    %v2134 = vadd.f32 %v2102, %v2103
    %2135 = vadd.xlane.f32.xlu0 %v2134
    %v2136 = vpop.xlane.xlu0 %2135
    %v2137 = vadd.f32 %v2104, %v2105
    %2138 = vadd.xlane.f32.xlu0 %v2137
    %v2139 = vpop.xlane.xlu0 %2138
    %v2140 = vadd.f32 %v2106, %v2107
    %2141 = vadd.xlane.f32.xlu0 %v2140
    %v2142 = vpop.xlane.xlu0 %2141
    %v2143 = vadd.f32 %v2108, %v2109
    %2144 = vadd.xlane.f32.xlu0 %v2143
    %v2145 = vpop.xlane.xlu0 %2144
    %v2146 = vadd.f32 %v2110, %v2111
    %2147 = vadd.xlane.f32.xlu0 %v2146
    %v2148 = vpop.xlane.xlu0 %2147
    %v2149 = vadd.f32 %v2112, %v2113
    %2150 = vadd.xlane.f32.xlu0 %v2149
    %v2151 = vpop.xlane.xlu0 %2150
    %v2152 = vadd.f32 %v2114, %v2115
    %2153 = vadd.xlane.f32.xlu0 %v2152
    %v2154 = vpop.xlane.xlu0 %2153
    %v2155 = vadd.f32 %v2116, %v2117
    %2156 = vadd.xlane.f32.xlu0 %v2155
    %v2157 = vpop.xlane.xlu0 %2156
    %v2158 = vadd.f32 %v2118, %v2119
    %2159 = vadd.xlane.f32.xlu0 %v2158
    %v2160 = vpop.xlane.xlu0 %2159
    %v2161 = vadd.f32 %v2120, %v2121
    %2162 = vadd.xlane.f32.xlu0 %v2161
    %v2163 = vpop.xlane.xlu0 %2162
    %v2164 = vadd.f32 %v2122, %v2123
    %2165 = vadd.xlane.f32.xlu0 %v2164
    %v2166 = vpop.xlane.xlu0 %2165
    %v2167 = vadd.f32 %v2124, %v2125
    %2168 = vadd.xlane.f32.xlu0 %v2167
    %v2169 = vpop.xlane.xlu0 %2168
    %v2170 = vadd.f32 %v2126, %v2127
    %2171 = vadd.xlane.f32.xlu0 %v2170
    %v2172 = vpop.xlane.xlu0 %2171
    %v2173 = vadd.f32 %v2128, %v2129
    %2174 = vadd.xlane.f32.xlu0 %v2173
    %v2175 = vpop.xlane.xlu0 %2174
    %v2176 = vadd.f32 %v2130, %v2131
    %2177 = vadd.xlane.f32.xlu0 %v2176
    %v2178 = vpop.xlane.xlu0 %2177
    %v2179 = vadd.f32 %v2132, %v2133
    %2180 = vadd.xlane.f32.xlu0 %v2179
    %v2181 = vpop.xlane.xlu0 %2180
    %v2182 = vmul.f32 %v2136, 0.00390625
    %v2183 = vmul.f32 %v2139, 0.00390625
    %v2184 = vmul.f32 %v2142, 0.00390625
    %v2185 = vmul.f32 %v2145, 0.00390625
    %v2186 = vmul.f32 %v2148, 0.00390625
    %v2187 = vmul.f32 %v2151, 0.00390625
    %v2188 = vmul.f32 %v2154, 0.00390625
    %v2189 = vmul.f32 %v2157, 0.00390625
    %v2190 = vmul.f32 %v2160, 0.00390625
    %v2191 = vmul.f32 %v2163, 0.00390625
    %v2192 = vmul.f32 %v2166, 0.00390625
    %v2193 = vmul.f32 %v2169, 0.00390625
    %v2194 = vmul.f32 %v2172, 0.00390625
    %v2195 = vmul.f32 %v2175, 0.00390625
    %v2196 = vmul.f32 %v2178, 0.00390625
    %v2197 = vmul.f32 %v2181, 0.00390625
    %v2198 = vadd.f32 %v2182, 1e-08
    %v2199 = vadd.f32 %v2183, 1e-08
    %v2200 = vadd.f32 %v2184, 1e-08
    %v2201 = vadd.f32 %v2185, 1e-08
    %v2202 = vadd.f32 %v2186, 1e-08
    %v2203 = vadd.f32 %v2187, 1e-08
    %v2204 = vadd.f32 %v2188, 1e-08
    %v2205 = vadd.f32 %v2189, 1e-08
    %v2206 = vadd.f32 %v2190, 1e-08
    %v2207 = vadd.f32 %v2191, 1e-08
    %v2208 = vadd.f32 %v2192, 1e-08
    %v2209 = vadd.f32 %v2193, 1e-08
    %v2210 = vadd.f32 %v2194, 1e-08
    %v2211 = vadd.f32 %v2195, 1e-08
    %v2212 = vadd.f32 %v2196, 1e-08
    %v2213 = vadd.f32 %v2197, 1e-08
    %v2214 = vrsqrt.pop %v2198
    %v2215 = vrsqrt.pop %v2199
    %v2216 = vrsqrt.pop %v2200
    %v2217 = vrsqrt.pop %v2201
    %v2218 = vrsqrt.pop %v2202
    %v2219 = vrsqrt.pop %v2203
    %v2220 = vrsqrt.pop %v2204
    %v2221 = vrsqrt.pop %v2205
    %v2222 = vrsqrt.pop %v2206
    %v2223 = vrsqrt.pop %v2207
    %v2224 = vrsqrt.pop %v2208
    %v2225 = vrsqrt.pop %v2209
    %v2226 = vrsqrt.pop %v2210
    %v2227 = vrsqrt.pop %v2211
    %v2228 = vrsqrt.pop %v2212
    %v2229 = vrsqrt.pop %v2213
    %v2230 = vmul.f32 %v2214, %v42
    %v2231 = vmul.f32 %v2215, %v43
    %v2232 = vmul.f32 %v2216, %v42
    %v2233 = vmul.f32 %v2217, %v43
    %v2234 = vmul.f32 %v2218, %v42
    %v2235 = vmul.f32 %v2219, %v43
    %v2236 = vmul.f32 %v2220, %v42
    %v2237 = vmul.f32 %v2221, %v43
    %v2238 = vmul.f32 %v2222, %v42
    %v2239 = vmul.f32 %v2223, %v43
    %v2240 = vmul.f32 %v2224, %v42
    %v2241 = vmul.f32 %v2225, %v43
    %v2242 = vmul.f32 %v2226, %v42
    %v2243 = vmul.f32 %v2227, %v43
    %v2244 = vmul.f32 %v2228, %v42
    %v2245 = vmul.f32 %v2229, %v43
    %2247 = vset.pattern.permute.xlu0 26
    %2248 = vperm.xlu0 %2247, %v2230
    %v2249 = vpop.permute.xlu0 %2248
    %2252 = vset.pattern.permute.xlu0 26
    %2253 = vperm.xlu0 %2252, %v2231
    %v2254 = vpop.permute.xlu0 %2253
    %2257 = vset.pattern.permute.xlu0 26
    %2258 = vperm.xlu0 %2257, %v2232
    %v2259 = vpop.permute.xlu0 %2258
    %2262 = vset.pattern.permute.xlu0 26
    %2263 = vperm.xlu0 %2262, %v2233
    %v2264 = vpop.permute.xlu0 %2263
    %2267 = vset.pattern.permute.xlu0 26
    %2268 = vperm.xlu0 %2267, %v2234
    %v2269 = vpop.permute.xlu0 %2268
    %2272 = vset.pattern.permute.xlu0 26
    %2273 = vperm.xlu0 %2272, %v2235
    %v2274 = vpop.permute.xlu0 %2273
    %2277 = vset.pattern.permute.xlu0 26
    %2278 = vperm.xlu0 %2277, %v2236
    %v2279 = vpop.permute.xlu0 %2278
    %2282 = vset.pattern.permute.xlu0 26
    %2283 = vperm.xlu0 %2282, %v2237
    %v2284 = vpop.permute.xlu0 %2283
    %2287 = vset.pattern.permute.xlu0 26
    %2288 = vperm.xlu0 %2287, %v2238
    %v2289 = vpop.permute.xlu0 %2288
    %2292 = vset.pattern.permute.xlu0 26
    %2293 = vperm.xlu0 %2292, %v2239
    %v2294 = vpop.permute.xlu0 %2293
    %2297 = vset.pattern.permute.xlu0 26
    %2298 = vperm.xlu0 %2297, %v2240
    %v2299 = vpop.permute.xlu0 %2298
    %2302 = vset.pattern.permute.xlu0 26
    %2303 = vperm.xlu0 %2302, %v2241
    %v2304 = vpop.permute.xlu0 %2303
    %2307 = vset.pattern.permute.xlu0 26
    %2308 = vperm.xlu0 %2307, %v2242
    %v2309 = vpop.permute.xlu0 %2308
    %2312 = vset.pattern.permute.xlu0 26
    %2313 = vperm.xlu0 %2312, %v2243
    %v2314 = vpop.permute.xlu0 %2313
    %2317 = vset.pattern.permute.xlu0 26
    %2318 = vperm.xlu0 %2317, %v2244
    %v2319 = vpop.permute.xlu0 %2318
    %2322 = vset.pattern.permute.xlu0 26
    %2323 = vperm.xlu0 %2322, %v2245
    %v2324 = vpop.permute.xlu0 %2323
    %v2326 = vmul.f32 %v2070, %v2249
    %v2327 = vmul.f32 %v2071, %v2249
    %v2328 = vmul.f32 %v2072, %v2254
    %v2329 = vmul.f32 %v2073, %v2254
    %v2330 = vmul.f32 %v2074, %v2259
    %v2331 = vmul.f32 %v2075, %v2259
    %v2332 = vmul.f32 %v2076, %v2264
    %v2333 = vmul.f32 %v2077, %v2264
    %v2334 = vmul.f32 %v2078, %v2269
    %v2335 = vmul.f32 %v2079, %v2269
    %v2336 = vmul.f32 %v2080, %v2274
    %v2337 = vmul.f32 %v2081, %v2274
    %v2338 = vmul.f32 %v2082, %v2279
    %v2339 = vmul.f32 %v2083, %v2279
    %v2340 = vmul.f32 %v2084, %v2284
    %v2341 = vmul.f32 %v2085, %v2284
    %v2342 = vmul.f32 %v2086, %v2289
    %v2343 = vmul.f32 %v2087, %v2289
    %v2344 = vmul.f32 %v2088, %v2294
    %v2345 = vmul.f32 %v2089, %v2294
    %v2346 = vmul.f32 %v2090, %v2299
    %v2347 = vmul.f32 %v2091, %v2299
    %v2348 = vmul.f32 %v2092, %v2304
    %v2349 = vmul.f32 %v2093, %v2304
    %v2350 = vmul.f32 %v2094, %v2309
    %v2351 = vmul.f32 %v2095, %v2309
    %v2352 = vmul.f32 %v2096, %v2314
    %v2353 = vmul.f32 %v2097, %v2314
    %v2354 = vmul.f32 %v2098, %v2319
    %v2355 = vmul.f32 %v2099, %v2319
    %v2356 = vmul.f32 %v2100, %v2324
    %v2357 = vmul.f32 %v2101, %v2324
    %2358 = vset.pattern.permute.xlu0 27
    %2359 = vperm.xlu0 %2358, %v42
    %v2360 = vpop.permute.xlu0 %2359
    %2362 = vset.pattern.permute.xlu0 27
    %2363 = vperm.xlu0 %2362, %v43
    %v2364 = vpop.permute.xlu0 %2363
    %v2366 = vadd.f32 %v2326, %v2360
    %v2367 = vadd.f32 %v2327, %v2360
    %v2368 = vadd.f32 %v2328, %v2364
    %v2369 = vadd.f32 %v2329, %v2364
    %v2370 = vadd.f32 %v2330, %v2360
    %v2371 = vadd.f32 %v2331, %v2360
    %v2372 = vadd.f32 %v2332, %v2364
    %v2373 = vadd.f32 %v2333, %v2364
    %v2374 = vadd.f32 %v2334, %v2360
    %v2375 = vadd.f32 %v2335, %v2360
    %v2376 = vadd.f32 %v2336, %v2364
    %v2377 = vadd.f32 %v2337, %v2364
    %v2378 = vadd.f32 %v2338, %v2360
    %v2379 = vadd.f32 %v2339, %v2360
    %v2380 = vadd.f32 %v2340, %v2364
    %v2381 = vadd.f32 %v2341, %v2364
    %v2382 = vadd.f32 %v2342, %v2360
    %v2383 = vadd.f32 %v2343, %v2360
    %v2384 = vadd.f32 %v2344, %v2364
    %v2385 = vadd.f32 %v2345, %v2364
    %v2386 = vadd.f32 %v2346, %v2360
    %v2387 = vadd.f32 %v2347, %v2360
    %v2388 = vadd.f32 %v2348, %v2364
    %v2389 = vadd.f32 %v2349, %v2364
    %v2390 = vadd.f32 %v2350, %v2360
    %v2391 = vadd.f32 %v2351, %v2360
    %v2392 = vadd.f32 %v2352, %v2364
    %v2393 = vadd.f32 %v2353, %v2364
    %v2394 = vadd.f32 %v2354, %v2360
    %v2395 = vadd.f32 %v2355, %v2360
    %v2396 = vadd.f32 %v2356, %v2364
    %v2397 = vadd.f32 %v2357, %v2364
    %2398 = vrot.lane.b32.xlu0 %v42, 119
    %v2399 = vpop.permute.xlu0 %2398
    %2400 = vrot.lane.b32.xlu0 %v43, 119
    %v2401 = vpop.permute.xlu0 %2400
    %vm2402 = vcmask 130048
    %v2403 = vsel %vm2402, %v2399, 0
    %v2405 = vsel %vm2402, %v2401, 0
    %2407 = vmatprep.subr.mxu0 0.0
    %2408 = vmatpush1.msra.mxu0 0.0
    %2409 = vmatprep.subr.mxu0 0.0
    %2410 = vmatpush1.msra.mxu0 0.0
    %2411 = vmatprep.subr.mxu0 0.0
    %2412 = vmatpush1.msra.mxu0 0.0
    %2413 = vmatprep.subr.mxu0 0.0
    %2414 = vmatpush1.msra.mxu0 0.0
    %2415 = vmatprep.subr.mxu0 0.0
    %2416 = vmatpush1.msra.mxu0 0.0
    %2417 = vmatprep.subr.mxu0 0.0
    %2418 = vmatpush1.msra.mxu0 0.0
    %2419 = vmatprep.subr.mxu0 0.0
    %2420 = vmatpush1.msra.mxu0 0.0
    %2421 = vmatprep.subr.mxu0 0.0
    %2422 = vmatpush1.msra.mxu0 0.0
    %2423 = vmatprep.subr.mxu0 0.0
    %2424 = vmatpush1.msra.mxu0 0.0
    %2425 = vmatprep.subr.mxu0 0.0
    %2426 = vmatpush1.msra.mxu0 0.0
    %2427 = vmatprep.subr.mxu0 0.0
    %2428 = vmatpush1.msra.mxu0 0.0
    %2429 = vmatprep.subr.mxu0 0.0
    %2430 = vmatpush1.msra.mxu0 0.0
    %2431 = vmatprep.subr.mxu0 0.0
    %2432 = vmatpush1.msra.mxu0 0.0
    %2433 = vmatprep.subr.mxu0 0.0
    %2434 = vmatpush1.msra.mxu0 0.0
    %2435 = vmatprep.subr.mxu0 %v2369
    %2436 = vmatpush1.msra.mxu0 %v2368
    %2437 = vmatprep.subr.mxu0 %v2367
    %2438 = vmatpush1.msra.mxu0 %v2366
    %2439 = vmatprep.subr.mxu0 0.0
    %2440 = vmatpush2.msra.mxu0 0.0
    %2441 = vmatprep.subr.mxu0 0.0
    %2442 = vmatpush2.msra.mxu0 0.0
    %2443 = vmatprep.subr.mxu0 0.0
    %2444 = vmatpush2.msra.mxu0 0.0
    %2445 = vmatprep.subr.mxu0 0.0
    %2446 = vmatpush2.msra.mxu0 0.0
    %2447 = vmatprep.subr.mxu0 0.0
    %2448 = vmatpush2.msra.mxu0 0.0
    %2449 = vmatprep.subr.mxu0 0.0
    %2450 = vmatpush2.msra.mxu0 0.0
    %2451 = vmatprep.subr.mxu0 0.0
    %2452 = vmatpush2.msra.mxu0 0.0
    %2453 = vmatprep.subr.mxu0 0.0
    %2454 = vmatpush2.msra.mxu0 0.0
    %2455 = vmatprep.subr.mxu0 0.0
    %2456 = vmatpush2.msra.mxu0 0.0
    %2457 = vmatprep.subr.mxu0 0.0
    %2458 = vmatpush2.msra.mxu0 0.0
    %2459 = vmatprep.subr.mxu0 0.0
    %2460 = vmatpush2.msra.mxu0 0.0
    %2461 = vmatprep.subr.mxu0 0.0
    %2462 = vmatpush2.msra.mxu0 0.0
    %2463 = vmatprep.subr.mxu0 0.0
    %2464 = vmatpush2.msra.mxu0 0.0
    %2465 = vmatprep.subr.mxu0 0.0
    %2466 = vmatpush2.msra.mxu0 0.0
    %2467 = vmatprep.subr.mxu0 0.0
    %2468 = vmatpush2.msra.mxu0 0.0
    %2469 = vmatprep.subr.mxu0 0.0
    %2470 = vmatpush2.msra.mxu0 0.0
    %2471 = vmatprep.mubr.f32.mxu0 0.0
    %2472 = vmatmul.mubr.f32.gmra.mxu0 %v2403
    %v2473 = vpop.f32.mrf.mxu0
    %v2474 = vadd.f32 0.0, %v2473
    %v2475 = vpop.f32.mrf.mxu0
    %v2476 = vadd.f32 0.0, %v2475
    %2477 = vmatprep.mubr.f32.mxu0 0.0
    %2478 = vmatmul.mubr.f32.gmra.mxu0 %v2405
    %v2479 = vpop.f32.mrf.mxu0
    %v2480 = vadd.f32 0.0, %v2479
    %v2481 = vpop.f32.mrf.mxu0
    %v2482 = vadd.f32 0.0, %v2481
    %2483 = vdwg.mxu0
    %2484 = vmatprep.subr.mxu0 0.0
    %2485 = vmatpush1.msra.mxu0 0.0
    %2486 = vmatprep.subr.mxu0 0.0
    %2487 = vmatpush1.msra.mxu0 0.0
    %2488 = vmatprep.subr.mxu0 0.0
    %2489 = vmatpush1.msra.mxu0 0.0
    %2490 = vmatprep.subr.mxu0 0.0
    %2491 = vmatpush1.msra.mxu0 0.0
    %2492 = vmatprep.subr.mxu0 0.0
    %2493 = vmatpush1.msra.mxu0 0.0
    %2494 = vmatprep.subr.mxu0 0.0
    %2495 = vmatpush1.msra.mxu0 0.0
    %2496 = vmatprep.subr.mxu0 0.0
    %2497 = vmatpush1.msra.mxu0 0.0
    %2498 = vmatprep.subr.mxu0 0.0
    %2499 = vmatpush1.msra.mxu0 0.0
    %2500 = vmatprep.subr.mxu0 0.0
    %2501 = vmatpush1.msra.mxu0 0.0
    %2502 = vmatprep.subr.mxu0 0.0
    %2503 = vmatpush1.msra.mxu0 0.0
    %2504 = vmatprep.subr.mxu0 0.0
    %2505 = vmatpush1.msra.mxu0 0.0
    %2506 = vmatprep.subr.mxu0 0.0
    %2507 = vmatpush1.msra.mxu0 0.0
    %2508 = vmatprep.subr.mxu0 0.0
    %2509 = vmatpush1.msra.mxu0 0.0
    %2510 = vmatprep.subr.mxu0 0.0
    %2511 = vmatpush1.msra.mxu0 0.0
    %2512 = vmatprep.subr.mxu0 %v2373
    %2513 = vmatpush1.msra.mxu0 %v2372
    %2514 = vmatprep.subr.mxu0 %v2371
    %2515 = vmatpush1.msra.mxu0 %v2370
    %2516 = vmatprep.subr.mxu0 0.0
    %2517 = vmatpush2.msra.mxu0 0.0
    %2518 = vmatprep.subr.mxu0 0.0
    %2519 = vmatpush2.msra.mxu0 0.0
    %2520 = vmatprep.subr.mxu0 0.0
    %2521 = vmatpush2.msra.mxu0 0.0
    %2522 = vmatprep.subr.mxu0 0.0
    %2523 = vmatpush2.msra.mxu0 0.0
    %2524 = vmatprep.subr.mxu0 0.0
    %2525 = vmatpush2.msra.mxu0 0.0
    %2526 = vmatprep.subr.mxu0 0.0
    %2527 = vmatpush2.msra.mxu0 0.0
    %2528 = vmatprep.subr.mxu0 0.0
    %2529 = vmatpush2.msra.mxu0 0.0
    %2530 = vmatprep.subr.mxu0 0.0
    %2531 = vmatpush2.msra.mxu0 0.0
    %2532 = vmatprep.subr.mxu0 0.0
    %2533 = vmatpush2.msra.mxu0 0.0
    %2534 = vmatprep.subr.mxu0 0.0
    %2535 = vmatpush2.msra.mxu0 0.0
    %2536 = vmatprep.subr.mxu0 0.0
    %2537 = vmatpush2.msra.mxu0 0.0
    %2538 = vmatprep.subr.mxu0 0.0
    %2539 = vmatpush2.msra.mxu0 0.0
    %2540 = vmatprep.subr.mxu0 0.0
    %2541 = vmatpush2.msra.mxu0 0.0
    %2542 = vmatprep.subr.mxu0 0.0
    %2543 = vmatpush2.msra.mxu0 0.0
    %2544 = vmatprep.subr.mxu0 0.0
    %2545 = vmatpush2.msra.mxu0 0.0
    %2546 = vmatprep.subr.mxu0 0.0
    %2547 = vmatpush2.msra.mxu0 0.0
    %2548 = vmatprep.mubr.f32.mxu0 0.0
    %2549 = vmatmul.mubr.f32.gmra.mxu0 %v2403
    %v2550 = vpop.f32.mrf.mxu0
    %v2551 = vadd.f32 0.0, %v2550
    %v2552 = vpop.f32.mrf.mxu0
    %v2553 = vadd.f32 0.0, %v2552
    %2554 = vmatprep.mubr.f32.mxu0 0.0
    %2555 = vmatmul.mubr.f32.gmra.mxu0 %v2405
    %v2556 = vpop.f32.mrf.mxu0
    %v2557 = vadd.f32 0.0, %v2556
    %v2558 = vpop.f32.mrf.mxu0
    %v2559 = vadd.f32 0.0, %v2558
    %2560 = vdwg.mxu0
    %2561 = vmatprep.subr.mxu0 0.0
    %2562 = vmatpush1.msra.mxu0 0.0
    %2563 = vmatprep.subr.mxu0 0.0
    %2564 = vmatpush1.msra.mxu0 0.0
    %2565 = vmatprep.subr.mxu0 0.0
    %2566 = vmatpush1.msra.mxu0 0.0
    %2567 = vmatprep.subr.mxu0 0.0
    %2568 = vmatpush1.msra.mxu0 0.0
    %2569 = vmatprep.subr.mxu0 0.0
    %2570 = vmatpush1.msra.mxu0 0.0
    %2571 = vmatprep.subr.mxu0 0.0
    %2572 = vmatpush1.msra.mxu0 0.0
    %2573 = vmatprep.subr.mxu0 0.0
    %2574 = vmatpush1.msra.mxu0 0.0
    %2575 = vmatprep.subr.mxu0 0.0
    %2576 = vmatpush1.msra.mxu0 0.0
    %2577 = vmatprep.subr.mxu0 0.0
    %2578 = vmatpush1.msra.mxu0 0.0
    %2579 = vmatprep.subr.mxu0 0.0
    %2580 = vmatpush1.msra.mxu0 0.0
    %2581 = vmatprep.subr.mxu0 0.0
    %2582 = vmatpush1.msra.mxu0 0.0
    %2583 = vmatprep.subr.mxu0 0.0
    %2584 = vmatpush1.msra.mxu0 0.0
    %2585 = vmatprep.subr.mxu0 0.0
    %2586 = vmatpush1.msra.mxu0 0.0
    %2587 = vmatprep.subr.mxu0 0.0
    %2588 = vmatpush1.msra.mxu0 0.0
    %2589 = vmatprep.subr.mxu0 %v2377
    %2590 = vmatpush1.msra.mxu0 %v2376
    %2591 = vmatprep.subr.mxu0 %v2375
    %2592 = vmatpush1.msra.mxu0 %v2374
    %2593 = vmatprep.subr.mxu0 0.0
    %2594 = vmatpush2.msra.mxu0 0.0
    %2595 = vmatprep.subr.mxu0 0.0
    %2596 = vmatpush2.msra.mxu0 0.0
    %2597 = vmatprep.subr.mxu0 0.0
    %2598 = vmatpush2.msra.mxu0 0.0
    %2599 = vmatprep.subr.mxu0 0.0
    %2600 = vmatpush2.msra.mxu0 0.0
    %2601 = vmatprep.subr.mxu0 0.0
    %2602 = vmatpush2.msra.mxu0 0.0
    %2603 = vmatprep.subr.mxu0 0.0
    %2604 = vmatpush2.msra.mxu0 0.0
    %2605 = vmatprep.subr.mxu0 0.0
    %2606 = vmatpush2.msra.mxu0 0.0
    %2607 = vmatprep.subr.mxu0 0.0
    %2608 = vmatpush2.msra.mxu0 0.0
    %2609 = vmatprep.subr.mxu0 0.0
    %2610 = vmatpush2.msra.mxu0 0.0
    %2611 = vmatprep.subr.mxu0 0.0
    %2612 = vmatpush2.msra.mxu0 0.0
    %2613 = vmatprep.subr.mxu0 0.0
    %2614 = vmatpush2.msra.mxu0 0.0
    %2615 = vmatprep.subr.mxu0 0.0
    %2616 = vmatpush2.msra.mxu0 0.0
    %2617 = vmatprep.subr.mxu0 0.0
    %2618 = vmatpush2.msra.mxu0 0.0
    %2619 = vmatprep.subr.mxu0 0.0
    %2620 = vmatpush2.msra.mxu0 0.0
    %2621 = vmatprep.subr.mxu0 0.0
    %2622 = vmatpush2.msra.mxu0 0.0
    %2623 = vmatprep.subr.mxu0 0.0
    %2624 = vmatpush2.msra.mxu0 0.0
    %2625 = vmatprep.mubr.f32.mxu0 0.0
    %2626 = vmatmul.mubr.f32.gmra.mxu0 %v2403
    %v2627 = vpop.f32.mrf.mxu0
    %v2628 = vadd.f32 0.0, %v2627
    %v2629 = vpop.f32.mrf.mxu0
    %v2630 = vadd.f32 0.0, %v2629
    %2631 = vmatprep.mubr.f32.mxu0 0.0
    %2632 = vmatmul.mubr.f32.gmra.mxu0 %v2405
    %v2633 = vpop.f32.mrf.mxu0
    %v2634 = vadd.f32 0.0, %v2633
    %v2635 = vpop.f32.mrf.mxu0
    %v2636 = vadd.f32 0.0, %v2635
    %2637 = vdwg.mxu0
    %2638 = vmatprep.subr.mxu0 0.0
    %2639 = vmatpush1.msra.mxu0 0.0
    %2640 = vmatprep.subr.mxu0 0.0
    %2641 = vmatpush1.msra.mxu0 0.0
    %2642 = vmatprep.subr.mxu0 0.0
    %2643 = vmatpush1.msra.mxu0 0.0
    %2644 = vmatprep.subr.mxu0 0.0
    %2645 = vmatpush1.msra.mxu0 0.0
    %2646 = vmatprep.subr.mxu0 0.0
    %2647 = vmatpush1.msra.mxu0 0.0
    %2648 = vmatprep.subr.mxu0 0.0
    %2649 = vmatpush1.msra.mxu0 0.0
    %2650 = vmatprep.subr.mxu0 0.0
    %2651 = vmatpush1.msra.mxu0 0.0
    %2652 = vmatprep.subr.mxu0 0.0
    %2653 = vmatpush1.msra.mxu0 0.0
    %2654 = vmatprep.subr.mxu0 0.0
    %2655 = vmatpush1.msra.mxu0 0.0
    %2656 = vmatprep.subr.mxu0 0.0
    %2657 = vmatpush1.msra.mxu0 0.0
    %2658 = vmatprep.subr.mxu0 0.0
    %2659 = vmatpush1.msra.mxu0 0.0
    %2660 = vmatprep.subr.mxu0 0.0
    %2661 = vmatpush1.msra.mxu0 0.0
    %2662 = vmatprep.subr.mxu0 0.0
    %2663 = vmatpush1.msra.mxu0 0.0
    %2664 = vmatprep.subr.mxu0 0.0
    %2665 = vmatpush1.msra.mxu0 0.0
    %2666 = vmatprep.subr.mxu0 %v2381
    %2667 = vmatpush1.msra.mxu0 %v2380
    %2668 = vmatprep.subr.mxu0 %v2379
    %2669 = vmatpush1.msra.mxu0 %v2378
    %2670 = vmatprep.subr.mxu0 0.0
    %2671 = vmatpush2.msra.mxu0 0.0
    %2672 = vmatprep.subr.mxu0 0.0
    %2673 = vmatpush2.msra.mxu0 0.0
    %2674 = vmatprep.subr.mxu0 0.0
    %2675 = vmatpush2.msra.mxu0 0.0
    %2676 = vmatprep.subr.mxu0 0.0
    %2677 = vmatpush2.msra.mxu0 0.0
    %2678 = vmatprep.subr.mxu0 0.0
    %2679 = vmatpush2.msra.mxu0 0.0
    %2680 = vmatprep.subr.mxu0 0.0
    %2681 = vmatpush2.msra.mxu0 0.0
    %2682 = vmatprep.subr.mxu0 0.0
    %2683 = vmatpush2.msra.mxu0 0.0
    %2684 = vmatprep.subr.mxu0 0.0
    %2685 = vmatpush2.msra.mxu0 0.0
    %2686 = vmatprep.subr.mxu0 0.0
    %2687 = vmatpush2.msra.mxu0 0.0
    %2688 = vmatprep.subr.mxu0 0.0
    %2689 = vmatpush2.msra.mxu0 0.0
    %2690 = vmatprep.subr.mxu0 0.0
    %2691 = vmatpush2.msra.mxu0 0.0
    %2692 = vmatprep.subr.mxu0 0.0
    %2693 = vmatpush2.msra.mxu0 0.0
    %2694 = vmatprep.subr.mxu0 0.0
    %2695 = vmatpush2.msra.mxu0 0.0
    %2696 = vmatprep.subr.mxu0 0.0
    %2697 = vmatpush2.msra.mxu0 0.0
    %2698 = vmatprep.subr.mxu0 0.0
    %2699 = vmatpush2.msra.mxu0 0.0
    %2700 = vmatprep.subr.mxu0 0.0
    %2701 = vmatpush2.msra.mxu0 0.0
    %2702 = vmatprep.mubr.f32.mxu0 0.0
    %2703 = vmatmul.mubr.f32.gmra.mxu0 %v2403
    %v2704 = vpop.f32.mrf.mxu0
    %v2705 = vadd.f32 0.0, %v2704
    %v2706 = vpop.f32.mrf.mxu0
    %v2707 = vadd.f32 0.0, %v2706
    %2708 = vmatprep.mubr.f32.mxu0 0.0
    %2709 = vmatmul.mubr.f32.gmra.mxu0 %v2405
    %v2710 = vpop.f32.mrf.mxu0
    %v2711 = vadd.f32 0.0, %v2710
    %v2712 = vpop.f32.mrf.mxu0
    %v2713 = vadd.f32 0.0, %v2712
    %2714 = vdwg.mxu0
    %2715 = vmatprep.subr.mxu0 0.0
    %2716 = vmatpush1.msra.mxu0 0.0
    %2717 = vmatprep.subr.mxu0 0.0
    %2718 = vmatpush1.msra.mxu0 0.0
    %2719 = vmatprep.subr.mxu0 0.0
    %2720 = vmatpush1.msra.mxu0 0.0
    %2721 = vmatprep.subr.mxu0 0.0
    %2722 = vmatpush1.msra.mxu0 0.0
    %2723 = vmatprep.subr.mxu0 0.0
    %2724 = vmatpush1.msra.mxu0 0.0
    %2725 = vmatprep.subr.mxu0 0.0
    %2726 = vmatpush1.msra.mxu0 0.0
    %2727 = vmatprep.subr.mxu0 0.0
    %2728 = vmatpush1.msra.mxu0 0.0
    %2729 = vmatprep.subr.mxu0 0.0
    %2730 = vmatpush1.msra.mxu0 0.0
    %2731 = vmatprep.subr.mxu0 0.0
    %2732 = vmatpush1.msra.mxu0 0.0
    %2733 = vmatprep.subr.mxu0 0.0
    %2734 = vmatpush1.msra.mxu0 0.0
    %2735 = vmatprep.subr.mxu0 0.0
    %2736 = vmatpush1.msra.mxu0 0.0
    %2737 = vmatprep.subr.mxu0 0.0
    %2738 = vmatpush1.msra.mxu0 0.0
    %2739 = vmatprep.subr.mxu0 0.0
    %2740 = vmatpush1.msra.mxu0 0.0
    %2741 = vmatprep.subr.mxu0 0.0
    %2742 = vmatpush1.msra.mxu0 0.0
    %2743 = vmatprep.subr.mxu0 %v2385
    %2744 = vmatpush1.msra.mxu0 %v2384
    %2745 = vmatprep.subr.mxu0 %v2383
    %2746 = vmatpush1.msra.mxu0 %v2382
    %2747 = vmatprep.subr.mxu0 0.0
    %2748 = vmatpush2.msra.mxu0 0.0
    %2749 = vmatprep.subr.mxu0 0.0
    %2750 = vmatpush2.msra.mxu0 0.0
    %2751 = vmatprep.subr.mxu0 0.0
    %2752 = vmatpush2.msra.mxu0 0.0
    %2753 = vmatprep.subr.mxu0 0.0
    %2754 = vmatpush2.msra.mxu0 0.0
    %2755 = vmatprep.subr.mxu0 0.0
    %2756 = vmatpush2.msra.mxu0 0.0
    %2757 = vmatprep.subr.mxu0 0.0
    %2758 = vmatpush2.msra.mxu0 0.0
    %2759 = vmatprep.subr.mxu0 0.0
    %2760 = vmatpush2.msra.mxu0 0.0
    %2761 = vmatprep.subr.mxu0 0.0
    %2762 = vmatpush2.msra.mxu0 0.0
    %2763 = vmatprep.subr.mxu0 0.0
    %2764 = vmatpush2.msra.mxu0 0.0
    %2765 = vmatprep.subr.mxu0 0.0
    %2766 = vmatpush2.msra.mxu0 0.0
    %2767 = vmatprep.subr.mxu0 0.0
    %2768 = vmatpush2.msra.mxu0 0.0
    %2769 = vmatprep.subr.mxu0 0.0
    %2770 = vmatpush2.msra.mxu0 0.0
    %2771 = vmatprep.subr.mxu0 0.0
    %2772 = vmatpush2.msra.mxu0 0.0
    %2773 = vmatprep.subr.mxu0 0.0
    %2774 = vmatpush2.msra.mxu0 0.0
    %2775 = vmatprep.subr.mxu0 0.0
    %2776 = vmatpush2.msra.mxu0 0.0
    %2777 = vmatprep.subr.mxu0 0.0
    %2778 = vmatpush2.msra.mxu0 0.0
    %2779 = vmatprep.mubr.f32.mxu0 0.0
    %2780 = vmatmul.mubr.f32.gmra.mxu0 %v2403
    %v2781 = vpop.f32.mrf.mxu0
    %v2782 = vadd.f32 0.0, %v2781
    %v2783 = vpop.f32.mrf.mxu0
    %v2784 = vadd.f32 0.0, %v2783
    %2785 = vmatprep.mubr.f32.mxu0 0.0
    %2786 = vmatmul.mubr.f32.gmra.mxu0 %v2405
    %v2787 = vpop.f32.mrf.mxu0
    %v2788 = vadd.f32 0.0, %v2787
    %v2789 = vpop.f32.mrf.mxu0
    %v2790 = vadd.f32 0.0, %v2789
    %2791 = vdwg.mxu0
    %2792 = vmatprep.subr.mxu0 0.0
    %2793 = vmatpush1.msra.mxu0 0.0
    %2794 = vmatprep.subr.mxu0 0.0
    %2795 = vmatpush1.msra.mxu0 0.0
    %2796 = vmatprep.subr.mxu0 0.0
    %2797 = vmatpush1.msra.mxu0 0.0
    %2798 = vmatprep.subr.mxu0 0.0
    %2799 = vmatpush1.msra.mxu0 0.0
    %2800 = vmatprep.subr.mxu0 0.0
    %2801 = vmatpush1.msra.mxu0 0.0
    %2802 = vmatprep.subr.mxu0 0.0
    %2803 = vmatpush1.msra.mxu0 0.0
    %2804 = vmatprep.subr.mxu0 0.0
    %2805 = vmatpush1.msra.mxu0 0.0
    %2806 = vmatprep.subr.mxu0 0.0
    %2807 = vmatpush1.msra.mxu0 0.0
    %2808 = vmatprep.subr.mxu0 0.0
    %2809 = vmatpush1.msra.mxu0 0.0
    %2810 = vmatprep.subr.mxu0 0.0
    %2811 = vmatpush1.msra.mxu0 0.0
    %2812 = vmatprep.subr.mxu0 0.0
    %2813 = vmatpush1.msra.mxu0 0.0
    %2814 = vmatprep.subr.mxu0 0.0
    %2815 = vmatpush1.msra.mxu0 0.0
    %2816 = vmatprep.subr.mxu0 0.0
    %2817 = vmatpush1.msra.mxu0 0.0
    %2818 = vmatprep.subr.mxu0 0.0
    %2819 = vmatpush1.msra.mxu0 0.0
    %2820 = vmatprep.subr.mxu0 %v2389
    %2821 = vmatpush1.msra.mxu0 %v2388
    %2822 = vmatprep.subr.mxu0 %v2387
    %2823 = vmatpush1.msra.mxu0 %v2386
    %2824 = vmatprep.subr.mxu0 0.0
    %2825 = vmatpush2.msra.mxu0 0.0
    %2826 = vmatprep.subr.mxu0 0.0
    %2827 = vmatpush2.msra.mxu0 0.0
    %2828 = vmatprep.subr.mxu0 0.0
    %2829 = vmatpush2.msra.mxu0 0.0
    %2830 = vmatprep.subr.mxu0 0.0
    %2831 = vmatpush2.msra.mxu0 0.0
    %2832 = vmatprep.subr.mxu0 0.0
    %2833 = vmatpush2.msra.mxu0 0.0
    %2834 = vmatprep.subr.mxu0 0.0
    %2835 = vmatpush2.msra.mxu0 0.0
    %2836 = vmatprep.subr.mxu0 0.0
    %2837 = vmatpush2.msra.mxu0 0.0
    %2838 = vmatprep.subr.mxu0 0.0
    %2839 = vmatpush2.msra.mxu0 0.0
    %2840 = vmatprep.subr.mxu0 0.0
    %2841 = vmatpush2.msra.mxu0 0.0
    %2842 = vmatprep.subr.mxu0 0.0
    %2843 = vmatpush2.msra.mxu0 0.0
    %2844 = vmatprep.subr.mxu0 0.0
    %2845 = vmatpush2.msra.mxu0 0.0
    %2846 = vmatprep.subr.mxu0 0.0
    %2847 = vmatpush2.msra.mxu0 0.0
    %2848 = vmatprep.subr.mxu0 0.0
    %2849 = vmatpush2.msra.mxu0 0.0
    %2850 = vmatprep.subr.mxu0 0.0
    %2851 = vmatpush2.msra.mxu0 0.0
    %2852 = vmatprep.subr.mxu0 0.0
    %2853 = vmatpush2.msra.mxu0 0.0
    %2854 = vmatprep.subr.mxu0 0.0
    %2855 = vmatpush2.msra.mxu0 0.0
    %2856 = vmatprep.mubr.f32.mxu0 0.0
    %2857 = vmatmul.mubr.f32.gmra.mxu0 %v2403
    %v2858 = vpop.f32.mrf.mxu0
    %v2859 = vadd.f32 0.0, %v2858
    %v2860 = vpop.f32.mrf.mxu0
    %v2861 = vadd.f32 0.0, %v2860
    %2862 = vmatprep.mubr.f32.mxu0 0.0
    %2863 = vmatmul.mubr.f32.gmra.mxu0 %v2405
    %v2864 = vpop.f32.mrf.mxu0
    %v2865 = vadd.f32 0.0, %v2864
    %v2866 = vpop.f32.mrf.mxu0
    %v2867 = vadd.f32 0.0, %v2866
    %2868 = vdwg.mxu0
    %2869 = vmatprep.subr.mxu0 0.0
    %2870 = vmatpush1.msra.mxu0 0.0
    %2871 = vmatprep.subr.mxu0 0.0
    %2872 = vmatpush1.msra.mxu0 0.0
    %2873 = vmatprep.subr.mxu0 0.0
    %2874 = vmatpush1.msra.mxu0 0.0
    %2875 = vmatprep.subr.mxu0 0.0
    %2876 = vmatpush1.msra.mxu0 0.0
    %2877 = vmatprep.subr.mxu0 0.0
    %2878 = vmatpush1.msra.mxu0 0.0
    %2879 = vmatprep.subr.mxu0 0.0
    %2880 = vmatpush1.msra.mxu0 0.0
    %2881 = vmatprep.subr.mxu0 0.0
    %2882 = vmatpush1.msra.mxu0 0.0
    %2883 = vmatprep.subr.mxu0 0.0
    %2884 = vmatpush1.msra.mxu0 0.0
    %2885 = vmatprep.subr.mxu0 0.0
    %2886 = vmatpush1.msra.mxu0 0.0
    %2887 = vmatprep.subr.mxu0 0.0
    %2888 = vmatpush1.msra.mxu0 0.0
    %2889 = vmatprep.subr.mxu0 0.0
    %2890 = vmatpush1.msra.mxu0 0.0
    %2891 = vmatprep.subr.mxu0 0.0
    %2892 = vmatpush1.msra.mxu0 0.0
    %2893 = vmatprep.subr.mxu0 0.0
    %2894 = vmatpush1.msra.mxu0 0.0
    %2895 = vmatprep.subr.mxu0 0.0
    %2896 = vmatpush1.msra.mxu0 0.0
    %2897 = vmatprep.subr.mxu0 %v2393
    %2898 = vmatpush1.msra.mxu0 %v2392
    %2899 = vmatprep.subr.mxu0 %v2391
    %2900 = vmatpush1.msra.mxu0 %v2390
    %2901 = vmatprep.subr.mxu0 0.0
    %2902 = vmatpush2.msra.mxu0 0.0
    %2903 = vmatprep.subr.mxu0 0.0
    %2904 = vmatpush2.msra.mxu0 0.0
    %2905 = vmatprep.subr.mxu0 0.0
    %2906 = vmatpush2.msra.mxu0 0.0
    %2907 = vmatprep.subr.mxu0 0.0
    %2908 = vmatpush2.msra.mxu0 0.0
    %2909 = vmatprep.subr.mxu0 0.0
    %2910 = vmatpush2.msra.mxu0 0.0
    %2911 = vmatprep.subr.mxu0 0.0
    %2912 = vmatpush2.msra.mxu0 0.0
    %2913 = vmatprep.subr.mxu0 0.0
    %2914 = vmatpush2.msra.mxu0 0.0
    %2915 = vmatprep.subr.mxu0 0.0
    %2916 = vmatpush2.msra.mxu0 0.0
    %2917 = vmatprep.subr.mxu0 0.0
    %2918 = vmatpush2.msra.mxu0 0.0
    %2919 = vmatprep.subr.mxu0 0.0
    %2920 = vmatpush2.msra.mxu0 0.0
    %2921 = vmatprep.subr.mxu0 0.0
    %2922 = vmatpush2.msra.mxu0 0.0
    %2923 = vmatprep.subr.mxu0 0.0
    %2924 = vmatpush2.msra.mxu0 0.0
    %2925 = vmatprep.subr.mxu0 0.0
    %2926 = vmatpush2.msra.mxu0 0.0
    %2927 = vmatprep.subr.mxu0 0.0
    %2928 = vmatpush2.msra.mxu0 0.0
    %2929 = vmatprep.subr.mxu0 0.0
    %2930 = vmatpush2.msra.mxu0 0.0
    %2931 = vmatprep.subr.mxu0 0.0
    %2932 = vmatpush2.msra.mxu0 0.0
    %2933 = vmatprep.mubr.f32.mxu0 0.0
    %2934 = vmatmul.mubr.f32.gmra.mxu0 %v2403
    %v2935 = vpop.f32.mrf.mxu0
    %v2936 = vadd.f32 0.0, %v2935
    %v2937 = vpop.f32.mrf.mxu0
    %v2938 = vadd.f32 0.0, %v2937
    %2939 = vmatprep.mubr.f32.mxu0 0.0
    %2940 = vmatmul.mubr.f32.gmra.mxu0 %v2405
    %v2941 = vpop.f32.mrf.mxu0
    %v2942 = vadd.f32 0.0, %v2941
    %v2943 = vpop.f32.mrf.mxu0
    %v2944 = vadd.f32 0.0, %v2943
    %2945 = vdwg.mxu0
    %2946 = vmatprep.subr.mxu0 0.0
    %2947 = vmatpush1.msra.mxu0 0.0
    %2948 = vmatprep.subr.mxu0 0.0
    %2949 = vmatpush1.msra.mxu0 0.0
    %2950 = vmatprep.subr.mxu0 0.0
    %2951 = vmatpush1.msra.mxu0 0.0
    %2952 = vmatprep.subr.mxu0 0.0
    %2953 = vmatpush1.msra.mxu0 0.0
    %2954 = vmatprep.subr.mxu0 0.0
    %2955 = vmatpush1.msra.mxu0 0.0
    %2956 = vmatprep.subr.mxu0 0.0
    %2957 = vmatpush1.msra.mxu0 0.0
    %2958 = vmatprep.subr.mxu0 0.0
    %2959 = vmatpush1.msra.mxu0 0.0
    %2960 = vmatprep.subr.mxu0 0.0
    %2961 = vmatpush1.msra.mxu0 0.0
    %2962 = vmatprep.subr.mxu0 0.0
    %2963 = vmatpush1.msra.mxu0 0.0
    %2964 = vmatprep.subr.mxu0 0.0
    %2965 = vmatpush1.msra.mxu0 0.0
    %2966 = vmatprep.subr.mxu0 0.0
    %2967 = vmatpush1.msra.mxu0 0.0
    %2968 = vmatprep.subr.mxu0 0.0
    %2969 = vmatpush1.msra.mxu0 0.0
    %2970 = vmatprep.subr.mxu0 0.0
    %2971 = vmatpush1.msra.mxu0 0.0
    %2972 = vmatprep.subr.mxu0 0.0
    %2973 = vmatpush1.msra.mxu0 0.0
    %2974 = vmatprep.subr.mxu0 %v2397
    %2975 = vmatpush1.msra.mxu0 %v2396
    %2976 = vmatprep.subr.mxu0 %v2395
    %2977 = vmatpush1.msra.mxu0 %v2394
    %2978 = vmatprep.subr.mxu0 0.0
    %2979 = vmatpush2.msra.mxu0 0.0
    %2980 = vmatprep.subr.mxu0 0.0
    %2981 = vmatpush2.msra.mxu0 0.0
    %2982 = vmatprep.subr.mxu0 0.0
    %2983 = vmatpush2.msra.mxu0 0.0
    %2984 = vmatprep.subr.mxu0 0.0
    %2985 = vmatpush2.msra.mxu0 0.0
    %2986 = vmatprep.subr.mxu0 0.0
    %2987 = vmatpush2.msra.mxu0 0.0
    %2988 = vmatprep.subr.mxu0 0.0
    %2989 = vmatpush2.msra.mxu0 0.0
    %2990 = vmatprep.subr.mxu0 0.0
    %2991 = vmatpush2.msra.mxu0 0.0
    %2992 = vmatprep.subr.mxu0 0.0
    %2993 = vmatpush2.msra.mxu0 0.0
    %2994 = vmatprep.subr.mxu0 0.0
    %2995 = vmatpush2.msra.mxu0 0.0
    %2996 = vmatprep.subr.mxu0 0.0
    %2997 = vmatpush2.msra.mxu0 0.0
    %2998 = vmatprep.subr.mxu0 0.0
    %2999 = vmatpush2.msra.mxu0 0.0
    %3000 = vmatprep.subr.mxu0 0.0
    %3001 = vmatpush2.msra.mxu0 0.0
    %3002 = vmatprep.subr.mxu0 0.0
    %3003 = vmatpush2.msra.mxu0 0.0
    %3004 = vmatprep.subr.mxu0 0.0
    %3005 = vmatpush2.msra.mxu0 0.0
    %3006 = vmatprep.subr.mxu0 0.0
    %3007 = vmatpush2.msra.mxu0 0.0
    %3008 = vmatprep.subr.mxu0 0.0
    %3009 = vmatpush2.msra.mxu0 0.0
    %3010 = vmatprep.mubr.f32.mxu0 0.0
    %3011 = vmatmul.mubr.f32.gmra.mxu0 %v2403
    %v3012 = vpop.f32.mrf.mxu0
    %v3013 = vadd.f32 0.0, %v3012
    %v3014 = vpop.f32.mrf.mxu0
    %v3015 = vadd.f32 0.0, %v3014
    %3016 = vmatprep.mubr.f32.mxu0 0.0
    %3017 = vmatmul.mubr.f32.gmra.mxu0 %v2405
    %v3018 = vpop.f32.mrf.mxu0
    %v3019 = vadd.f32 0.0, %v3018
    %v3020 = vpop.f32.mrf.mxu0
    %v3021 = vadd.f32 0.0, %v3020
    %3022 = vdwg.mxu0
    %v3023 = vstv %s44
    %v3024 = vadd.f32 %v3023, 0.0
    %v3041 = vrot.slane %v2551, 7
    %vm3042 = vcmask 1041409
    %v3043 = vsel %vm3042, %v3041, %v2474
    %v3044 = vrot.slane %v2628, 6
    %vm3045 = vcmask 1042434
    %v3046 = vsel %vm3045, %v3044, %v3043
    %v3047 = vrot.slane %v2705, 5
    %vm3048 = vcmask 1043459
    %v3049 = vsel %vm3048, %v3047, %v3046
    %v3050 = vrot.slane %v2782, 4
    %vm3051 = vcmask 1044484
    %v3052 = vsel %vm3051, %v3050, %v3049
    %v3053 = vrot.slane %v2859, 3
    %vm3054 = vcmask 1045509
    %v3055 = vsel %vm3054, %v3053, %v3052
    %v3056 = vrot.slane %v2936, 2
    %vm3057 = vcmask 1046534
    %v3058 = vsel %vm3057, %v3056, %v3055
    %v3059 = vrot.slane %v3013, 1
    %vm3060 = vcmask 1047559
    %v3061 = vsel %vm3060, %v3059, %v3058
    %v3062 = vrot.slane %v2553, 7
    %v3063 = vsel %vm3042, %v3062, %v2476
    %v3064 = vrot.slane %v2630, 6
    %v3065 = vsel %vm3045, %v3064, %v3063
    %v3066 = vrot.slane %v2707, 5
    %v3067 = vsel %vm3048, %v3066, %v3065
    %v3068 = vrot.slane %v2784, 4
    %v3069 = vsel %vm3051, %v3068, %v3067
    %v3070 = vrot.slane %v2861, 3
    %v3071 = vsel %vm3054, %v3070, %v3069
    %v3072 = vrot.slane %v2938, 2
    %v3073 = vsel %vm3057, %v3072, %v3071
    %v3074 = vrot.slane %v3015, 1
    %v3075 = vsel %vm3060, %v3074, %v3073
    %3078 = vrot.lane.b32.xlu0 %v3061, 16
    %v3079 = vpop.permute.xlu0 %3078
    %3080 = vrot.lane.b32.xlu0 %v3075, 16
    %v3081 = vpop.permute.xlu0 %3080
    %v3082 = vsel %vm76, %v3079, %v3081
    %v3083 = vsel %vm76, %v3081, %v3079
    %v3084 = vsel %vm93, %v3061, %v3083
    %v3085 = vsel %vm94, %v3075, %v3082
    %3086 = vrot.lane.b32.xlu0 %v3084, 1
    %v3087 = vpop.permute.xlu0 %3086
    %3088 = vrot.lane.b32.xlu0 %v3085, 1
    %v3089 = vpop.permute.xlu0 %3088
    %v3090 = vsel %vm101, %v3087, %v3089
    %v3091 = vsel %vm101, %v3089, %v3087
    %v3092 = vsel %vm106, %v3084, %v3091
    %v3093 = vsel %vm107, %v3085, %v3090
    %v3094 = vadd.f32 %v3024, %v3092
    %v3095 = vadd.f32 %v3024, %v3093
    %v3096 = vrot.slane %v2474, 1
    %v3097 = vsel %vm3042, %v2551, %v3096
    %v3098 = vrot.slane %v2628, 7
    %v3099 = vsel %vm3045, %v3098, %v3097
    %v3100 = vrot.slane %v2705, 6
    %v3101 = vsel %vm3048, %v3100, %v3099
    %v3102 = vrot.slane %v2782, 5
    %v3103 = vsel %vm3051, %v3102, %v3101
    %v3104 = vrot.slane %v2859, 4
    %v3105 = vsel %vm3054, %v3104, %v3103
    %v3106 = vrot.slane %v2936, 3
    %v3107 = vsel %vm3057, %v3106, %v3105
    %v3108 = vrot.slane %v3013, 2
    %v3109 = vsel %vm3060, %v3108, %v3107
    %v3110 = vrot.slane %v2476, 1
    %v3111 = vsel %vm3042, %v2553, %v3110
    %v3112 = vrot.slane %v2630, 7
    %v3113 = vsel %vm3045, %v3112, %v3111
    %v3114 = vrot.slane %v2707, 6
    %v3115 = vsel %vm3048, %v3114, %v3113
    %v3116 = vrot.slane %v2784, 5
    %v3117 = vsel %vm3051, %v3116, %v3115
    %v3118 = vrot.slane %v2861, 4
    %v3119 = vsel %vm3054, %v3118, %v3117
    %v3120 = vrot.slane %v2938, 3
    %v3121 = vsel %vm3057, %v3120, %v3119
    %v3122 = vrot.slane %v3015, 2
    %v3123 = vsel %vm3060, %v3122, %v3121
    %3126 = vrot.lane.b32.xlu0 %v3109, 16
    %v3127 = vpop.permute.xlu0 %3126
    %3128 = vrot.lane.b32.xlu0 %v3123, 16
    %v3129 = vpop.permute.xlu0 %3128
    %v3130 = vsel %vm76, %v3127, %v3129
    %v3131 = vsel %vm76, %v3129, %v3127
    %v3132 = vsel %vm93, %v3109, %v3131
    %v3133 = vsel %vm94, %v3123, %v3130
    %v3134 = vadd.f32 %v3094, %v3132
    %v3135 = vadd.f32 %v3095, %v3133
    %v3136 = vrot.slane %v2474, 2
    %v3137 = vrot.slane %v2551, 1
    %v3138 = vsel %vm3042, %v3137, %v3136
    %v3139 = vsel %vm3045, %v2628, %v3138
    %v3140 = vrot.slane %v2705, 7
    %v3141 = vsel %vm3048, %v3140, %v3139
    %v3142 = vrot.slane %v2782, 6
    %v3143 = vsel %vm3051, %v3142, %v3141
    %v3144 = vrot.slane %v2859, 5
    %v3145 = vsel %vm3054, %v3144, %v3143
    %v3146 = vrot.slane %v2936, 4
    %v3147 = vsel %vm3057, %v3146, %v3145
    %v3148 = vrot.slane %v3013, 3
    %v3149 = vsel %vm3060, %v3148, %v3147
    %v3150 = vrot.slane %v2476, 2
    %v3151 = vrot.slane %v2553, 1
    %v3152 = vsel %vm3042, %v3151, %v3150
    %v3153 = vsel %vm3045, %v2630, %v3152
    %v3154 = vrot.slane %v2707, 7
    %v3155 = vsel %vm3048, %v3154, %v3153
    %v3156 = vrot.slane %v2784, 6
    %v3157 = vsel %vm3051, %v3156, %v3155
    %v3158 = vrot.slane %v2861, 5
    %v3159 = vsel %vm3054, %v3158, %v3157
    %v3160 = vrot.slane %v2938, 4
    %v3161 = vsel %vm3057, %v3160, %v3159
    %v3162 = vrot.slane %v3015, 3
    %v3163 = vsel %vm3060, %v3162, %v3161
    %3166 = vrot.lane.b32.xlu0 %v3149, 16
    %v3167 = vpop.permute.xlu0 %3166
    %3168 = vrot.lane.b32.xlu0 %v3163, 16
    %v3169 = vpop.permute.xlu0 %3168
    %v3170 = vsel %vm76, %v3167, %v3169
    %v3171 = vsel %vm76, %v3169, %v3167
    %v3172 = vsel %vm93, %v3149, %v3171
    %v3173 = vsel %vm94, %v3163, %v3170
    %3174 = vrot.lane.b32.xlu0 %v3172, 127
    %v3175 = vpop.permute.xlu0 %3174
    %3176 = vrot.lane.b32.xlu0 %v3173, 127
    %v3177 = vpop.permute.xlu0 %3176
    %v3178 = vsel %vm524, %v3175, %v3177
    %v3179 = vsel %vm524, %v3177, %v3175
    %v3180 = vsel %vm529, %v3172, %v3178
    %v3181 = vsel %vm530, %v3173, %v3179
    %v3182 = vadd.f32 %v3134, %v3180
    %v3183 = vadd.f32 %v3135, %v3181
    %v3184 = vrot.slane %v2474, 3
    %v3185 = vrot.slane %v2551, 2
    %v3186 = vsel %vm3042, %v3185, %v3184
    %v3187 = vrot.slane %v2628, 1
    %v3188 = vsel %vm3045, %v3187, %v3186
    %v3189 = vsel %vm3048, %v2705, %v3188
    %v3190 = vrot.slane %v2782, 7
    %v3191 = vsel %vm3051, %v3190, %v3189
    %v3192 = vrot.slane %v2859, 6
    %v3193 = vsel %vm3054, %v3192, %v3191
    %v3194 = vrot.slane %v2936, 5
    %v3195 = vsel %vm3057, %v3194, %v3193
    %v3196 = vrot.slane %v3013, 4
    %v3197 = vsel %vm3060, %v3196, %v3195
    %v3198 = vrot.slane %v2476, 3
    %v3199 = vrot.slane %v2553, 2
    %v3200 = vsel %vm3042, %v3199, %v3198
    %v3201 = vrot.slane %v2630, 1
    %v3202 = vsel %vm3045, %v3201, %v3200
    %v3203 = vsel %vm3048, %v2707, %v3202
    %v3204 = vrot.slane %v2784, 7
    %v3205 = vsel %vm3051, %v3204, %v3203
    %v3206 = vrot.slane %v2861, 6
    %v3207 = vsel %vm3054, %v3206, %v3205
    %v3208 = vrot.slane %v2938, 5
    %v3209 = vsel %vm3057, %v3208, %v3207
    %v3210 = vrot.slane %v3015, 4
    %v3211 = vsel %vm3060, %v3210, %v3209
    %3214 = vrot.lane.b32.xlu0 %v3197, 1
    %v3215 = vpop.permute.xlu0 %3214
    %3216 = vrot.lane.b32.xlu0 %v3211, 1
    %v3217 = vpop.permute.xlu0 %3216
    %v3218 = vsel %vm101, %v3215, %v3217
    %v3219 = vsel %vm101, %v3217, %v3215
    %v3220 = vsel %vm106, %v3197, %v3219
    %v3221 = vsel %vm107, %v3211, %v3218
    %v3222 = vadd.f32 %v3182, %v3220
    %v3223 = vadd.f32 %v3183, %v3221
    %v3224 = vrot.slane %v2474, 4
    %v3225 = vrot.slane %v2551, 3
    %v3226 = vsel %vm3042, %v3225, %v3224
    %v3227 = vrot.slane %v2628, 2
    %v3228 = vsel %vm3045, %v3227, %v3226
    %v3229 = vrot.slane %v2705, 1
    %v3230 = vsel %vm3048, %v3229, %v3228
    %v3231 = vsel %vm3051, %v2782, %v3230
    %v3232 = vrot.slane %v2859, 7
    %v3233 = vsel %vm3054, %v3232, %v3231
    %v3234 = vrot.slane %v2936, 6
    %v3235 = vsel %vm3057, %v3234, %v3233
    %v3236 = vrot.slane %v3013, 5
    %v3237 = vsel %vm3060, %v3236, %v3235
    %v3238 = vrot.slane %v2476, 4
    %v3239 = vrot.slane %v2553, 3
    %v3240 = vsel %vm3042, %v3239, %v3238
    %v3241 = vrot.slane %v2630, 2
    %v3242 = vsel %vm3045, %v3241, %v3240
    %v3243 = vrot.slane %v2707, 1
    %v3244 = vsel %vm3048, %v3243, %v3242
    %v3245 = vsel %vm3051, %v2784, %v3244
    %v3246 = vrot.slane %v2861, 7
    %v3247 = vsel %vm3054, %v3246, %v3245
    %v3248 = vrot.slane %v2938, 6
    %v3249 = vsel %vm3057, %v3248, %v3247
    %v3250 = vrot.slane %v3015, 5
    %v3251 = vsel %vm3060, %v3250, %v3249
    %v3254 = vadd.f32 %v3222, %v3237
    %v3255 = vadd.f32 %v3223, %v3251
    %v3256 = vrot.slane %v2474, 5
    %v3257 = vrot.slane %v2551, 4
    %v3258 = vsel %vm3042, %v3257, %v3256
    %v3259 = vrot.slane %v2628, 3
    %v3260 = vsel %vm3045, %v3259, %v3258
    %v3261 = vrot.slane %v2705, 2
    %v3262 = vsel %vm3048, %v3261, %v3260
    %v3263 = vrot.slane %v2782, 1
    %v3264 = vsel %vm3051, %v3263, %v3262
    %v3265 = vsel %vm3054, %v2859, %v3264
    %v3266 = vrot.slane %v2936, 7
    %v3267 = vsel %vm3057, %v3266, %v3265
    %v3268 = vrot.slane %v3013, 6
    %v3269 = vsel %vm3060, %v3268, %v3267
    %v3270 = vrot.slane %v2476, 5
    %v3271 = vrot.slane %v2553, 4
    %v3272 = vsel %vm3042, %v3271, %v3270
    %v3273 = vrot.slane %v2630, 3
    %v3274 = vsel %vm3045, %v3273, %v3272
    %v3275 = vrot.slane %v2707, 2
    %v3276 = vsel %vm3048, %v3275, %v3274
    %v3277 = vrot.slane %v2784, 1
    %v3278 = vsel %vm3051, %v3277, %v3276
    %v3279 = vsel %vm3054, %v2861, %v3278
    %v3280 = vrot.slane %v2938, 7
    %v3281 = vsel %vm3057, %v3280, %v3279
    %v3282 = vrot.slane %v3015, 6
    %v3283 = vsel %vm3060, %v3282, %v3281
    %3286 = vrot.lane.b32.xlu0 %v3269, 127
    %v3287 = vpop.permute.xlu0 %3286
    %3288 = vrot.lane.b32.xlu0 %v3283, 127
    %v3289 = vpop.permute.xlu0 %3288
    %v3290 = vsel %vm524, %v3287, %v3289
    %v3291 = vsel %vm524, %v3289, %v3287
    %v3292 = vsel %vm529, %v3269, %v3290
    %v3293 = vsel %vm530, %v3283, %v3291
    %v3294 = vadd.f32 %v3254, %v3292
    %v3295 = vadd.f32 %v3255, %v3293
    %v3296 = vrot.slane %v2474, 6
    %v3297 = vrot.slane %v2551, 5
    %v3298 = vsel %vm3042, %v3297, %v3296
    %v3299 = vrot.slane %v2628, 4
    %v3300 = vsel %vm3045, %v3299, %v3298
    %v3301 = vrot.slane %v2705, 3
    %v3302 = vsel %vm3048, %v3301, %v3300
    %v3303 = vrot.slane %v2782, 2
    %v3304 = vsel %vm3051, %v3303, %v3302
    %v3305 = vrot.slane %v2859, 1
    %v3306 = vsel %vm3054, %v3305, %v3304
    %v3307 = vsel %vm3057, %v2936, %v3306
    %v3308 = vrot.slane %v3013, 7
    %v3309 = vsel %vm3060, %v3308, %v3307
    %v3310 = vrot.slane %v2476, 6
    %v3311 = vrot.slane %v2553, 5
    %v3312 = vsel %vm3042, %v3311, %v3310
    %v3313 = vrot.slane %v2630, 4
    %v3314 = vsel %vm3045, %v3313, %v3312
    %v3315 = vrot.slane %v2707, 3
    %v3316 = vsel %vm3048, %v3315, %v3314
    %v3317 = vrot.slane %v2784, 2
    %v3318 = vsel %vm3051, %v3317, %v3316
    %v3319 = vrot.slane %v2861, 1
    %v3320 = vsel %vm3054, %v3319, %v3318
    %v3321 = vsel %vm3057, %v2938, %v3320
    %v3322 = vrot.slane %v3015, 7
    %v3323 = vsel %vm3060, %v3322, %v3321
    %3326 = vrot.lane.b32.xlu0 %v3309, 112
    %v3327 = vpop.permute.xlu0 %3326
    %3328 = vrot.lane.b32.xlu0 %v3323, 112
    %v3329 = vpop.permute.xlu0 %3328
    %v3330 = vsel %vm1369, %v3327, %v3329
    %v3331 = vsel %vm1369, %v3329, %v3327
    %v3332 = vsel %vm1374, %v3309, %v3330
    %v3333 = vsel %vm1375, %v3323, %v3331
    %3334 = vrot.lane.b32.xlu0 %v3332, 1
    %v3335 = vpop.permute.xlu0 %3334
    %3336 = vrot.lane.b32.xlu0 %v3333, 1
    %v3337 = vpop.permute.xlu0 %3336
    %v3338 = vsel %vm101, %v3335, %v3337
    %v3339 = vsel %vm101, %v3337, %v3335
    %v3340 = vsel %vm106, %v3332, %v3339
    %v3341 = vsel %vm107, %v3333, %v3338
    %v3342 = vadd.f32 %v3294, %v3340
    %v3343 = vadd.f32 %v3295, %v3341
    %v3344 = vrot.slane %v2474, 7
    %v3345 = vrot.slane %v2551, 6
    %v3346 = vsel %vm3042, %v3345, %v3344
    %v3347 = vrot.slane %v2628, 5
    %v3348 = vsel %vm3045, %v3347, %v3346
    %v3349 = vrot.slane %v2705, 4
    %v3350 = vsel %vm3048, %v3349, %v3348
    %v3351 = vrot.slane %v2782, 3
    %v3352 = vsel %vm3051, %v3351, %v3350
    %v3353 = vrot.slane %v2859, 2
    %v3354 = vsel %vm3054, %v3353, %v3352
    %v3355 = vrot.slane %v2936, 1
    %v3356 = vsel %vm3057, %v3355, %v3354
    %v3357 = vsel %vm3060, %v3013, %v3356
    %v3358 = vrot.slane %v2476, 7
    %v3359 = vrot.slane %v2553, 6
    %v3360 = vsel %vm3042, %v3359, %v3358
    %v3361 = vrot.slane %v2630, 5
    %v3362 = vsel %vm3045, %v3361, %v3360
    %v3363 = vrot.slane %v2707, 4
    %v3364 = vsel %vm3048, %v3363, %v3362
    %v3365 = vrot.slane %v2784, 3
    %v3366 = vsel %vm3051, %v3365, %v3364
    %v3367 = vrot.slane %v2861, 2
    %v3368 = vsel %vm3054, %v3367, %v3366
    %v3369 = vrot.slane %v2938, 1
    %v3370 = vsel %vm3057, %v3369, %v3368
    %v3371 = vsel %vm3060, %v3015, %v3370
    %3374 = vrot.lane.b32.xlu0 %v3357, 112
    %v3375 = vpop.permute.xlu0 %3374
    %3376 = vrot.lane.b32.xlu0 %v3371, 112
    %v3377 = vpop.permute.xlu0 %3376
    %v3378 = vsel %vm1369, %v3375, %v3377
    %v3379 = vsel %vm1369, %v3377, %v3375
    %v3380 = vsel %vm1374, %v3357, %v3378
    %v3381 = vsel %vm1375, %v3371, %v3379
    %v3382 = vadd.f32 %v3342, %v3380
    %v3383 = vadd.f32 %v3343, %v3381
    %v3400 = vrot.slane %v2557, 7
    %v3401 = vsel %vm3042, %v3400, %v2480
    %v3402 = vrot.slane %v2634, 6
    %v3403 = vsel %vm3045, %v3402, %v3401
    %v3404 = vrot.slane %v2711, 5
    %v3405 = vsel %vm3048, %v3404, %v3403
    %v3406 = vrot.slane %v2788, 4
    %v3407 = vsel %vm3051, %v3406, %v3405
    %v3408 = vrot.slane %v2865, 3
    %v3409 = vsel %vm3054, %v3408, %v3407
    %v3410 = vrot.slane %v2942, 2
    %v3411 = vsel %vm3057, %v3410, %v3409
    %v3412 = vrot.slane %v3019, 1
    %v3413 = vsel %vm3060, %v3412, %v3411
    %v3414 = vrot.slane %v2559, 7
    %v3415 = vsel %vm3042, %v3414, %v2482
    %v3416 = vrot.slane %v2636, 6
    %v3417 = vsel %vm3045, %v3416, %v3415
    %v3418 = vrot.slane %v2713, 5
    %v3419 = vsel %vm3048, %v3418, %v3417
    %v3420 = vrot.slane %v2790, 4
    %v3421 = vsel %vm3051, %v3420, %v3419
    %v3422 = vrot.slane %v2867, 3
    %v3423 = vsel %vm3054, %v3422, %v3421
    %v3424 = vrot.slane %v2944, 2
    %v3425 = vsel %vm3057, %v3424, %v3423
    %v3426 = vrot.slane %v3021, 1
    %v3427 = vsel %vm3060, %v3426, %v3425
    %3430 = vrot.lane.b32.xlu0 %v3413, 112
    %v3431 = vpop.permute.xlu0 %3430
    %3432 = vrot.lane.b32.xlu0 %v3427, 112
    %v3433 = vpop.permute.xlu0 %3432
    %v3434 = vsel %vm1369, %v3431, %v3433
    %v3435 = vsel %vm1369, %v3433, %v3431
    %v3436 = vsel %vm1374, %v3413, %v3434
    %v3437 = vsel %vm1375, %v3427, %v3435
    %3438 = vrot.lane.b32.xlu0 %v3436, 127
    %v3439 = vpop.permute.xlu0 %3438
    %3440 = vrot.lane.b32.xlu0 %v3437, 127
    %v3441 = vpop.permute.xlu0 %3440
    %v3442 = vsel %vm524, %v3439, %v3441
    %v3443 = vsel %vm524, %v3441, %v3439
    %v3444 = vsel %vm529, %v3436, %v3442
    %v3445 = vsel %vm530, %v3437, %v3443
    %v3446 = vadd.f32 %v3382, %v3444
    %v3447 = vadd.f32 %v3383, %v3445
    %v3448 = vxor.u32 %v3446, 2147483648
    %v3449 = vxor.u32 %v3447, 2147483648
    %v3450 = vmul.f32 %v3448, 1.442695
    %v3451 = vpow.pop %v3450
    %v3452 = vmul.f32 %v3449, 1.442695
    %v3453 = vpow.pop %v3452
    %v3454 = vadd.f32 %v3451, 1.0
    %v3455 = vadd.f32 %v3453, 1.0
    %v3456 = vrcp.pop %v3454
    %v3457 = vmul.f32 1.0, %v3456
    %v3458 = vrcp.pop %v3455
    %v3459 = vmul.f32 1.0, %v3458
    %s3460 = smul.addr %s80, 8
    %s3461 = scalar_lea.vmem [#allocation8], %s3460
    %3462 = vst [vmem:[%s3461] sm:$0xff] %v3457
    %3463 = vst [vmem:[%s3461 + $0x8] sm:$0xff] %v3459
    // Predicated region
    $region22: #{tpu_custom_call.1} parent=1 // pred_check
      _
    $region23: #{tpu_custom_call.1} parent=1 // pred_check_branch
      %3465 = sbr.rel (0) target = $region25
    $region24: #{tpu_custom_call.1} parent=1 // pred_region
      %s3467 = ssub.s32 256, 256
      %3468 = vsyncadd [#allocation5], %s3467
      %s3470 = sshll.u32 [#allocation8], 4
      %s3471 = int_to_ptr.vmem [resolvable:$true] %s3470
      %3473 = dma.vmem_to_hbm [thread:$0]  %s3471, 256, %s3, [#allocation5]
    $region25: #{tpu_custom_call.1} parent=1 // pred_fallthru
      _
    // Predicated region
    $region26: #{tpu_custom_call.1} parent=1 // pred_check
      _
    $region27: #{tpu_custom_call.1} parent=1 // pred_check_branch
      %3475 = sbr.rel (0) target = $region29
    $region28: #{tpu_custom_call.1} parent=1 // pred_region
      %3476 = dma.done [#allocation5], 256
    $region29: #{tpu_custom_call.1} parent=1 // pred_fallthru
      _
    %3477 = vsyncpa [#allocation4], 1
    %3478 = vsyncpa [#allocation7], 1
    %3479 = vsyncpa [#allocation5], 1

</llo_original>
